<compile_context>
chip_gen: v7x
topology: tpu7x:2x2x1
jax: 0.10.0
libtpu: 0.0.40
codegen_flags: <defaults>
</compile_context>

<pallas_src>
import functools

import numpy as np
import jax
import jax.numpy as jnp
from jax.experimental import pallas as pl
from jax.experimental.pallas import tpu as pltpu

# ----------------------- scaled-down Swin configuration ---------------------
IMG = 32
PATCH = 4
EMBED = 32
WINDOW = 4
DEPTHS = (2, 2)
HEADS = (2, 4)
MLP_RATIO = 4
NUM_FEATURES = 32        # reference: nn.Linear(1024, 512)
_NEG = -1e9              # "different window" mask value (exp underflows to 0)


# ----------------------------- in-kernel helpers -----------------------------
def _layernorm(x, g, b, eps=1e-5):
    mu = jnp.mean(x, axis=-1, keepdims=True)
    xc = x - mu
    var = jnp.mean(xc * xc, axis=-1, keepdims=True)
    return xc * jax.lax.rsqrt(var + eps) * g + b


def _gelu(y):
    # TODO(synk): timm Mlp uses exact (erf) GELU; tanh approximation used here.
    return 0.5 * y * (1.0 + jnp.tanh(0.7978845608028654 * (y + 0.044715 * y * y * y)))


def _mm(x, w_bf16):
    """bf16 x bf16 matmul with f32 accumulation on the MXU."""
    return jnp.dot(x.astype(jnp.bfloat16), w_bf16, preferred_element_type=jnp.float32)


# ------------------------------ Pallas kernels -------------------------------
def _patch_embed_kernel(x_ref, w_ref, b_ref, g_ref, beta_ref, o_ref):
    x = x_ref[0]                                            # (N, patch*patch*3)
    y = _mm(x, w_ref[...]) + b_ref[...]
    o_ref[0] = _layernorm(y, g_ref[...], beta_ref[...])


def _swin_block_kernel(x_ref, ln1g_ref, ln1b_ref, qkvw_ref, qkvb_ref, bias_ref,
                       projw_ref, projb_ref, ln2g_ref, ln2b_ref,
                       fc1w_ref, fc1b_ref, fc2w_ref, fc2b_ref, o_ref,
                       *, heads, dh, scale):
    """Fused Swin block for one image: LN1 -> qkv -> attn -> proj -> +res ->
    LN2 -> fc1+GELU -> fc2 -> +res.  Window structure, shift roll and shift
    mask are all encoded in bias_ref (heads, N, N)."""
    x = x_ref[0]                                            # (N, C) f32
    C = heads * dh

    # ---- attention branch ----------------------------------------------------
    xn = _layernorm(x, ln1g_ref[...], ln1b_ref[...])
    qkv = _mm(xn, qkvw_ref[...]) + qkvb_ref[...]            # (N, 3C) f32

    head_outs = []
    for h in range(heads):                                  # static unrolled loop
        qh = qkv[:, h * dh:(h + 1) * dh].astype(jnp.bfloat16)
        kh = qkv[:, C + h * dh:C + (h + 1) * dh].astype(jnp.bfloat16)
        vh = qkv[:, 2 * C + h * dh:2 * C + (h + 1) * dh].astype(jnp.bfloat16)
        s = jax.lax.dot_general(qh, kh, (((1,), (1,)), ((), ())),
                                preferred_element_type=jnp.float32)
        s = s * scale + bias_ref[h]                         # rel-pos + shift + window mask
        s = s - jnp.max(s, axis=-1, keepdims=True)
        p = jnp.exp(s)
        p = p * pl.reciprocal(jnp.sum(p, axis=-1, keepdims=True), approx=True)
        head_outs.append(jnp.dot(p.astype(jnp.bfloat16), vh,
                                 preferred_element_type=jnp.float32))
    attn = jnp.concatenate(head_outs, axis=-1)              # (N, C)

    x = x + _mm(attn, projw_ref[...]) + projb_ref[...]      # residual 1

    # ---- MLP branch -----------------------------------------------------------
    xn2 = _layernorm(x, ln2g_ref[...], ln2b_ref[...])
    h1 = _gelu(_mm(xn2, fc1w_ref[...]) + fc1b_ref[...])
    h2 = _mm(h1, fc2w_ref[...]) + fc2b_ref[...]
    o_ref[0] = x + h2                                       # residual 2


def _merge_kernel(x_ref, g_ref, b_ref, w_ref, o_ref):
    xn = _layernorm(x_ref[0], g_ref[...], b_ref[...])
    o_ref[0] = _mm(xn, w_ref[...])                          # reduction: no bias


def _head_kernel(x_ref, g_ref, b_ref, fw_ref, fb_ref, o_ref):
    """Final norm -> mean pool -> feat Linear for both images, then x1 @ x2.T."""
    feats = []
    for b in range(x_ref.shape[0]):
        xn = _layernorm(x_ref[b], g_ref[...], b_ref[...])   # (N, C)
        pooled = jnp.mean(xn, axis=0, keepdims=True)        # (1, C)
        feats.append(_mm(pooled, fw_ref[...]) + fb_ref[...])
    o_ref[...] = jnp.sum(feats[0] * feats[1], axis=-1, keepdims=True)   # (1, 1)


# ---------------------------- static (host) helpers ---------------------------
def _relative_position_bias(rel_table_np, ws, heads):
    T = ws * ws
    coords = np.stack(np.meshgrid(np.arange(ws), np.arange(ws), indexing="ij"))
    flat = coords.reshape(2, -1)
    rel = (flat[:, :, None] - flat[:, None, :]).transpose(1, 2, 0).astype(np.int64)
    rel[..., 0] += ws - 1
    rel[..., 1] += ws - 1
    rel[..., 0] *= 2 * ws - 1
    idx = rel.sum(-1)                                       # (T, T)
    return rel_table_np[idx.reshape(-1)].reshape(T, T, heads).transpose(2, 0, 1)


def _full_attention_bias(rel_table_np, Hs, Ws, ws, shift, heads):
    """(heads, N, N) additive bias equivalent to shifted-window attention:
    rel-pos bias within a window, -100 shift-region mask, -1e9 across windows."""
    rel_bias = _relative_position_bias(rel_table_np, ws, heads)
    rr, cc = np.meshgrid(np.arange(Hs), np.arange(Ws), indexing="ij")
    rs = (rr - shift) % Hs                                  # position after roll(-shift)
    cs = (cc - shift) % Ws
    win = ((rs // ws) * (Ws // ws) + (cs // ws)).reshape(-1)
    pos = ((rs % ws) * ws + (cs % ws)).reshape(-1)
    bias = rel_bias[:, pos[:, None], pos[None, :]].astype(np.float32)
    same_win = win[:, None] == win[None, :]
    add = np.where(same_win, 0.0, _NEG).astype(np.float32)
    if shift > 0:                                           # timm img_mask regions
        img = np.zeros((Hs, Ws), np.int32)
        cnt = 0
        for hsl in (slice(0, Hs - ws), slice(Hs - ws, Hs - shift), slice(Hs - shift, Hs)):
            for wsl in (slice(0, Ws - ws), slice(Ws - ws, Ws - shift), slice(Ws - shift, Ws)):
                img[hsl, wsl] = cnt
                cnt += 1
        reg = img[rs.reshape(-1), cs.reshape(-1)]
        add = add + np.where((reg[:, None] != reg[None, :]) & same_win,
                             -100.0, 0.0).astype(np.float32)
    return jnp.asarray(bias + add[None])                    # (heads, N, N)


# ------------------------------ parameter init --------------------------------
def init_params(key):
    # TODO(synk): pretrained timm checkpoint weights replaced with synthetic init.
    kit = iter(jax.random.split(key, 128))

    def nrm(shape, std=0.02):
        return jax.random.normal(next(kit), shape, jnp.float32) * std

    def bf16(x):
        return x.astype(jnp.bfloat16)

    params = {
        "patch_w": bf16(nrm((PATCH * PATCH * 3, EMBED))),
        "patch_b": nrm((1, EMBED)),
        "patch_ln_g": jnp.ones((1, EMBED), jnp.float32),
        "patch_ln_b": jnp.zeros((1, EMBED), jnp.float32),
    }

    blocks = []
    Hs = IMG // PATCH
    C = EMBED
    for stage, (depth, heads) in enumerate(zip(DEPTHS, HEADS)):
        for d in range(depth):
            shift = WINDOW // 2 if (d % 2 == 1 and Hs > WINDOW) else 0
            rel_table = np.asarray(nrm(((2 * WINDOW - 1) ** 2, heads)))
            blocks.append(dict(
                ln1_g=jnp.ones((1, C), jnp.float32), ln1_b=jnp.zeros((1, C), jnp.float32),
                qkv_w=bf16(nrm((C, 3 * C))), qkv_b=nrm((1, 3 * C)),
                attn_bias=_full_attention_bias(rel_table, Hs, Hs, WINDOW, shift, heads),
                proj_w=bf16(nrm((C, C))), proj_b=nrm((1, C)),
                ln2_g=jnp.ones((1, C), jnp.float32), ln2_b=jnp.zeros((1, C), jnp.float32),
                fc1_w=bf16(nrm((C, MLP_RATIO * C))), fc1_b=nrm((1, MLP_RATIO * C)),
                fc2_w=bf16(nrm((MLP_RATIO * C, C))), fc2_b=nrm((1, C)),
            ))
        if stage + 1 < len(DEPTHS):
            params[f"merge{stage}_ln_g"] = jnp.ones((1, 4 * C), jnp.float32)
            params[f"merge{stage}_ln_b"] = jnp.zeros((1, 4 * C), jnp.float32)
            params[f"merge{stage}_w"] = bf16(nrm((4 * C, 2 * C)))
            Hs //= 2
            C *= 2

    params["blocks"] = blocks
    params["norm_g"] = jnp.ones((1, C), jnp.float32)
    params["norm_b"] = jnp.zeros((1, C), jnp.float32)
    params["feat_w"] = bf16(nrm((C, NUM_FEATURES)))
    params["feat_b"] = nrm((1, NUM_FEATURES))
    return params


# ------------------------------ pallas wrappers --------------------------------
def _const2(i):
    return (0, 0)


def _const3(i):
    return (0, 0, 0)


def patch_embed(x, params):
    B, N, K = x.shape
    C = EMBED
    return pl.pallas_call(
        _patch_embed_kernel,
        out_shape=jax.ShapeDtypeStruct((B, N, C), jnp.float32),
        grid=(B,),
        in_specs=[pl.BlockSpec((1, N, K), lambda b: (b, 0, 0)),
                  pl.BlockSpec((K, C), _const2),
                  pl.BlockSpec((1, C), _const2),
                  pl.BlockSpec((1, C), _const2),
                  pl.BlockSpec((1, C), _const2)],
        out_specs=pl.BlockSpec((1, N, C), lambda b: (b, 0, 0)),
        compiler_params=pltpu.CompilerParams(dimension_semantics=("parallel",)),
    )(x, params["patch_w"], params["patch_b"],
      params["patch_ln_g"], params["patch_ln_b"])


def swin_block(x, p, heads):
    B, N, C = x.shape
    dh = C // heads
    kern = functools.partial(_swin_block_kernel, heads=heads, dh=dh, scale=dh ** -0.5)
    xspec = pl.BlockSpec((1, N, C), lambda b: (b, 0, 0))
    return pl.pallas_call(
        kern,
        out_shape=jax.ShapeDtypeStruct((B, N, C), jnp.float32),
        grid=(B,),
        in_specs=[xspec,
                  pl.BlockSpec((1, C), _const2), pl.BlockSpec((1, C), _const2),
                  pl.BlockSpec((C, 3 * C), _const2), pl.BlockSpec((1, 3 * C), _const2),
                  pl.BlockSpec((heads, N, N), _const3),
                  pl.BlockSpec((C, C), _const2), pl.BlockSpec((1, C), _const2),
                  pl.BlockSpec((1, C), _const2), pl.BlockSpec((1, C), _const2),
                  pl.BlockSpec((C, MLP_RATIO * C), _const2),
                  pl.BlockSpec((1, MLP_RATIO * C), _const2),
                  pl.BlockSpec((MLP_RATIO * C, C), _const2),
                  pl.BlockSpec((1, C), _const2)],
        out_specs=pl.BlockSpec((1, N, C), lambda b: (b, 0, 0)),
        compiler_params=pltpu.CompilerParams(dimension_semantics=("parallel",)),
    )(x, p["ln1_g"], p["ln1_b"], p["qkv_w"], p["qkv_b"], p["attn_bias"],
      p["proj_w"], p["proj_b"], p["ln2_g"], p["ln2_b"],
      p["fc1_w"], p["fc1_b"], p["fc2_w"], p["fc2_b"])


def patch_merging(x, Hs, g, b, w):
    B, N, C = x.shape
    xs = x.reshape(B, Hs, Hs, C)
    x0 = xs[:, 0::2, 0::2, :]
    x1 = xs[:, 1::2, 0::2, :]
    x2 = xs[:, 0::2, 1::2, :]
    x3 = xs[:, 1::2, 1::2, :]
    xm = jnp.concatenate([x0, x1, x2, x3], axis=-1).reshape(B, (Hs // 2) ** 2, 4 * C)
    N2 = (Hs // 2) ** 2
    return pl.pallas_call(
        _merge_kernel,
        out_shape=jax.ShapeDtypeStruct((B, N2, 2 * C), jnp.float32),
        grid=(B,),
        in_specs=[pl.BlockSpec((1, N2, 4 * C), lambda i: (i, 0, 0)),
                  pl.BlockSpec((1, 4 * C), _const2),
                  pl.BlockSpec((1, 4 * C), _const2),
                  pl.BlockSpec((4 * C, 2 * C), _const2)],
        out_specs=pl.BlockSpec((1, N2, 2 * C), lambda i: (i, 0, 0)),
        compiler_params=pltpu.CompilerParams(dimension_semantics=("parallel",)),
    )(xm, g, b, w)


def feature_head(x, params):
    B, N, C = x.shape
    F = NUM_FEATURES
    return pl.pallas_call(
        _head_kernel,
        out_shape=jax.ShapeDtypeStruct((1, 1), jnp.float32),
        grid=(1,),
        in_specs=[pl.BlockSpec((B, N, C), _const3),
                  pl.BlockSpec((1, C), _const2),
                  pl.BlockSpec((1, C), _const2),
                  pl.BlockSpec((C, F), _const2),
                  pl.BlockSpec((1, F), _const2)],
        out_specs=pl.BlockSpec((1, 1), _const2),
        compiler_params=pltpu.CompilerParams(dimension_semantics=("arbitrary",)),
    )(x, params["norm_g"], params["norm_b"], params["feat_w"], params["feat_b"])


# ------------------------------- model forward --------------------------------
def swin_transformer_forward(x_img, params):
    """x_img: (2, 3, IMG, IMG) NCHW.  Both images are batched through the whole
    backbone; the head kernel computes feat(x1) @ feat(x2).T -> (1, 1)."""
    B = x_img.shape[0]
    Hs = IMG // PATCH

    # patch flatten (JAX glue): NCHW -> NHWC -> per-patch rows (B, N, P*P*3)
    x = jnp.transpose(x_img, (0, 2, 3, 1))
    x = x.reshape(B, Hs, PATCH, Hs, PATCH, 3).transpose(0, 1, 3, 2, 4, 5)
    x = x.reshape(B, Hs * Hs, PATCH * PATCH * 3)

    x = patch_embed(x, params)                              # (B, 64, 32)

    bi = 0
    for stage, (depth, heads) in enumerate(zip(DEPTHS, HEADS)):
        for _ in range(depth):
            x = swin_block(x, params["blocks"][bi], heads)
            bi += 1
        if stage + 1 < len(DEPTHS):
            x = patch_merging(x, Hs, params[f"merge{stage}_ln_g"],
                              params[f"merge{stage}_ln_b"], params[f"merge{stage}_w"])
            Hs //= 2

    return feature_head(x, params)                          # (1, 1)


# ------------------------------------ main ------------------------------------
if __name__ == "__main__":
    key = jax.random.PRNGKey(0)
    pkey, xkey = jax.random.split(key)
    params = init_params(pkey)
    x = jax.random.normal(xkey, (2, 3, IMG, IMG), jnp.float32)

    fwd = jax.jit(swin_transformer_forward)
    y = fwd(x, params)
    jax.block_until_ready(y)
    assert y.shape == (1, 1) and y.dtype == jnp.float32
    print("KERNEL_OK")
</pallas_src>

<mosaic_0001>
module attributes {stable_mosaic.version = 11 : i64} {
  func.func @_swin_block_kernel(%arg0: i32, %arg1: memref<1x64x32xf32, #tpu.memory_space<vmem>>, %arg2: memref<1x32xf32, #tpu.memory_space<vmem>>, %arg3: memref<1x32xf32, #tpu.memory_space<vmem>>, %arg4: memref<32x96xbf16, #tpu.memory_space<vmem>>, %arg5: memref<1x96xf32, #tpu.memory_space<vmem>>, %arg6: memref<2x64x64xf32, #tpu.memory_space<vmem>>, %arg7: memref<32x32xbf16, #tpu.memory_space<vmem>>, %arg8: memref<1x32xf32, #tpu.memory_space<vmem>>, %arg9: memref<1x32xf32, #tpu.memory_space<vmem>>, %arg10: memref<1x32xf32, #tpu.memory_space<vmem>>, %arg11: memref<32x128xbf16, #tpu.memory_space<vmem>>, %arg12: memref<1x128xf32, #tpu.memory_space<vmem>>, %arg13: memref<128x32xbf16, #tpu.memory_space<vmem>>, %arg14: memref<1x32xf32, #tpu.memory_space<vmem>>, %arg15: memref<1x64x32xf32, #tpu.memory_space<vmem>>) attributes {dimension_semantics = [#tpu.dimension_semantics<parallel>], iteration_bounds = array<i64: 2>, scalar_prefetch = 0 : i64, scratch_operands = 0 : i64, tpu.core_type = #tpu.core_type<tc>, window_params = [{transform_indices = @transform_0, window_bounds = array<i64: 1, 64, 32>}, {pipeline_mode = #tpu.pipeline_mode<synchronous>, transform_indices = @transform_1, window_bounds = array<i64: 1, 32>}, {pipeline_mode = #tpu.pipeline_mode<synchronous>, transform_indices = @transform_2, window_bounds = array<i64: 1, 32>}, {pipeline_mode = #tpu.pipeline_mode<synchronous>, transform_indices = @transform_3, window_bounds = array<i64: 32, 96>}, {pipeline_mode = #tpu.pipeline_mode<synchronous>, transform_indices = @transform_4, window_bounds = array<i64: 1, 96>}, {pipeline_mode = #tpu.pipeline_mode<synchronous>, transform_indices = @transform_5, window_bounds = array<i64: 2, 64, 64>}, {pipeline_mode = #tpu.pipeline_mode<synchronous>, transform_indices = @transform_6, window_bounds = array<i64: 32, 32>}, {pipeline_mode = #tpu.pipeline_mode<synchronous>, transform_indices = @transform_7, window_bounds = array<i64: 1, 32>}, {pipeline_mode = #tpu.pipeline_mode<synchronous>, transform_indices = @transform_8, window_bounds = array<i64: 1, 32>}, {pipeline_mode = #tpu.pipeline_mode<synchronous>, transform_indices = @transform_9, window_bounds = array<i64: 1, 32>}, {pipeline_mode = #tpu.pipeline_mode<synchronous>, transform_indices = @transform_10, window_bounds = array<i64: 32, 128>}, {pipeline_mode = #tpu.pipeline_mode<synchronous>, transform_indices = @transform_11, window_bounds = array<i64: 1, 128>}, {pipeline_mode = #tpu.pipeline_mode<synchronous>, transform_indices = @transform_12, window_bounds = array<i64: 128, 32>}, {pipeline_mode = #tpu.pipeline_mode<synchronous>, transform_indices = @transform_13, window_bounds = array<i64: 1, 32>}, {transform_indices = @transform_14, window_bounds = array<i64: 1, 64, 32>}]} {
    %c0 = arith.constant 0 : index
    %c0_0 = arith.constant 0 : index
    %c0_1 = arith.constant 0 : index
    %0 = vector.load %arg1[%c0, %c0_0, %c0_1] : memref<1x64x32xf32, #tpu.memory_space<vmem>>, vector<1x64x32xf32>
    %1 = vector.shape_cast %0 : vector<1x64x32xf32> to vector<64x32xf32>
    %c0_2 = arith.constant 0 : index
    %c0_3 = arith.constant 0 : index
    %2 = vector.load %arg2[%c0_2, %c0_3] : memref<1x32xf32, #tpu.memory_space<vmem>>, vector<1x32xf32>
    %c0_4 = arith.constant 0 : index
    %c0_5 = arith.constant 0 : index
    %3 = vector.load %arg3[%c0_4, %c0_5] : memref<1x32xf32, #tpu.memory_space<vmem>>, vector<1x32xf32>
    %cst = arith.constant dense<0.000000e+00> : vector<64xf32>
    %4 = vector.multi_reduction <add>, %1, %cst [1] : vector<64x32xf32> to vector<64xf32>
    %5 = vector.shape_cast %4 : vector<64xf32> to vector<64x1xf32>
    %cst_6 = arith.constant 3.200000e+01 : f32
    %6 = vector.broadcast %cst_6 : f32 to vector<64x1xf32>
    %7 = arith.divf %5, %6 : vector<64x1xf32>
    %8 = vector.broadcast %7 : vector<64x1xf32> to vector<64x32xf32>
    %9 = arith.subf %1, %8 : vector<64x32xf32>
    %10 = arith.mulf %9, %9 : vector<64x32xf32>
    %cst_7 = arith.constant dense<0.000000e+00> : vector<64xf32>
    %11 = vector.multi_reduction <add>, %10, %cst_7 [1] : vector<64x32xf32> to vector<64xf32>
    %12 = vector.shape_cast %11 : vector<64xf32> to vector<64x1xf32>
    %cst_8 = arith.constant 3.200000e+01 : f32
    %13 = vector.broadcast %cst_8 : f32 to vector<64x1xf32>
    %14 = arith.divf %12, %13 : vector<64x1xf32>
    %cst_9 = arith.constant 9.99999974E-6 : f32
    %15 = vector.broadcast %cst_9 : f32 to vector<64x1xf32>
    %16 = arith.addf %14, %15 : vector<64x1xf32>
    %17 = math.rsqrt %16 : vector<64x1xf32>
    %18 = vector.broadcast %17 : vector<64x1xf32> to vector<64x32xf32>
    %19 = arith.mulf %9, %18 : vector<64x32xf32>
    %20 = vector.broadcast %2 : vector<1x32xf32> to vector<64x32xf32>
    %21 = arith.mulf %19, %20 : vector<64x32xf32>
    %22 = vector.broadcast %3 : vector<1x32xf32> to vector<64x32xf32>
    %23 = arith.addf %21, %22 : vector<64x32xf32>
    %c0_10 = arith.constant 0 : index
    %c0_11 = arith.constant 0 : index
    %24 = vector.load %arg4[%c0_10, %c0_11] : memref<32x96xbf16, #tpu.memory_space<vmem>>, vector<32x96xbf16>
    %25 = arith.truncf %23 : vector<64x32xf32> to vector<64x32xbf16>
    %cst_12 = arith.constant dense<0.000000e+00> : vector<64x96xf32>
    %26 = tpu.matmul %25, %24, %cst_12 {dimension_numbers = #tpu.dot_dimension_numbers<[1], [0], [0], [1], [0, 0, 1, 1], [], []>} : vector<64x32xbf16>, vector<32x96xbf16>, vector<64x96xf32> -> vector<64x96xf32>
    %c0_13 = arith.constant 0 : index
    %c0_14 = arith.constant 0 : index
    %27 = vector.load %arg5[%c0_13, %c0_14] : memref<1x96xf32, #tpu.memory_space<vmem>>, vector<1x96xf32>
    %28 = vector.broadcast %27 : vector<1x96xf32> to vector<64x96xf32>
    %29 = arith.addf %26, %28 : vector<64x96xf32>
    %30 = vector.extract_strided_slice %29 {offsets = [0, 0], sizes = [64, 16], strides = [1, 1]} : vector<64x96xf32> to vector<64x16xf32>
    %31 = arith.truncf %30 : vector<64x16xf32> to vector<64x16xbf16>
    %32 = vector.extract_strided_slice %29 {offsets = [0, 32], sizes = [64, 16], strides = [1, 1]} : vector<64x96xf32> to vector<64x16xf32>
    %33 = arith.truncf %32 : vector<64x16xf32> to vector<64x16xbf16>
    %34 = vector.extract_strided_slice %29 {offsets = [0, 64], sizes = [64, 16], strides = [1, 1]} : vector<64x96xf32> to vector<64x16xf32>
    %35 = arith.truncf %34 : vector<64x16xf32> to vector<64x16xbf16>
    %cst_15 = arith.constant dense<0.000000e+00> : vector<64x64xf32>
    %36 = tpu.matmul %31, %33, %cst_15 {dimension_numbers = #tpu.dot_dimension_numbers<[1], [1], [0], [0], [0, 0, 1, 0], [], []>} : vector<64x16xbf16>, vector<64x16xbf16>, vector<64x64xf32> -> vector<64x64xf32>
    %cst_16 = arith.constant 2.500000e-01 : f32
    %37 = vector.broadcast %cst_16 : f32 to vector<64x64xf32>
    %38 = arith.mulf %36, %37 : vector<64x64xf32>
    %c0_17 = arith.constant 0 : index
    %c0_18 = arith.constant 0 : index
    %c0_19 = arith.constant 0 : index
    %39 = vector.load %arg6[%c0_17, %c0_18, %c0_19] : memref<2x64x64xf32, #tpu.memory_space<vmem>>, vector<1x64x64xf32>
    %40 = vector.shape_cast %39 : vector<1x64x64xf32> to vector<64x64xf32>
    %41 = arith.addf %38, %40 : vector<64x64xf32>
    %cst_20 = arith.constant dense<0xFF800000> : vector<64xf32>
    %42 = vector.multi_reduction <maximumf>, %41, %cst_20 [1] : vector<64x64xf32> to vector<64xf32>
    %43 = vector.shape_cast %42 : vector<64xf32> to vector<64x1xf32>
    %44 = vector.broadcast %43 : vector<64x1xf32> to vector<64x64xf32>
    %45 = arith.subf %41, %44 : vector<64x64xf32>
    %46 = math.exp %45 : vector<64x64xf32>
    %cst_21 = arith.constant dense<0.000000e+00> : vector<64xf32>
    %47 = vector.multi_reduction <add>, %46, %cst_21 [1] : vector<64x64xf32> to vector<64xf32>
    %48 = vector.shape_cast %47 : vector<64xf32> to vector<64x1xf32>
    %49 = tpu.reciprocal %48 {approx = true} : vector<64x1xf32> -> vector<64x1xf32>
    %50 = vector.broadcast %49 : vector<64x1xf32> to vector<64x64xf32>
    %51 = arith.mulf %46, %50 : vector<64x64xf32>
    %52 = arith.truncf %51 : vector<64x64xf32> to vector<64x64xbf16>
    %cst_22 = arith.constant dense<0.000000e+00> : vector<64x16xf32>
    %53 = tpu.matmul %52, %35, %cst_22 {dimension_numbers = #tpu.dot_dimension_numbers<[1], [0], [0], [1], [0, 0, 1, 1], [], []>} : vector<64x64xbf16>, vector<64x16xbf16>, vector<64x16xf32> -> vector<64x16xf32>
    %54 = vector.extract_strided_slice %29 {offsets = [0, 16], sizes = [64, 16], strides = [1, 1]} : vector<64x96xf32> to vector<64x16xf32>
    %55 = arith.truncf %54 : vector<64x16xf32> to vector<64x16xbf16>
    %56 = vector.extract_strided_slice %29 {offsets = [0, 48], sizes = [64, 16], strides = [1, 1]} : vector<64x96xf32> to vector<64x16xf32>
    %57 = arith.truncf %56 : vector<64x16xf32> to vector<64x16xbf16>
    %58 = vector.extract_strided_slice %29 {offsets = [0, 80], sizes = [64, 16], strides = [1, 1]} : vector<64x96xf32> to vector<64x16xf32>
    %59 = arith.truncf %58 : vector<64x16xf32> to vector<64x16xbf16>
    %cst_23 = arith.constant dense<0.000000e+00> : vector<64x64xf32>
    %60 = tpu.matmul %55, %57, %cst_23 {dimension_numbers = #tpu.dot_dimension_numbers<[1], [1], [0], [0], [0, 0, 1, 0], [], []>} : vector<64x16xbf16>, vector<64x16xbf16>, vector<64x64xf32> -> vector<64x64xf32>
    %cst_24 = arith.constant 2.500000e-01 : f32
    %61 = vector.broadcast %cst_24 : f32 to vector<64x64xf32>
    %62 = arith.mulf %60, %61 : vector<64x64xf32>
    %c1 = arith.constant 1 : index
    %c0_25 = arith.constant 0 : index
    %c0_26 = arith.constant 0 : index
    %63 = vector.load %arg6[%c1, %c0_25, %c0_26] : memref<2x64x64xf32, #tpu.memory_space<vmem>>, vector<1x64x64xf32>
    %64 = vector.shape_cast %63 : vector<1x64x64xf32> to vector<64x64xf32>
    %65 = arith.addf %62, %64 : vector<64x64xf32>
    %cst_27 = arith.constant dense<0xFF800000> : vector<64xf32>
    %66 = vector.multi_reduction <maximumf>, %65, %cst_27 [1] : vector<64x64xf32> to vector<64xf32>
    %67 = vector.shape_cast %66 : vector<64xf32> to vector<64x1xf32>
    %68 = vector.broadcast %67 : vector<64x1xf32> to vector<64x64xf32>
    %69 = arith.subf %65, %68 : vector<64x64xf32>
    %70 = math.exp %69 : vector<64x64xf32>
    %cst_28 = arith.constant dense<0.000000e+00> : vector<64xf32>
    %71 = vector.multi_reduction <add>, %70, %cst_28 [1] : vector<64x64xf32> to vector<64xf32>
    %72 = vector.shape_cast %71 : vector<64xf32> to vector<64x1xf32>
    %73 = tpu.reciprocal %72 {approx = true} : vector<64x1xf32> -> vector<64x1xf32>
    %74 = vector.broadcast %73 : vector<64x1xf32> to vector<64x64xf32>
    %75 = arith.mulf %70, %74 : vector<64x64xf32>
    %76 = arith.truncf %75 : vector<64x64xf32> to vector<64x64xbf16>
    %cst_29 = arith.constant dense<0.000000e+00> : vector<64x16xf32>
    %77 = tpu.matmul %76, %59, %cst_29 {dimension_numbers = #tpu.dot_dimension_numbers<[1], [0], [0], [1], [0, 0, 1, 1], [], []>} : vector<64x64xbf16>, vector<64x16xbf16>, vector<64x16xf32> -> vector<64x16xf32>
    %78 = tpu.concatenate %53, %77 in 1 : vector<64x16xf32>, vector<64x16xf32> -> vector<64x32xf32>
    %c0_30 = arith.constant 0 : index
    %c0_31 = arith.constant 0 : index
    %79 = vector.load %arg7[%c0_30, %c0_31] : memref<32x32xbf16, #tpu.memory_space<vmem>>, vector<32x32xbf16>
    %80 = arith.truncf %78 : vector<64x32xf32> to vector<64x32xbf16>
    %cst_32 = arith.constant dense<0.000000e+00> : vector<64x32xf32>
    %81 = tpu.matmul %80, %79, %cst_32 {dimension_numbers = #tpu.dot_dimension_numbers<[1], [0], [0], [1], [0, 0, 1, 1], [], []>} : vector<64x32xbf16>, vector<32x32xbf16>, vector<64x32xf32> -> vector<64x32xf32>
    %82 = arith.addf %1, %81 : vector<64x32xf32>
    %c0_33 = arith.constant 0 : index
    %c0_34 = arith.constant 0 : index
    %83 = vector.load %arg8[%c0_33, %c0_34] : memref<1x32xf32, #tpu.memory_space<vmem>>, vector<1x32xf32>
    %84 = vector.broadcast %83 : vector<1x32xf32> to vector<64x32xf32>
    %85 = arith.addf %82, %84 : vector<64x32xf32>
    %c0_35 = arith.constant 0 : index
    %c0_36 = arith.constant 0 : index
    %86 = vector.load %arg9[%c0_35, %c0_36] : memref<1x32xf32, #tpu.memory_space<vmem>>, vector<1x32xf32>
    %c0_37 = arith.constant 0 : index
    %c0_38 = arith.constant 0 : index
    %87 = vector.load %arg10[%c0_37, %c0_38] : memref<1x32xf32, #tpu.memory_space<vmem>>, vector<1x32xf32>
    %cst_39 = arith.constant dense<0.000000e+00> : vector<64xf32>
    %88 = vector.multi_reduction <add>, %85, %cst_39 [1] : vector<64x32xf32> to vector<64xf32>
    %89 = vector.shape_cast %88 : vector<64xf32> to vector<64x1xf32>
    %cst_40 = arith.constant 3.200000e+01 : f32
    %90 = vector.broadcast %cst_40 : f32 to vector<64x1xf32>
    %91 = arith.divf %89, %90 : vector<64x1xf32>
    %92 = vector.broadcast %91 : vector<64x1xf32> to vector<64x32xf32>
    %93 = arith.subf %85, %92 : vector<64x32xf32>
    %94 = arith.mulf %93, %93 : vector<64x32xf32>
    %cst_41 = arith.constant dense<0.000000e+00> : vector<64xf32>
    %95 = vector.multi_reduction <add>, %94, %cst_41 [1] : vector<64x32xf32> to vector<64xf32>
    %96 = vector.shape_cast %95 : vector<64xf32> to vector<64x1xf32>
    %cst_42 = arith.constant 3.200000e+01 : f32
    %97 = vector.broadcast %cst_42 : f32 to vector<64x1xf32>
    %98 = arith.divf %96, %97 : vector<64x1xf32>
    %cst_43 = arith.constant 9.99999974E-6 : f32
    %99 = vector.broadcast %cst_43 : f32 to vector<64x1xf32>
    %100 = arith.addf %98, %99 : vector<64x1xf32>
    %101 = math.rsqrt %100 : vector<64x1xf32>
    %102 = vector.broadcast %101 : vector<64x1xf32> to vector<64x32xf32>
    %103 = arith.mulf %93, %102 : vector<64x32xf32>
    %104 = vector.broadcast %86 : vector<1x32xf32> to vector<64x32xf32>
    %105 = arith.mulf %103, %104 : vector<64x32xf32>
    %106 = vector.broadcast %87 : vector<1x32xf32> to vector<64x32xf32>
    %107 = arith.addf %105, %106 : vector<64x32xf32>
    %c0_44 = arith.constant 0 : index
    %c0_45 = arith.constant 0 : index
    %108 = vector.load %arg11[%c0_44, %c0_45] : memref<32x128xbf16, #tpu.memory_space<vmem>>, vector<32x128xbf16>
    %109 = arith.truncf %107 : vector<64x32xf32> to vector<64x32xbf16>
    %cst_46 = arith.constant dense<0.000000e+00> : vector<64x128xf32>
    %110 = tpu.matmul %109, %108, %cst_46 {dimension_numbers = #tpu.dot_dimension_numbers<[1], [0], [0], [1], [0, 0, 1, 1], [], []>} : vector<64x32xbf16>, vector<32x128xbf16>, vector<64x128xf32> -> vector<64x128xf32>
    %c0_47 = arith.constant 0 : index
    %c0_48 = arith.constant 0 : index
    %111 = vector.load %arg12[%c0_47, %c0_48] : memref<1x128xf32, #tpu.memory_space<vmem>>, vector<1x128xf32>
    %112 = vector.broadcast %111 : vector<1x128xf32> to vector<64x128xf32>
    %113 = arith.addf %110, %112 : vector<64x128xf32>
    %cst_49 = arith.constant 5.000000e-01 : f32
    %114 = vector.broadcast %cst_49 : f32 to vector<64x128xf32>
    %115 = arith.mulf %114, %113 : vector<64x128xf32>
    %cst_50 = arith.constant 4.471500e-02 : f32
    %116 = vector.broadcast %cst_50 : f32 to vector<64x128xf32>
    %117 = arith.mulf %116, %113 : vector<64x128xf32>
    %118 = arith.mulf %117, %113 : vector<64x128xf32>
    %119 = arith.mulf %118, %113 : vector<64x128xf32>
    %120 = arith.addf %113, %119 : vector<64x128xf32>
    %cst_51 = arith.constant 0.797884583 : f32
    %121 = vector.broadcast %cst_51 : f32 to vector<64x128xf32>
    %122 = arith.mulf %121, %120 : vector<64x128xf32>
    %123 = math.tanh %122 : vector<64x128xf32>
    %cst_52 = arith.constant 1.000000e+00 : f32
    %124 = vector.broadcast %cst_52 : f32 to vector<64x128xf32>
    %125 = arith.addf %124, %123 : vector<64x128xf32>
    %126 = arith.mulf %115, %125 : vector<64x128xf32>
    %c0_53 = arith.constant 0 : index
    %c0_54 = arith.constant 0 : index
    %127 = vector.load %arg13[%c0_53, %c0_54] : memref<128x32xbf16, #tpu.memory_space<vmem>>, vector<128x32xbf16>
    %128 = arith.truncf %126 : vector<64x128xf32> to vector<64x128xbf16>
    %cst_55 = arith.constant dense<0.000000e+00> : vector<64x32xf32>
    %129 = tpu.matmul %128, %127, %cst_55 {dimension_numbers = #tpu.dot_dimension_numbers<[1], [0], [0], [1], [0, 0, 1, 1], [], []>} : vector<64x128xbf16>, vector<128x32xbf16>, vector<64x32xf32> -> vector<64x32xf32>
    %c0_56 = arith.constant 0 : index
    %c0_57 = arith.constant 0 : index
    %130 = vector.load %arg14[%c0_56, %c0_57] : memref<1x32xf32, #tpu.memory_space<vmem>>, vector<1x32xf32>
    %131 = vector.broadcast %130 : vector<1x32xf32> to vector<64x32xf32>
    %132 = arith.addf %129, %131 : vector<64x32xf32>
    %133 = arith.addf %85, %132 : vector<64x32xf32>
    %c0_58 = arith.constant 0 : index
    %c0_59 = arith.constant 0 : index
    %c0_60 = arith.constant 0 : index
    %134 = vector.load %arg15[%c0_58, %c0_59, %c0_60] : memref<1x64x32xf32, #tpu.memory_space<vmem>>, vector<1x64x32xf32>
    %135 = vector.shape_cast %134 : vector<1x64x32xf32> to vector<64x32xf32>
    %136 = vector.shape_cast %133 : vector<64x32xf32> to vector<1x64x32xf32>
    tpu.vector_store %arg15[%c0_58, %c0_59, %c0_60], %136 {strides = array<i32>} : memref<1x64x32xf32, #tpu.memory_space<vmem>>, vector<1x64x32xf32>,
    return
  }
  func.func @transform_0(%arg0: i32) -> (i32, i32, i32) {
    %c0_i32 = arith.constant 0 : i32
    %c0_i32_0 = arith.constant 0 : i32
    %c0_i32_1 = arith.constant 0 : i32
    return %arg0, %c0_i32, %c0_i32_0 : i32, i32, i32
  }
  func.func @transform_1(%arg0: i32) -> (i32, i32) {
    %c0_i32 = arith.constant 0 : i32
    %c0_i32_0 = arith.constant 0 : i32
    %c0_i32_1 = arith.constant 0 : i32
    return %c0_i32, %c0_i32_0 : i32, i32
  }
  func.func @transform_2(%arg0: i32) -> (i32, i32) {
    %c0_i32 = arith.constant 0 : i32
    %c0_i32_0 = arith.constant 0 : i32
    %c0_i32_1 = arith.constant 0 : i32
    return %c0_i32, %c0_i32_0 : i32, i32
  }
  func.func @transform_3(%arg0: i32) -> (i32, i32) {
    %c0_i32 = arith.constant 0 : i32
    %c0_i32_0 = arith.constant 0 : i32
    %c0_i32_1 = arith.constant 0 : i32
    return %c0_i32, %c0_i32_0 : i32, i32
  }
  func.func @transform_4(%arg0: i32) -> (i32, i32) {
    %c0_i32 = arith.constant 0 : i32
    %c0_i32_0 = arith.constant 0 : i32
    %c0_i32_1 = arith.constant 0 : i32
    return %c0_i32, %c0_i32_0 : i32, i32
  }
  func.func @transform_5(%arg0: i32) -> (i32, i32, i32) {
    %c0_i32 = arith.constant 0 : i32
    %c0_i32_0 = arith.constant 0 : i32
    %c0_i32_1 = arith.constant 0 : i32
    %c0_i32_2 = arith.constant 0 : i32
    return %c0_i32, %c0_i32_0, %c0_i32_1 : i32, i32, i32
  }
  func.func @transform_6(%arg0: i32) -> (i32, i32) {
    %c0_i32 = arith.constant 0 : i32
    %c0_i32_0 = arith.constant 0 : i32
    %c0_i32_1 = arith.constant 0 : i32
    return %c0_i32, %c0_i32_0 : i32, i32
  }
  func.func @transform_7(%arg0: i32) -> (i32, i32) {
    %c0_i32 = arith.constant 0 : i32
    %c0_i32_0 = arith.constant 0 : i32
    %c0_i32_1 = arith.constant 0 : i32
    return %c0_i32, %c0_i32_0 : i32, i32
  }
  func.func @transform_8(%arg0: i32) -> (i32, i32) {
    %c0_i32 = arith.constant 0 : i32
    %c0_i32_0 = arith.constant 0 : i32
    %c0_i32_1 = arith.constant 0 : i32
    return %c0_i32, %c0_i32_0 : i32, i32
  }
  func.func @transform_9(%arg0: i32) -> (i32, i32) {
    %c0_i32 = arith.constant 0 : i32
    %c0_i32_0 = arith.constant 0 : i32
    %c0_i32_1 = arith.constant 0 : i32
    return %c0_i32, %c0_i32_0 : i32, i32
  }
  func.func @transform_10(%arg0: i32) -> (i32, i32) {
    %c0_i32 = arith.constant 0 : i32
    %c0_i32_0 = arith.constant 0 : i32
    %c0_i32_1 = arith.constant 0 : i32
    return %c0_i32, %c0_i32_0 : i32, i32
  }
  func.func @transform_11(%arg0: i32) -> (i32, i32) {
    %c0_i32 = arith.constant 0 : i32
    %c0_i32_0 = arith.constant 0 : i32
    %c0_i32_1 = arith.constant 0 : i32
    return %c0_i32, %c0_i32_0 : i32, i32
  }
  func.func @transform_12(%arg0: i32) -> (i32, i32) {
    %c0_i32 = arith.constant 0 : i32
    %c0_i32_0 = arith.constant 0 : i32
    %c0_i32_1 = arith.constant 0 : i32
    return %c0_i32, %c0_i32_0 : i32, i32
  }
  func.func @transform_13(%arg0: i32) -> (i32, i32) {
    %c0_i32 = arith.constant 0 : i32
    %c0_i32_0 = arith.constant 0 : i32
    %c0_i32_1 = arith.constant 0 : i32
    return %c0_i32, %c0_i32_0 : i32, i32
  }
  func.func @transform_14(%arg0: i32) -> (i32, i32, i32) {
    %c0_i32 = arith.constant 0 : i32
    %c0_i32_0 = arith.constant 0 : i32
    %c0_i32_1 = arith.constant 0 : i32
    return %arg0, %c0_i32, %c0_i32_0 : i32, i32, i32
  }
}

module attributes {stable_mosaic.version = 11 : i64} {
  func.func @_patch_embed_kernel(%arg0: i32, %arg1: memref<1x64x48xf32, #tpu.memory_space<vmem>>, %arg2: memref<48x32xbf16, #tpu.memory_space<vmem>>, %arg3: memref<1x32xf32, #tpu.memory_space<vmem>>, %arg4: memref<1x32xf32, #tpu.memory_space<vmem>>, %arg5: memref<1x32xf32, #tpu.memory_space<vmem>>, %arg6: memref<1x64x32xf32, #tpu.memory_space<vmem>>) attributes {dimension_semantics = [#tpu.dimension_semantics<parallel>], iteration_bounds = array<i64: 2>, scalar_prefetch = 0 : i64, scratch_operands = 0 : i64, tpu.core_type = #tpu.core_type<tc>, window_params = [{transform_indices = @transform_0, window_bounds = array<i64: 1, 64, 48>}, {pipeline_mode = #tpu.pipeline_mode<synchronous>, transform_indices = @transform_1, window_bounds = array<i64: 48, 32>}, {pipeline_mode = #tpu.pipeline_mode<synchronous>, transform_indices = @transform_2, window_bounds = array<i64: 1, 32>}, {pipeline_mode = #tpu.pipeline_mode<synchronous>, transform_indices = @transform_3, window_bounds = array<i64: 1, 32>}, {pipeline_mode = #tpu.pipeline_mode<synchronous>, transform_indices = @transform_4, window_bounds = array<i64: 1, 32>}, {transform_indices = @transform_5, window_bounds = array<i64: 1, 64, 32>}]} {
    %c0 = arith.constant 0 : index
    %c0_0 = arith.constant 0 : index
    %c0_1 = arith.constant 0 : index
    %0 = vector.load %arg1[%c0, %c0_0, %c0_1] : memref<1x64x48xf32, #tpu.memory_space<vmem>>, vector<1x64x48xf32>
    %1 = vector.shape_cast %0 : vector<1x64x48xf32> to vector<64x48xf32>
    %c0_2 = arith.constant 0 : index
    %c0_3 = arith.constant 0 : index
    %2 = vector.load %arg2[%c0_2, %c0_3] : memref<48x32xbf16, #tpu.memory_space<vmem>>, vector<48x32xbf16>
    %3 = arith.truncf %1 : vector<64x48xf32> to vector<64x48xbf16>
    %cst = arith.constant dense<0.000000e+00> : vector<64x32xf32>
    %4 = tpu.matmul %3, %2, %cst {dimension_numbers = #tpu.dot_dimension_numbers<[1], [0], [0], [1], [0, 0, 1, 1], [], []>} : vector<64x48xbf16>, vector<48x32xbf16>, vector<64x32xf32> -> vector<64x32xf32>
    %c0_4 = arith.constant 0 : index
    %c0_5 = arith.constant 0 : index
    %5 = vector.load %arg3[%c0_4, %c0_5] : memref<1x32xf32, #tpu.memory_space<vmem>>, vector<1x32xf32>
    %6 = vector.broadcast %5 : vector<1x32xf32> to vector<64x32xf32>
    %7 = arith.addf %4, %6 : vector<64x32xf32>
    %c0_6 = arith.constant 0 : index
    %c0_7 = arith.constant 0 : index
    %8 = vector.load %arg4[%c0_6, %c0_7] : memref<1x32xf32, #tpu.memory_space<vmem>>, vector<1x32xf32>
    %c0_8 = arith.constant 0 : index
    %c0_9 = arith.constant 0 : index
    %9 = vector.load %arg5[%c0_8, %c0_9] : memref<1x32xf32, #tpu.memory_space<vmem>>, vector<1x32xf32>
    %cst_10 = arith.constant dense<0.000000e+00> : vector<64xf32>
    %10 = vector.multi_reduction <add>, %7, %cst_10 [1] : vector<64x32xf32> to vector<64xf32>
    %11 = vector.shape_cast %10 : vector<64xf32> to vector<64x1xf32>
    %cst_11 = arith.constant 3.200000e+01 : f32
    %12 = vector.broadcast %cst_11 : f32 to vector<64x1xf32>
    %13 = arith.divf %11, %12 : vector<64x1xf32>
    %14 = vector.broadcast %13 : vector<64x1xf32> to vector<64x32xf32>
    %15 = arith.subf %7, %14 : vector<64x32xf32>
    %16 = arith.mulf %15, %15 : vector<64x32xf32>
    %cst_12 = arith.constant dense<0.000000e+00> : vector<64xf32>
    %17 = vector.multi_reduction <add>, %16, %cst_12 [1] : vector<64x32xf32> to vector<64xf32>
    %18 = vector.shape_cast %17 : vector<64xf32> to vector<64x1xf32>
    %cst_13 = arith.constant 3.200000e+01 : f32
    %19 = vector.broadcast %cst_13 : f32 to vector<64x1xf32>
    %20 = arith.divf %18, %19 : vector<64x1xf32>
    %cst_14 = arith.constant 9.99999974E-6 : f32
    %21 = vector.broadcast %cst_14 : f32 to vector<64x1xf32>
    %22 = arith.addf %20, %21 : vector<64x1xf32>
    %23 = math.rsqrt %22 : vector<64x1xf32>
    %24 = vector.broadcast %23 : vector<64x1xf32> to vector<64x32xf32>
    %25 = arith.mulf %15, %24 : vector<64x32xf32>
    %26 = vector.broadcast %8 : vector<1x32xf32> to vector<64x32xf32>
    %27 = arith.mulf %25, %26 : vector<64x32xf32>
    %28 = vector.broadcast %9 : vector<1x32xf32> to vector<64x32xf32>
    %29 = arith.addf %27, %28 : vector<64x32xf32>
    %c0_15 = arith.constant 0 : index
    %c0_16 = arith.constant 0 : index
    %c0_17 = arith.constant 0 : index
    %30 = vector.load %arg6[%c0_15, %c0_16, %c0_17] : memref<1x64x32xf32, #tpu.memory_space<vmem>>, vector<1x64x32xf32>
    %31 = vector.shape_cast %30 : vector<1x64x32xf32> to vector<64x32xf32>
    %32 = vector.shape_cast %29 : vector<64x32xf32> to vector<1x64x32xf32>
    tpu.vector_store %arg6[%c0_15, %c0_16, %c0_17], %32 {strides = array<i32>} : memref<1x64x32xf32, #tpu.memory_space<vmem>>, vector<1x64x32xf32>,
    return
  }
  func.func @transform_0(%arg0: i32) -> (i32, i32, i32) {
    %c0_i32 = arith.constant 0 : i32
    %c0_i32_0 = arith.constant 0 : i32
    %c0_i32_1 = arith.constant 0 : i32
    return %arg0, %c0_i32, %c0_i32_0 : i32, i32, i32
  }
  func.func @transform_1(%arg0: i32) -> (i32, i32) {
    %c0_i32 = arith.constant 0 : i32
    %c0_i32_0 = arith.constant 0 : i32
    %c0_i32_1 = arith.constant 0 : i32
    return %c0_i32, %c0_i32_0 : i32, i32
  }
  func.func @transform_2(%arg0: i32) -> (i32, i32) {
    %c0_i32 = arith.constant 0 : i32
    %c0_i32_0 = arith.constant 0 : i32
    %c0_i32_1 = arith.constant 0 : i32
    return %c0_i32, %c0_i32_0 : i32, i32
  }
  func.func @transform_3(%arg0: i32) -> (i32, i32) {
    %c0_i32 = arith.constant 0 : i32
    %c0_i32_0 = arith.constant 0 : i32
    %c0_i32_1 = arith.constant 0 : i32
    return %c0_i32, %c0_i32_0 : i32, i32
  }
  func.func @transform_4(%arg0: i32) -> (i32, i32) {
    %c0_i32 = arith.constant 0 : i32
    %c0_i32_0 = arith.constant 0 : i32
    %c0_i32_1 = arith.constant 0 : i32
    return %c0_i32, %c0_i32_0 : i32, i32
  }
  func.func @transform_5(%arg0: i32) -> (i32, i32, i32) {
    %c0_i32 = arith.constant 0 : i32
    %c0_i32_0 = arith.constant 0 : i32
    %c0_i32_1 = arith.constant 0 : i32
    return %arg0, %c0_i32, %c0_i32_0 : i32, i32, i32
  }
}

module attributes {stable_mosaic.version = 11 : i64} {
  func.func @_merge_kernel(%arg0: i32, %arg1: memref<1x16x128xf32, #tpu.memory_space<vmem>>, %arg2: memref<1x128xf32, #tpu.memory_space<vmem>>, %arg3: memref<1x128xf32, #tpu.memory_space<vmem>>, %arg4: memref<128x64xbf16, #tpu.memory_space<vmem>>, %arg5: memref<1x16x64xf32, #tpu.memory_space<vmem>>) attributes {dimension_semantics = [#tpu.dimension_semantics<parallel>], iteration_bounds = array<i64: 2>, scalar_prefetch = 0 : i64, scratch_operands = 0 : i64, tpu.core_type = #tpu.core_type<tc>, window_params = [{transform_indices = @transform_0, window_bounds = array<i64: 1, 16, 128>}, {pipeline_mode = #tpu.pipeline_mode<synchronous>, transform_indices = @transform_1, window_bounds = array<i64: 1, 128>}, {pipeline_mode = #tpu.pipeline_mode<synchronous>, transform_indices = @transform_2, window_bounds = array<i64: 1, 128>}, {pipeline_mode = #tpu.pipeline_mode<synchronous>, transform_indices = @transform_3, window_bounds = array<i64: 128, 64>}, {transform_indices = @transform_4, window_bounds = array<i64: 1, 16, 64>}]} {
    %c0 = arith.constant 0 : index
    %c0_0 = arith.constant 0 : index
    %c0_1 = arith.constant 0 : index
    %0 = vector.load %arg1[%c0, %c0_0, %c0_1] : memref<1x16x128xf32, #tpu.memory_space<vmem>>, vector<1x16x128xf32>
    %1 = vector.shape_cast %0 : vector<1x16x128xf32> to vector<16x128xf32>
    %c0_2 = arith.constant 0 : index
    %c0_3 = arith.constant 0 : index
    %2 = vector.load %arg2[%c0_2, %c0_3] : memref<1x128xf32, #tpu.memory_space<vmem>>, vector<1x128xf32>
    %c0_4 = arith.constant 0 : index
    %c0_5 = arith.constant 0 : index
    %3 = vector.load %arg3[%c0_4, %c0_5] : memref<1x128xf32, #tpu.memory_space<vmem>>, vector<1x128xf32>
    %cst = arith.constant dense<0.000000e+00> : vector<16xf32>
    %4 = vector.multi_reduction <add>, %1, %cst [1] : vector<16x128xf32> to vector<16xf32>
    %5 = vector.shape_cast %4 : vector<16xf32> to vector<16x1xf32>
    %cst_6 = arith.constant 1.280000e+02 : f32
    %6 = vector.broadcast %cst_6 : f32 to vector<16x1xf32>
    %7 = arith.divf %5, %6 : vector<16x1xf32>
    %8 = vector.broadcast %7 : vector<16x1xf32> to vector<16x128xf32>
    %9 = arith.subf %1, %8 : vector<16x128xf32>
    %10 = arith.mulf %9, %9 : vector<16x128xf32>
    %cst_7 = arith.constant dense<0.000000e+00> : vector<16xf32>
    %11 = vector.multi_reduction <add>, %10, %cst_7 [1] : vector<16x128xf32> to vector<16xf32>
    %12 = vector.shape_cast %11 : vector<16xf32> to vector<16x1xf32>
    %cst_8 = arith.constant 1.280000e+02 : f32
    %13 = vector.broadcast %cst_8 : f32 to vector<16x1xf32>
    %14 = arith.divf %12, %13 : vector<16x1xf32>
    %cst_9 = arith.constant 9.99999974E-6 : f32
    %15 = vector.broadcast %cst_9 : f32 to vector<16x1xf32>
    %16 = arith.addf %14, %15 : vector<16x1xf32>
    %17 = math.rsqrt %16 : vector<16x1xf32>
    %18 = vector.broadcast %17 : vector<16x1xf32> to vector<16x128xf32>
    %19 = arith.mulf %9, %18 : vector<16x128xf32>
    %20 = vector.broadcast %2 : vector<1x128xf32> to vector<16x128xf32>
    %21 = arith.mulf %19, %20 : vector<16x128xf32>
    %22 = vector.broadcast %3 : vector<1x128xf32> to vector<16x128xf32>
    %23 = arith.addf %21, %22 : vector<16x128xf32>
    %c0_10 = arith.constant 0 : index
    %c0_11 = arith.constant 0 : index
    %24 = vector.load %arg4[%c0_10, %c0_11] : memref<128x64xbf16, #tpu.memory_space<vmem>>, vector<128x64xbf16>
    %25 = arith.truncf %23 : vector<16x128xf32> to vector<16x128xbf16>
    %cst_12 = arith.constant dense<0.000000e+00> : vector<16x64xf32>
    %26 = tpu.matmul %25, %24, %cst_12 {dimension_numbers = #tpu.dot_dimension_numbers<[1], [0], [0], [1], [0, 0, 1, 1], [], []>} : vector<16x128xbf16>, vector<128x64xbf16>, vector<16x64xf32> -> vector<16x64xf32>
    %c0_13 = arith.constant 0 : index
    %c0_14 = arith.constant 0 : index
    %c0_15 = arith.constant 0 : index
    %27 = vector.load %arg5[%c0_13, %c0_14, %c0_15] : memref<1x16x64xf32, #tpu.memory_space<vmem>>, vector<1x16x64xf32>
    %28 = vector.shape_cast %27 : vector<1x16x64xf32> to vector<16x64xf32>
    %29 = vector.shape_cast %26 : vector<16x64xf32> to vector<1x16x64xf32>
    tpu.vector_store %arg5[%c0_13, %c0_14, %c0_15], %29 {strides = array<i32>} : memref<1x16x64xf32, #tpu.memory_space<vmem>>, vector<1x16x64xf32>,
    return
  }
  func.func @transform_0(%arg0: i32) -> (i32, i32, i32) {
    %c0_i32 = arith.constant 0 : i32
    %c0_i32_0 = arith.constant 0 : i32
    %c0_i32_1 = arith.constant 0 : i32
    return %arg0, %c0_i32, %c0_i32_0 : i32, i32, i32
  }
  func.func @transform_1(%arg0: i32) -> (i32, i32) {
    %c0_i32 = arith.constant 0 : i32
    %c0_i32_0 = arith.constant 0 : i32
    %c0_i32_1 = arith.constant 0 : i32
    return %c0_i32, %c0_i32_0 : i32, i32
  }
  func.func @transform_2(%arg0: i32) -> (i32, i32) {
    %c0_i32 = arith.constant 0 : i32
    %c0_i32_0 = arith.constant 0 : i32
    %c0_i32_1 = arith.constant 0 : i32
    return %c0_i32, %c0_i32_0 : i32, i32
  }
  func.func @transform_3(%arg0: i32) -> (i32, i32) {
    %c0_i32 = arith.constant 0 : i32
    %c0_i32_0 = arith.constant 0 : i32
    %c0_i32_1 = arith.constant 0 : i32
    return %c0_i32, %c0_i32_0 : i32, i32
  }
  func.func @transform_4(%arg0: i32) -> (i32, i32, i32) {
    %c0_i32 = arith.constant 0 : i32
    %c0_i32_0 = arith.constant 0 : i32
    %c0_i32_1 = arith.constant 0 : i32
    return %arg0, %c0_i32, %c0_i32_0 : i32, i32, i32
  }
}

module attributes {stable_mosaic.version = 11 : i64} {
  func.func @_swin_block_kernel(%arg0: i32, %arg1: memref<1x16x64xf32, #tpu.memory_space<vmem>>, %arg2: memref<1x64xf32, #tpu.memory_space<vmem>>, %arg3: memref<1x64xf32, #tpu.memory_space<vmem>>, %arg4: memref<64x192xbf16, #tpu.memory_space<vmem>>, %arg5: memref<1x192xf32, #tpu.memory_space<vmem>>, %arg6: memref<4x16x16xf32, #tpu.memory_space<vmem>>, %arg7: memref<64x64xbf16, #tpu.memory_space<vmem>>, %arg8: memref<1x64xf32, #tpu.memory_space<vmem>>, %arg9: memref<1x64xf32, #tpu.memory_space<vmem>>, %arg10: memref<1x64xf32, #tpu.memory_space<vmem>>, %arg11: memref<64x256xbf16, #tpu.memory_space<vmem>>, %arg12: memref<1x256xf32, #tpu.memory_space<vmem>>, %arg13: memref<256x64xbf16, #tpu.memory_space<vmem>>, %arg14: memref<1x64xf32, #tpu.memory_space<vmem>>, %arg15: memref<1x16x64xf32, #tpu.memory_space<vmem>>) attributes {dimension_semantics = [#tpu.dimension_semantics<parallel>], iteration_bounds = array<i64: 2>, scalar_prefetch = 0 : i64, scratch_operands = 0 : i64, tpu.core_type = #tpu.core_type<tc>, window_params = [{transform_indices = @transform_0, window_bounds = array<i64: 1, 16, 64>}, {pipeline_mode = #tpu.pipeline_mode<synchronous>, transform_indices = @transform_1, window_bounds = array<i64: 1, 64>}, {pipeline_mode = #tpu.pipeline_mode<synchronous>, transform_indices = @transform_2, window_bounds = array<i64: 1, 64>}, {pipeline_mode = #tpu.pipeline_mode<synchronous>, transform_indices = @transform_3, window_bounds = array<i64: 64, 192>}, {pipeline_mode = #tpu.pipeline_mode<synchronous>, transform_indices = @transform_4, window_bounds = array<i64: 1, 192>}, {pipeline_mode = #tpu.pipeline_mode<synchronous>, transform_indices = @transform_5, window_bounds = array<i64: 4, 16, 16>}, {pipeline_mode = #tpu.pipeline_mode<synchronous>, transform_indices = @transform_6, window_bounds = array<i64: 64, 64>}, {pipeline_mode = #tpu.pipeline_mode<synchronous>, transform_indices = @transform_7, window_bounds = array<i64: 1, 64>}, {pipeline_mode = #tpu.pipeline_mode<synchronous>, transform_indices = @transform_8, window_bounds = array<i64: 1, 64>}, {pipeline_mode = #tpu.pipeline_mode<synchronous>, transform_indices = @transform_9, window_bounds = array<i64: 1, 64>}, {pipeline_mode = #tpu.pipeline_mode<synchronous>, transform_indices = @transform_10, window_bounds = array<i64: 64, 256>}, {pipeline_mode = #tpu.pipeline_mode<synchronous>, transform_indices = @transform_11, window_bounds = array<i64: 1, 256>}, {pipeline_mode = #tpu.pipeline_mode<synchronous>, transform_indices = @transform_12, window_bounds = array<i64: 256, 64>}, {pipeline_mode = #tpu.pipeline_mode<synchronous>, transform_indices = @transform_13, window_bounds = array<i64: 1, 64>}, {transform_indices = @transform_14, window_bounds = array<i64: 1, 16, 64>}]} {
    %c0 = arith.constant 0 : index
    %c0_0 = arith.constant 0 : index
    %c0_1 = arith.constant 0 : index
    %0 = vector.load %arg1[%c0, %c0_0, %c0_1] : memref<1x16x64xf32, #tpu.memory_space<vmem>>, vector<1x16x64xf32>
    %1 = vector.shape_cast %0 : vector<1x16x64xf32> to vector<16x64xf32>
    %c0_2 = arith.constant 0 : index
    %c0_3 = arith.constant 0 : index
    %2 = vector.load %arg2[%c0_2, %c0_3] : memref<1x64xf32, #tpu.memory_space<vmem>>, vector<1x64xf32>
    %c0_4 = arith.constant 0 : index
    %c0_5 = arith.constant 0 : index
    %3 = vector.load %arg3[%c0_4, %c0_5] : memref<1x64xf32, #tpu.memory_space<vmem>>, vector<1x64xf32>
    %cst = arith.constant dense<0.000000e+00> : vector<16xf32>
    %4 = vector.multi_reduction <add>, %1, %cst [1] : vector<16x64xf32> to vector<16xf32>
    %5 = vector.shape_cast %4 : vector<16xf32> to vector<16x1xf32>
    %cst_6 = arith.constant 6.400000e+01 : f32
    %6 = vector.broadcast %cst_6 : f32 to vector<16x1xf32>
    %7 = arith.divf %5, %6 : vector<16x1xf32>
    %8 = vector.broadcast %7 : vector<16x1xf32> to vector<16x64xf32>
    %9 = arith.subf %1, %8 : vector<16x64xf32>
    %10 = arith.mulf %9, %9 : vector<16x64xf32>
    %cst_7 = arith.constant dense<0.000000e+00> : vector<16xf32>
    %11 = vector.multi_reduction <add>, %10, %cst_7 [1] : vector<16x64xf32> to vector<16xf32>
    %12 = vector.shape_cast %11 : vector<16xf32> to vector<16x1xf32>
    %cst_8 = arith.constant 6.400000e+01 : f32
    %13 = vector.broadcast %cst_8 : f32 to vector<16x1xf32>
    %14 = arith.divf %12, %13 : vector<16x1xf32>
    %cst_9 = arith.constant 9.99999974E-6 : f32
    %15 = vector.broadcast %cst_9 : f32 to vector<16x1xf32>
    %16 = arith.addf %14, %15 : vector<16x1xf32>
    %17 = math.rsqrt %16 : vector<16x1xf32>
    %18 = vector.broadcast %17 : vector<16x1xf32> to vector<16x64xf32>
    %19 = arith.mulf %9, %18 : vector<16x64xf32>
    %20 = vector.broadcast %2 : vector<1x64xf32> to vector<16x64xf32>
    %21 = arith.mulf %19, %20 : vector<16x64xf32>
    %22 = vector.broadcast %3 : vector<1x64xf32> to vector<16x64xf32>
    %23 = arith.addf %21, %22 : vector<16x64xf32>
    %c0_10 = arith.constant 0 : index
    %c0_11 = arith.constant 0 : index
    %24 = vector.load %arg4[%c0_10, %c0_11] : memref<64x192xbf16, #tpu.memory_space<vmem>>, vector<64x192xbf16>
    %25 = arith.truncf %23 : vector<16x64xf32> to vector<16x64xbf16>
    %cst_12 = arith.constant dense<0.000000e+00> : vector<16x192xf32>
    %26 = tpu.matmul %25, %24, %cst_12 {dimension_numbers = #tpu.dot_dimension_numbers<[1], [0], [0], [1], [0, 0, 1, 1], [], []>} : vector<16x64xbf16>, vector<64x192xbf16>, vector<16x192xf32> -> vector<16x192xf32>
    %c0_13 = arith.constant 0 : index
    %c0_14 = arith.constant 0 : index
    %27 = vector.load %arg5[%c0_13, %c0_14] : memref<1x192xf32, #tpu.memory_space<vmem>>, vector<1x192xf32>
    %28 = vector.broadcast %27 : vector<1x192xf32> to vector<16x192xf32>
    %29 = arith.addf %26, %28 : vector<16x192xf32>
    %30 = vector.extract_strided_slice %29 {offsets = [0, 0], sizes = [16, 16], strides = [1, 1]} : vector<16x192xf32> to vector<16x16xf32>
    %31 = arith.truncf %30 : vector<16x16xf32> to vector<16x16xbf16>
    %32 = vector.extract_strided_slice %29 {offsets = [0, 64], sizes = [16, 16], strides = [1, 1]} : vector<16x192xf32> to vector<16x16xf32>
    %33 = arith.truncf %32 : vector<16x16xf32> to vector<16x16xbf16>
    %34 = vector.extract_strided_slice %29 {offsets = [0, 128], sizes = [16, 16], strides = [1, 1]} : vector<16x192xf32> to vector<16x16xf32>
    %35 = arith.truncf %34 : vector<16x16xf32> to vector<16x16xbf16>
    %cst_15 = arith.constant dense<0.000000e+00> : vector<16x16xf32>
    %36 = tpu.matmul %31, %33, %cst_15 {dimension_numbers = #tpu.dot_dimension_numbers<[1], [1], [0], [0], [0, 0, 1, 0], [], []>} : vector<16x16xbf16>, vector<16x16xbf16>, vector<16x16xf32> -> vector<16x16xf32>
    %cst_16 = arith.constant 2.500000e-01 : f32
    %37 = vector.broadcast %cst_16 : f32 to vector<16x16xf32>
    %38 = arith.mulf %36, %37 : vector<16x16xf32>
    %c0_17 = arith.constant 0 : index
    %c0_18 = arith.constant 0 : index
    %c0_19 = arith.constant 0 : index
    %39 = vector.load %arg6[%c0_17, %c0_18, %c0_19] : memref<4x16x16xf32, #tpu.memory_space<vmem>>, vector<1x16x16xf32>
    %40 = vector.shape_cast %39 : vector<1x16x16xf32> to vector<16x16xf32>
    %41 = arith.addf %38, %40 : vector<16x16xf32>
    %cst_20 = arith.constant dense<0xFF800000> : vector<16xf32>
    %42 = vector.multi_reduction <maximumf>, %41, %cst_20 [1] : vector<16x16xf32> to vector<16xf32>
    %43 = vector.shape_cast %42 : vector<16xf32> to vector<16x1xf32>
    %44 = vector.broadcast %43 : vector<16x1xf32> to vector<16x16xf32>
    %45 = arith.subf %41, %44 : vector<16x16xf32>
    %46 = math.exp %45 : vector<16x16xf32>
    %cst_21 = arith.constant dense<0.000000e+00> : vector<16xf32>
    %47 = vector.multi_reduction <add>, %46, %cst_21 [1] : vector<16x16xf32> to vector<16xf32>
    %48 = vector.shape_cast %47 : vector<16xf32> to vector<16x1xf32>
    %49 = tpu.reciprocal %48 {approx = true} : vector<16x1xf32> -> vector<16x1xf32>
    %50 = vector.broadcast %49 : vector<16x1xf32> to vector<16x16xf32>
    %51 = arith.mulf %46, %50 : vector<16x16xf32>
    %52 = arith.truncf %51 : vector<16x16xf32> to vector<16x16xbf16>
    %cst_22 = arith.constant dense<0.000000e+00> : vector<16x16xf32>
    %53 = tpu.matmul %52, %35, %cst_22 {dimension_numbers = #tpu.dot_dimension_numbers<[1], [0], [0], [1], [0, 0, 1, 1], [], []>} : vector<16x16xbf16>, vector<16x16xbf16>, vector<16x16xf32> -> vector<16x16xf32>
    %54 = vector.extract_strided_slice %29 {offsets = [0, 16], sizes = [16, 16], strides = [1, 1]} : vector<16x192xf32> to vector<16x16xf32>
    %55 = arith.truncf %54 : vector<16x16xf32> to vector<16x16xbf16>
    %56 = vector.extract_strided_slice %29 {offsets = [0, 80], sizes = [16, 16], strides = [1, 1]} : vector<16x192xf32> to vector<16x16xf32>
    %57 = arith.truncf %56 : vector<16x16xf32> to vector<16x16xbf16>
    %58 = vector.extract_strided_slice %29 {offsets = [0, 144], sizes = [16, 16], strides = [1, 1]} : vector<16x192xf32> to vector<16x16xf32>
    %59 = arith.truncf %58 : vector<16x16xf32> to vector<16x16xbf16>
    %cst_23 = arith.constant dense<0.000000e+00> : vector<16x16xf32>
    %60 = tpu.matmul %55, %57, %cst_23 {dimension_numbers = #tpu.dot_dimension_numbers<[1], [1], [0], [0], [0, 0, 1, 0], [], []>} : vector<16x16xbf16>, vector<16x16xbf16>, vector<16x16xf32> -> vector<16x16xf32>
    %cst_24 = arith.constant 2.500000e-01 : f32
    %61 = vector.broadcast %cst_24 : f32 to vector<16x16xf32>
    %62 = arith.mulf %60, %61 : vector<16x16xf32>
    %c1 = arith.constant 1 : index
    %c0_25 = arith.constant 0 : index
    %c0_26 = arith.constant 0 : index
    %63 = vector.load %arg6[%c1, %c0_25, %c0_26] : memref<4x16x16xf32, #tpu.memory_space<vmem>>, vector<1x16x16xf32>
    %64 = vector.shape_cast %63 : vector<1x16x16xf32> to vector<16x16xf32>
    %65 = arith.addf %62, %64 : vector<16x16xf32>
    %cst_27 = arith.constant dense<0xFF800000> : vector<16xf32>
    %66 = vector.multi_reduction <maximumf>, %65, %cst_27 [1] : vector<16x16xf32> to vector<16xf32>
    %67 = vector.shape_cast %66 : vector<16xf32> to vector<16x1xf32>
    %68 = vector.broadcast %67 : vector<16x1xf32> to vector<16x16xf32>
    %69 = arith.subf %65, %68 : vector<16x16xf32>
    %70 = math.exp %69 : vector<16x16xf32>
    %cst_28 = arith.constant dense<0.000000e+00> : vector<16xf32>
    %71 = vector.multi_reduction <add>, %70, %cst_28 [1] : vector<16x16xf32> to vector<16xf32>
    %72 = vector.shape_cast %71 : vector<16xf32> to vector<16x1xf32>
    %73 = tpu.reciprocal %72 {approx = true} : vector<16x1xf32> -> vector<16x1xf32>
    %74 = vector.broadcast %73 : vector<16x1xf32> to vector<16x16xf32>
    %75 = arith.mulf %70, %74 : vector<16x16xf32>
    %76 = arith.truncf %75 : vector<16x16xf32> to vector<16x16xbf16>
    %cst_29 = arith.constant dense<0.000000e+00> : vector<16x16xf32>
    %77 = tpu.matmul %76, %59, %cst_29 {dimension_numbers = #tpu.dot_dimension_numbers<[1], [0], [0], [1], [0, 0, 1, 1], [], []>} : vector<16x16xbf16>, vector<16x16xbf16>, vector<16x16xf32> -> vector<16x16xf32>
    %78 = vector.extract_strided_slice %29 {offsets = [0, 32], sizes = [16, 16], strides = [1, 1]} : vector<16x192xf32> to vector<16x16xf32>
    %79 = arith.truncf %78 : vector<16x16xf32> to vector<16x16xbf16>
    %80 = vector.extract_strided_slice %29 {offsets = [0, 96], sizes = [16, 16], strides = [1, 1]} : vector<16x192xf32> to vector<16x16xf32>
    %81 = arith.truncf %80 : vector<16x16xf32> to vector<16x16xbf16>
    %82 = vector.extract_strided_slice %29 {offsets = [0, 160], sizes = [16, 16], strides = [1, 1]} : vector<16x192xf32> to vector<16x16xf32>
    %83 = arith.truncf %82 : vector<16x16xf32> to vector<16x16xbf16>
    %cst_30 = arith.constant dense<0.000000e+00> : vector<16x16xf32>
    %84 = tpu.matmul %79, %81, %cst_30 {dimension_numbers = #tpu.dot_dimension_numbers<[1], [1], [0], [0], [0, 0, 1, 0], [], []>} : vector<16x16xbf16>, vector<16x16xbf16>, vector<16x16xf32> -> vector<16x16xf32>
    %cst_31 = arith.constant 2.500000e-01 : f32
    %85 = vector.broadcast %cst_31 : f32 to vector<16x16xf32>
    %86 = arith.mulf %84, %85 : vector<16x16xf32>
    %c2 = arith.constant 2 : index
    %c0_32 = arith.constant 0 : index
    %c0_33 = arith.constant 0 : index
    %87 = vector.load %arg6[%c2, %c0_32, %c0_33] : memref<4x16x16xf32, #tpu.memory_space<vmem>>, vector<1x16x16xf32>
    %88 = vector.shape_cast %87 : vector<1x16x16xf32> to vector<16x16xf32>
    %89 = arith.addf %86, %88 : vector<16x16xf32>
    %cst_34 = arith.constant dense<0xFF800000> : vector<16xf32>
    %90 = vector.multi_reduction <maximumf>, %89, %cst_34 [1] : vector<16x16xf32> to vector<16xf32>
    %91 = vector.shape_cast %90 : vector<16xf32> to vector<16x1xf32>
    %92 = vector.broadcast %91 : vector<16x1xf32> to vector<16x16xf32>
    %93 = arith.subf %89, %92 : vector<16x16xf32>
    %94 = math.exp %93 : vector<16x16xf32>
    %cst_35 = arith.constant dense<0.000000e+00> : vector<16xf32>
    %95 = vector.multi_reduction <add>, %94, %cst_35 [1] : vector<16x16xf32> to vector<16xf32>
    %96 = vector.shape_cast %95 : vector<16xf32> to vector<16x1xf32>
    %97 = tpu.reciprocal %96 {approx = true} : vector<16x1xf32> -> vector<16x1xf32>
    %98 = vector.broadcast %97 : vector<16x1xf32> to vector<16x16xf32>
    %99 = arith.mulf %94, %98 : vector<16x16xf32>
    %100 = arith.truncf %99 : vector<16x16xf32> to vector<16x16xbf16>
    %cst_36 = arith.constant dense<0.000000e+00> : vector<16x16xf32>
    %101 = tpu.matmul %100, %83, %cst_36 {dimension_numbers = #tpu.dot_dimension_numbers<[1], [0], [0], [1], [0, 0, 1, 1], [], []>} : vector<16x16xbf16>, vector<16x16xbf16>, vector<16x16xf32> -> vector<16x16xf32>
    %102 = vector.extract_strided_slice %29 {offsets = [0, 48], sizes = [16, 16], strides = [1, 1]} : vector<16x192xf32> to vector<16x16xf32>
    %103 = arith.truncf %102 : vector<16x16xf32> to vector<16x16xbf16>
    %104 = vector.extract_strided_slice %29 {offsets = [0, 112], sizes = [16, 16], strides = [1, 1]} : vector<16x192xf32> to vector<16x16xf32>
    %105 = arith.truncf %104 : vector<16x16xf32> to vector<16x16xbf16>
    %106 = vector.extract_strided_slice %29 {offsets = [0, 176], sizes = [16, 16], strides = [1, 1]} : vector<16x192xf32> to vector<16x16xf32>
    %107 = arith.truncf %106 : vector<16x16xf32> to vector<16x16xbf16>
    %cst_37 = arith.constant dense<0.000000e+00> : vector<16x16xf32>
    %108 = tpu.matmul %103, %105, %cst_37 {dimension_numbers = #tpu.dot_dimension_numbers<[1], [1], [0], [0], [0, 0, 1, 0], [], []>} : vector<16x16xbf16>, vector<16x16xbf16>, vector<16x16xf32> -> vector<16x16xf32>
    %cst_38 = arith.constant 2.500000e-01 : f32
    %109 = vector.broadcast %cst_38 : f32 to vector<16x16xf32>
    %110 = arith.mulf %108, %109 : vector<16x16xf32>
    %c3 = arith.constant 3 : index
    %c0_39 = arith.constant 0 : index
    %c0_40 = arith.constant 0 : index
    %111 = vector.load %arg6[%c3, %c0_39, %c0_40] : memref<4x16x16xf32, #tpu.memory_space<vmem>>, vector<1x16x16xf32>
    %112 = vector.shape_cast %111 : vector<1x16x16xf32> to vector<16x16xf32>
    %113 = arith.addf %110, %112 : vector<16x16xf32>
    %cst_41 = arith.constant dense<0xFF800000> : vector<16xf32>
    %114 = vector.multi_reduction <maximumf>, %113, %cst_41 [1] : vector<16x16xf32> to vector<16xf32>
    %115 = vector.shape_cast %114 : vector<16xf32> to vector<16x1xf32>
    %116 = vector.broadcast %115 : vector<16x1xf32> to vector<16x16xf32>
    %117 = arith.subf %113, %116 : vector<16x16xf32>
    %118 = math.exp %117 : vector<16x16xf32>
    %cst_42 = arith.constant dense<0.000000e+00> : vector<16xf32>
    %119 = vector.multi_reduction <add>, %118, %cst_42 [1] : vector<16x16xf32> to vector<16xf32>
    %120 = vector.shape_cast %119 : vector<16xf32> to vector<16x1xf32>
    %121 = tpu.reciprocal %120 {approx = true} : vector<16x1xf32> -> vector<16x1xf32>
    %122 = vector.broadcast %121 : vector<16x1xf32> to vector<16x16xf32>
    %123 = arith.mulf %118, %122 : vector<16x16xf32>
    %124 = arith.truncf %123 : vector<16x16xf32> to vector<16x16xbf16>
    %cst_43 = arith.constant dense<0.000000e+00> : vector<16x16xf32>
    %125 = tpu.matmul %124, %107, %cst_43 {dimension_numbers = #tpu.dot_dimension_numbers<[1], [0], [0], [1], [0, 0, 1, 1], [], []>} : vector<16x16xbf16>, vector<16x16xbf16>, vector<16x16xf32> -> vector<16x16xf32>
    %126 = tpu.concatenate %53, %77, %101, %125 in 1 : vector<16x16xf32>, vector<16x16xf32>, vector<16x16xf32>, vector<16x16xf32> -> vector<16x64xf32>
    %c0_44 = arith.constant 0 : index
    %c0_45 = arith.constant 0 : index
    %127 = vector.load %arg7[%c0_44, %c0_45] : memref<64x64xbf16, #tpu.memory_space<vmem>>, vector<64x64xbf16>
    %128 = arith.truncf %126 : vector<16x64xf32> to vector<16x64xbf16>
    %cst_46 = arith.constant dense<0.000000e+00> : vector<16x64xf32>
    %129 = tpu.matmul %128, %127, %cst_46 {dimension_numbers = #tpu.dot_dimension_numbers<[1], [0], [0], [1], [0, 0, 1, 1], [], []>} : vector<16x64xbf16>, vector<64x64xbf16>, vector<16x64xf32> -> vector<16x64xf32>
    %130 = arith.addf %1, %129 : vector<16x64xf32>
    %c0_47 = arith.constant 0 : index
    %c0_48 = arith.constant 0 : index
    %131 = vector.load %arg8[%c0_47, %c0_48] : memref<1x64xf32, #tpu.memory_space<vmem>>, vector<1x64xf32>
    %132 = vector.broadcast %131 : vector<1x64xf32> to vector<16x64xf32>
    %133 = arith.addf %130, %132 : vector<16x64xf32>
    %c0_49 = arith.constant 0 : index
    %c0_50 = arith.constant 0 : index
    %134 = vector.load %arg9[%c0_49, %c0_50] : memref<1x64xf32, #tpu.memory_space<vmem>>, vector<1x64xf32>
    %c0_51 = arith.constant 0 : index
    %c0_52 = arith.constant 0 : index
    %135 = vector.load %arg10[%c0_51, %c0_52] : memref<1x64xf32, #tpu.memory_space<vmem>>, vector<1x64xf32>
    %cst_53 = arith.constant dense<0.000000e+00> : vector<16xf32>
    %136 = vector.multi_reduction <add>, %133, %cst_53 [1] : vector<16x64xf32> to vector<16xf32>
    %137 = vector.shape_cast %136 : vector<16xf32> to vector<16x1xf32>
    %cst_54 = arith.constant 6.400000e+01 : f32
    %138 = vector.broadcast %cst_54 : f32 to vector<16x1xf32>
    %139 = arith.divf %137, %138 : vector<16x1xf32>
    %140 = vector.broadcast %139 : vector<16x1xf32> to vector<16x64xf32>
    %141 = arith.subf %133, %140 : vector<16x64xf32>
    %142 = arith.mulf %141, %141 : vector<16x64xf32>
    %cst_55 = arith.constant dense<0.000000e+00> : vector<16xf32>
    %143 = vector.multi_reduction <add>, %142, %cst_55 [1] : vector<16x64xf32> to vector<16xf32>
    %144 = vector.shape_cast %143 : vector<16xf32> to vector<16x1xf32>
    %cst_56 = arith.constant 6.400000e+01 : f32
    %145 = vector.broadcast %cst_56 : f32 to vector<16x1xf32>
    %146 = arith.divf %144, %145 : vector<16x1xf32>
    %cst_57 = arith.constant 9.99999974E-6 : f32
    %147 = vector.broadcast %cst_57 : f32 to vector<16x1xf32>
    %148 = arith.addf %146, %147 : vector<16x1xf32>
    %149 = math.rsqrt %148 : vector<16x1xf32>
    %150 = vector.broadcast %149 : vector<16x1xf32> to vector<16x64xf32>
    %151 = arith.mulf %141, %150 : vector<16x64xf32>
    %152 = vector.broadcast %134 : vector<1x64xf32> to vector<16x64xf32>
    %153 = arith.mulf %151, %152 : vector<16x64xf32>
    %154 = vector.broadcast %135 : vector<1x64xf32> to vector<16x64xf32>
    %155 = arith.addf %153, %154 : vector<16x64xf32>
    %c0_58 = arith.constant 0 : index
    %c0_59 = arith.constant 0 : index
    %156 = vector.load %arg11[%c0_58, %c0_59] : memref<64x256xbf16, #tpu.memory_space<vmem>>, vector<64x256xbf16>
    %157 = arith.truncf %155 : vector<16x64xf32> to vector<16x64xbf16>
    %cst_60 = arith.constant dense<0.000000e+00> : vector<16x256xf32>
    %158 = tpu.matmul %157, %156, %cst_60 {dimension_numbers = #tpu.dot_dimension_numbers<[1], [0], [0], [1], [0, 0, 1, 1], [], []>} : vector<16x64xbf16>, vector<64x256xbf16>, vector<16x256xf32> -> vector<16x256xf32>
    %c0_61 = arith.constant 0 : index
    %c0_62 = arith.constant 0 : index
    %159 = vector.load %arg12[%c0_61, %c0_62] : memref<1x256xf32, #tpu.memory_space<vmem>>, vector<1x256xf32>
    %160 = vector.broadcast %159 : vector<1x256xf32> to vector<16x256xf32>
    %161 = arith.addf %158, %160 : vector<16x256xf32>
    %cst_63 = arith.constant 5.000000e-01 : f32
    %162 = vector.broadcast %cst_63 : f32 to vector<16x256xf32>
    %163 = arith.mulf %162, %161 : vector<16x256xf32>
    %cst_64 = arith.constant 4.471500e-02 : f32
    %164 = vector.broadcast %cst_64 : f32 to vector<16x256xf32>
    %165 = arith.mulf %164, %161 : vector<16x256xf32>
    %166 = arith.mulf %165, %161 : vector<16x256xf32>
    %167 = arith.mulf %166, %161 : vector<16x256xf32>
    %168 = arith.addf %161, %167 : vector<16x256xf32>
    %cst_65 = arith.constant 0.797884583 : f32
    %169 = vector.broadcast %cst_65 : f32 to vector<16x256xf32>
    %170 = arith.mulf %169, %168 : vector<16x256xf32>
    %171 = math.tanh %170 : vector<16x256xf32>
    %cst_66 = arith.constant 1.000000e+00 : f32
    %172 = vector.broadcast %cst_66 : f32 to vector<16x256xf32>
    %173 = arith.addf %172, %171 : vector<16x256xf32>
    %174 = arith.mulf %163, %173 : vector<16x256xf32>
    %c0_67 = arith.constant 0 : index
    %c0_68 = arith.constant 0 : index
    %175 = vector.load %arg13[%c0_67, %c0_68] : memref<256x64xbf16, #tpu.memory_space<vmem>>, vector<256x64xbf16>
    %176 = arith.truncf %174 : vector<16x256xf32> to vector<16x256xbf16>
    %cst_69 = arith.constant dense<0.000000e+00> : vector<16x64xf32>
    %177 = tpu.matmul %176, %175, %cst_69 {dimension_numbers = #tpu.dot_dimension_numbers<[1], [0], [0], [1], [0, 0, 1, 1], [], []>} : vector<16x256xbf16>, vector<256x64xbf16>, vector<16x64xf32> -> vector<16x64xf32>
    %c0_70 = arith.constant 0 : index
    %c0_71 = arith.constant 0 : index
    %178 = vector.load %arg14[%c0_70, %c0_71] : memref<1x64xf32, #tpu.memory_space<vmem>>, vector<1x64xf32>
    %179 = vector.broadcast %178 : vector<1x64xf32> to vector<16x64xf32>
    %180 = arith.addf %177, %179 : vector<16x64xf32>
    %181 = arith.addf %133, %180 : vector<16x64xf32>
    %c0_72 = arith.constant 0 : index
    %c0_73 = arith.constant 0 : index
    %c0_74 = arith.constant 0 : index
    %182 = vector.load %arg15[%c0_72, %c0_73, %c0_74] : memref<1x16x64xf32, #tpu.memory_space<vmem>>, vector<1x16x64xf32>
    %183 = vector.shape_cast %182 : vector<1x16x64xf32> to vector<16x64xf32>
    %184 = vector.shape_cast %181 : vector<16x64xf32> to vector<1x16x64xf32>
    tpu.vector_store %arg15[%c0_72, %c0_73, %c0_74], %184 {strides = array<i32>} : memref<1x16x64xf32, #tpu.memory_space<vmem>>, vector<1x16x64xf32>,
    return
  }
  func.func @transform_0(%arg0: i32) -> (i32, i32, i32) {
    %c0_i32 = arith.constant 0 : i32
    %c0_i32_0 = arith.constant 0 : i32
    %c0_i32_1 = arith.constant 0 : i32
    return %arg0, %c0_i32, %c0_i32_0 : i32, i32, i32
  }
  func.func @transform_1(%arg0: i32) -> (i32, i32) {
    %c0_i32 = arith.constant 0 : i32
    %c0_i32_0 = arith.constant 0 : i32
    %c0_i32_1 = arith.constant 0 : i32
    return %c0_i32, %c0_i32_0 : i32, i32
  }
  func.func @transform_2(%arg0: i32) -> (i32, i32) {
    %c0_i32 = arith.constant 0 : i32
    %c0_i32_0 = arith.constant 0 : i32
    %c0_i32_1 = arith.constant 0 : i32
    return %c0_i32, %c0_i32_0 : i32, i32
  }
  func.func @transform_3(%arg0: i32) -> (i32, i32) {
    %c0_i32 = arith.constant 0 : i32
    %c0_i32_0 = arith.constant 0 : i32
    %c0_i32_1 = arith.constant 0 : i32
    return %c0_i32, %c0_i32_0 : i32, i32
  }
  func.func @transform_4(%arg0: i32) -> (i32, i32) {
    %c0_i32 = arith.constant 0 : i32
    %c0_i32_0 = arith.constant 0 : i32
    %c0_i32_1 = arith.constant 0 : i32
    return %c0_i32, %c0_i32_0 : i32, i32
  }
  func.func @transform_5(%arg0: i32) -> (i32, i32, i32) {
    %c0_i32 = arith.constant 0 : i32
    %c0_i32_0 = arith.constant 0 : i32
    %c0_i32_1 = arith.constant 0 : i32
    %c0_i32_2 = arith.constant 0 : i32
    return %c0_i32, %c0_i32_0, %c0_i32_1 : i32, i32, i32
  }
  func.func @transform_6(%arg0: i32) -> (i32, i32) {
    %c0_i32 = arith.constant 0 : i32
    %c0_i32_0 = arith.constant 0 : i32
    %c0_i32_1 = arith.constant 0 : i32
    return %c0_i32, %c0_i32_0 : i32, i32
  }
  func.func @transform_7(%arg0: i32) -> (i32, i32) {
    %c0_i32 = arith.constant 0 : i32
    %c0_i32_0 = arith.constant 0 : i32
    %c0_i32_1 = arith.constant 0 : i32
    return %c0_i32, %c0_i32_0 : i32, i32
  }
  func.func @transform_8(%arg0: i32) -> (i32, i32) {
    %c0_i32 = arith.constant 0 : i32
    %c0_i32_0 = arith.constant 0 : i32
    %c0_i32_1 = arith.constant 0 : i32
    return %c0_i32, %c0_i32_0 : i32, i32
  }
  func.func @transform_9(%arg0: i32) -> (i32, i32) {
    %c0_i32 = arith.constant 0 : i32
    %c0_i32_0 = arith.constant 0 : i32
    %c0_i32_1 = arith.constant 0 : i32
    return %c0_i32, %c0_i32_0 : i32, i32
  }
  func.func @transform_10(%arg0: i32) -> (i32, i32) {
    %c0_i32 = arith.constant 0 : i32
    %c0_i32_0 = arith.constant 0 : i32
    %c0_i32_1 = arith.constant 0 : i32
    return %c0_i32, %c0_i32_0 : i32, i32
  }
  func.func @transform_11(%arg0: i32) -> (i32, i32) {
    %c0_i32 = arith.constant 0 : i32
    %c0_i32_0 = arith.constant 0 : i32
    %c0_i32_1 = arith.constant 0 : i32
    return %c0_i32, %c0_i32_0 : i32, i32
  }
  func.func @transform_12(%arg0: i32) -> (i32, i32) {
    %c0_i32 = arith.constant 0 : i32
    %c0_i32_0 = arith.constant 0 : i32
    %c0_i32_1 = arith.constant 0 : i32
    return %c0_i32, %c0_i32_0 : i32, i32
  }
  func.func @transform_13(%arg0: i32) -> (i32, i32) {
    %c0_i32 = arith.constant 0 : i32
    %c0_i32_0 = arith.constant 0 : i32
    %c0_i32_1 = arith.constant 0 : i32
    return %c0_i32, %c0_i32_0 : i32, i32
  }
  func.func @transform_14(%arg0: i32) -> (i32, i32, i32) {
    %c0_i32 = arith.constant 0 : i32
    %c0_i32_0 = arith.constant 0 : i32
    %c0_i32_1 = arith.constant 0 : i32
    return %arg0, %c0_i32, %c0_i32_0 : i32, i32, i32
  }
}

module attributes {stable_mosaic.version = 11 : i64} {
  func.func @_head_kernel(%arg0: i32, %arg1: memref<2x16x64xf32, #tpu.memory_space<vmem>>, %arg2: memref<1x64xf32, #tpu.memory_space<vmem>>, %arg3: memref<1x64xf32, #tpu.memory_space<vmem>>, %arg4: memref<64x32xbf16, #tpu.memory_space<vmem>>, %arg5: memref<1x32xf32, #tpu.memory_space<vmem>>, %arg6: memref<1x1xf32, #tpu.memory_space<vmem>>) attributes {dimension_semantics = [#tpu.dimension_semantics<arbitrary>], iteration_bounds = array<i64: 1>, scalar_prefetch = 0 : i64, scratch_operands = 0 : i64, tpu.core_type = #tpu.core_type<tc>, window_params = [{pipeline_mode = #tpu.pipeline_mode<synchronous>, transform_indices = @transform_0, window_bounds = array<i64: 2, 16, 64>}, {pipeline_mode = #tpu.pipeline_mode<synchronous>, transform_indices = @transform_1, window_bounds = array<i64: 1, 64>}, {pipeline_mode = #tpu.pipeline_mode<synchronous>, transform_indices = @transform_2, window_bounds = array<i64: 1, 64>}, {pipeline_mode = #tpu.pipeline_mode<synchronous>, transform_indices = @transform_3, window_bounds = array<i64: 64, 32>}, {pipeline_mode = #tpu.pipeline_mode<synchronous>, transform_indices = @transform_4, window_bounds = array<i64: 1, 32>}, {pipeline_mode = #tpu.pipeline_mode<synchronous>, transform_indices = @transform_5, window_bounds = array<i64: 1, 1>}]} {
    %c0 = arith.constant 0 : index
    %c0_0 = arith.constant 0 : index
    %c0_1 = arith.constant 0 : index
    %0 = vector.load %arg1[%c0, %c0_0, %c0_1] : memref<2x16x64xf32, #tpu.memory_space<vmem>>, vector<1x16x64xf32>
    %1 = vector.shape_cast %0 : vector<1x16x64xf32> to vector<16x64xf32>
    %c0_2 = arith.constant 0 : index
    %c0_3 = arith.constant 0 : index
    %2 = vector.load %arg2[%c0_2, %c0_3] : memref<1x64xf32, #tpu.memory_space<vmem>>, vector<1x64xf32>
    %c0_4 = arith.constant 0 : index
    %c0_5 = arith.constant 0 : index
    %3 = vector.load %arg3[%c0_4, %c0_5] : memref<1x64xf32, #tpu.memory_space<vmem>>, vector<1x64xf32>
    %cst = arith.constant dense<0.000000e+00> : vector<16xf32>
    %4 = vector.multi_reduction <add>, %1, %cst [1] : vector<16x64xf32> to vector<16xf32>
    %5 = vector.shape_cast %4 : vector<16xf32> to vector<16x1xf32>
    %cst_6 = arith.constant 6.400000e+01 : f32
    %6 = vector.broadcast %cst_6 : f32 to vector<16x1xf32>
    %7 = arith.divf %5, %6 : vector<16x1xf32>
    %8 = vector.broadcast %7 : vector<16x1xf32> to vector<16x64xf32>
    %9 = arith.subf %1, %8 : vector<16x64xf32>
    %10 = arith.mulf %9, %9 : vector<16x64xf32>
    %cst_7 = arith.constant dense<0.000000e+00> : vector<16xf32>
    %11 = vector.multi_reduction <add>, %10, %cst_7 [1] : vector<16x64xf32> to vector<16xf32>
    %12 = vector.shape_cast %11 : vector<16xf32> to vector<16x1xf32>
    %cst_8 = arith.constant 6.400000e+01 : f32
    %13 = vector.broadcast %cst_8 : f32 to vector<16x1xf32>
    %14 = arith.divf %12, %13 : vector<16x1xf32>
    %cst_9 = arith.constant 9.99999974E-6 : f32
    %15 = vector.broadcast %cst_9 : f32 to vector<16x1xf32>
    %16 = arith.addf %14, %15 : vector<16x1xf32>
    %17 = math.rsqrt %16 : vector<16x1xf32>
    %18 = vector.broadcast %17 : vector<16x1xf32> to vector<16x64xf32>
    %19 = arith.mulf %9, %18 : vector<16x64xf32>
    %20 = vector.broadcast %2 : vector<1x64xf32> to vector<16x64xf32>
    %21 = arith.mulf %19, %20 : vector<16x64xf32>
    %22 = vector.broadcast %3 : vector<1x64xf32> to vector<16x64xf32>
    %23 = arith.addf %21, %22 : vector<16x64xf32>
    %cst_10 = arith.constant dense<0.000000e+00> : vector<64xf32>
    %24 = vector.multi_reduction <add>, %23, %cst_10 [0] : vector<16x64xf32> to vector<64xf32>
    %25 = vector.shape_cast %24 : vector<64xf32> to vector<1x64xf32>
    %cst_11 = arith.constant 1.600000e+01 : f32
    %26 = vector.broadcast %cst_11 : f32 to vector<1x64xf32>
    %27 = arith.divf %25, %26 : vector<1x64xf32>
    %c0_12 = arith.constant 0 : index
    %c0_13 = arith.constant 0 : index
    %28 = vector.load %arg4[%c0_12, %c0_13] : memref<64x32xbf16, #tpu.memory_space<vmem>>, vector<64x32xbf16>
    %29 = arith.truncf %27 : vector<1x64xf32> to vector<1x64xbf16>
    %cst_14 = arith.constant dense<0.000000e+00> : vector<1x32xf32>
    %30 = tpu.matmul %29, %28, %cst_14 {dimension_numbers = #tpu.dot_dimension_numbers<[1], [0], [0], [1], [0, 0, 1, 1], [], []>} : vector<1x64xbf16>, vector<64x32xbf16>, vector<1x32xf32> -> vector<1x32xf32>
    %c0_15 = arith.constant 0 : index
    %c0_16 = arith.constant 0 : index
    %31 = vector.load %arg5[%c0_15, %c0_16] : memref<1x32xf32, #tpu.memory_space<vmem>>, vector<1x32xf32>
    %32 = arith.addf %30, %31 : vector<1x32xf32>
    %c1 = arith.constant 1 : index
    %c0_17 = arith.constant 0 : index
    %c0_18 = arith.constant 0 : index
    %33 = vector.load %arg1[%c1, %c0_17, %c0_18] : memref<2x16x64xf32, #tpu.memory_space<vmem>>, vector<1x16x64xf32>
    %34 = vector.shape_cast %33 : vector<1x16x64xf32> to vector<16x64xf32>
    %c0_19 = arith.constant 0 : index
    %c0_20 = arith.constant 0 : index
    %35 = vector.load %arg2[%c0_19, %c0_20] : memref<1x64xf32, #tpu.memory_space<vmem>>, vector<1x64xf32>
    %c0_21 = arith.constant 0 : index
    %c0_22 = arith.constant 0 : index
    %36 = vector.load %arg3[%c0_21, %c0_22] : memref<1x64xf32, #tpu.memory_space<vmem>>, vector<1x64xf32>
    %cst_23 = arith.constant dense<0.000000e+00> : vector<16xf32>
    %37 = vector.multi_reduction <add>, %34, %cst_23 [1] : vector<16x64xf32> to vector<16xf32>
    %38 = vector.shape_cast %37 : vector<16xf32> to vector<16x1xf32>
    %cst_24 = arith.constant 6.400000e+01 : f32
    %39 = vector.broadcast %cst_24 : f32 to vector<16x1xf32>
    %40 = arith.divf %38, %39 : vector<16x1xf32>
    %41 = vector.broadcast %40 : vector<16x1xf32> to vector<16x64xf32>
    %42 = arith.subf %34, %41 : vector<16x64xf32>
    %43 = arith.mulf %42, %42 : vector<16x64xf32>
    %cst_25 = arith.constant dense<0.000000e+00> : vector<16xf32>
    %44 = vector.multi_reduction <add>, %43, %cst_25 [1] : vector<16x64xf32> to vector<16xf32>
    %45 = vector.shape_cast %44 : vector<16xf32> to vector<16x1xf32>
    %cst_26 = arith.constant 6.400000e+01 : f32
    %46 = vector.broadcast %cst_26 : f32 to vector<16x1xf32>
    %47 = arith.divf %45, %46 : vector<16x1xf32>
    %cst_27 = arith.constant 9.99999974E-6 : f32
    %48 = vector.broadcast %cst_27 : f32 to vector<16x1xf32>
    %49 = arith.addf %47, %48 : vector<16x1xf32>
    %50 = math.rsqrt %49 : vector<16x1xf32>
    %51 = vector.broadcast %50 : vector<16x1xf32> to vector<16x64xf32>
    %52 = arith.mulf %42, %51 : vector<16x64xf32>
    %53 = vector.broadcast %35 : vector<1x64xf32> to vector<16x64xf32>
    %54 = arith.mulf %52, %53 : vector<16x64xf32>
    %55 = vector.broadcast %36 : vector<1x64xf32> to vector<16x64xf32>
    %56 = arith.addf %54, %55 : vector<16x64xf32>
    %cst_28 = arith.constant dense<0.000000e+00> : vector<64xf32>
    %57 = vector.multi_reduction <add>, %56, %cst_28 [0] : vector<16x64xf32> to vector<64xf32>
    %58 = vector.shape_cast %57 : vector<64xf32> to vector<1x64xf32>
    %cst_29 = arith.constant 1.600000e+01 : f32
    %59 = vector.broadcast %cst_29 : f32 to vector<1x64xf32>
    %60 = arith.divf %58, %59 : vector<1x64xf32>
    %c0_30 = arith.constant 0 : index
    %c0_31 = arith.constant 0 : index
    %61 = vector.load %arg4[%c0_30, %c0_31] : memref<64x32xbf16, #tpu.memory_space<vmem>>, vector<64x32xbf16>
    %62 = arith.truncf %60 : vector<1x64xf32> to vector<1x64xbf16>
    %cst_32 = arith.constant dense<0.000000e+00> : vector<1x32xf32>
    %63 = tpu.matmul %62, %61, %cst_32 {dimension_numbers = #tpu.dot_dimension_numbers<[1], [0], [0], [1], [0, 0, 1, 1], [], []>} : vector<1x64xbf16>, vector<64x32xbf16>, vector<1x32xf32> -> vector<1x32xf32>
    %c0_33 = arith.constant 0 : index
    %c0_34 = arith.constant 0 : index
    %64 = vector.load %arg5[%c0_33, %c0_34] : memref<1x32xf32, #tpu.memory_space<vmem>>, vector<1x32xf32>
    %65 = arith.addf %63, %64 : vector<1x32xf32>
    %66 = arith.mulf %32, %65 : vector<1x32xf32>
    %cst_35 = arith.constant dense<0.000000e+00> : vector<1xf32>
    %67 = vector.multi_reduction <add>, %66, %cst_35 [1] : vector<1x32xf32> to vector<1xf32>
    %68 = vector.shape_cast %67 : vector<1xf32> to vector<1x1xf32>
    %c0_36 = arith.constant 0 : index
    %c0_37 = arith.constant 0 : index
    %69 = vector.load %arg6[%c0_36, %c0_37] : memref<1x1xf32, #tpu.memory_space<vmem>>, vector<1x1xf32>
    tpu.vector_store %arg6[%c0_36, %c0_37], %68 {strides = array<i32>} : memref<1x1xf32, #tpu.memory_space<vmem>>, vector<1x1xf32>,
    return
  }
  func.func @transform_0(%arg0: i32) -> (i32, i32, i32) {
    %c0_i32 = arith.constant 0 : i32
    %c0_i32_0 = arith.constant 0 : i32
    %c0_i32_1 = arith.constant 0 : i32
    %c0_i32_2 = arith.constant 0 : i32
    return %c0_i32, %c0_i32_0, %c0_i32_1 : i32, i32, i32
  }
  func.func @transform_1(%arg0: i32) -> (i32, i32) {
    %c0_i32 = arith.constant 0 : i32
    %c0_i32_0 = arith.constant 0 : i32
    %c0_i32_1 = arith.constant 0 : i32
    return %c0_i32, %c0_i32_0 : i32, i32
  }
  func.func @transform_2(%arg0: i32) -> (i32, i32) {
    %c0_i32 = arith.constant 0 : i32
    %c0_i32_0 = arith.constant 0 : i32
    %c0_i32_1 = arith.constant 0 : i32
    return %c0_i32, %c0_i32_0 : i32, i32
  }
  func.func @transform_3(%arg0: i32) -> (i32, i32) {
    %c0_i32 = arith.constant 0 : i32
    %c0_i32_0 = arith.constant 0 : i32
    %c0_i32_1 = arith.constant 0 : i32
    return %c0_i32, %c0_i32_0 : i32, i32
  }
  func.func @transform_4(%arg0: i32) -> (i32, i32) {
    %c0_i32 = arith.constant 0 : i32
    %c0_i32_0 = arith.constant 0 : i32
    %c0_i32_1 = arith.constant 0 : i32
    return %c0_i32, %c0_i32_0 : i32, i32
  }
  func.func @transform_5(%arg0: i32) -> (i32, i32) {
    %c0_i32 = arith.constant 0 : i32
    %c0_i32_0 = arith.constant 0 : i32
    %c0_i32_1 = arith.constant 0 : i32
    return %c0_i32, %c0_i32_0 : i32, i32
  }
}

</mosaic_0001>

<llo_original>
// kernel: swin_transformer_forward.7
$region0: #{swin_transformer_forward.7}
  #allocation0 [shape = 'u32[]', space=smem, size = 0x4, offset = 0x4, fixed_abs, tag = 'smem constant byte address 0x4 - core index']
  #allocation1 [shape = 'u32[144,128]{1,0:T(1,128)}', space=vmem, size = 0x12000, scoped, tag = 'internal scratch']
  %s0 = inlined_call_operand.vmem [shape: f32[2,64,48], index: 0, kind: input, shape index: {}]
  %s1 = inlined_call_operand.vmem [shape: bf16[48,32], index: 1, kind: input, shape index: {}]
  %s2 = inlined_call_operand.vmem [shape: f32[1,32], index: 2, kind: input, shape index: {}]
  %s3 = inlined_call_operand.vmem [shape: f32[1,32], index: 3, kind: input, shape index: {}]
  %s4 = inlined_call_operand.vmem [shape: f32[1,32], index: 4, kind: input, shape index: {}]
  %s5 = inlined_call_operand.vmem [shape: f32[2,64,32], index: 5, kind: output, shape index: {}]
  %s6 = sld [smem:[#allocation0]]
  $region53: #{swin_transformer_forward.7} parent=0
    _
  %s8 = ssub.s32 1, %s6
  %s9 = scalar_select 0, %s8, %s6
  loop: start=0, step=1, limit=4
  $region2: #{swin_transformer_forward.7} parent=0 // loop_pre_header
    _
  $region3: #{swin_transformer_forward.7} parent=0 // loop_header
    %s11 = sphi 0, %s15
    %p12 = scmp.ge.s32.totalorder %s11, 4
    %s21 = sphi 0, %s23
    %s24 = sphi 0, %s21
    %s25 = sphi 0, %s24
    %s41 = sphi 0, %s25
    %s45 = sphi 0, %s45
    %s47 = sphi 0, %s45
    %s48 = sphi 0, %s47
    %s62 = sphi 0, %s48
    %s66 = sphi 0, %s66
    %s68 = sphi 0, %s66
    %s69 = sphi 0, %s68
    %s83 = sphi 0, %s69
    %s87 = sphi 0, %s87
    %s89 = sphi 0, %s87
    %s90 = sphi 0, %s89
    %s104 = sphi 0, %s90
    %s108 = sphi 0, %s108
    %s110 = sphi 0, %s108
    %s111 = sphi 0, %s110
    %s125 = sphi 0, %s111
    %s131 = sphi 0, %s133
    %s134 = sphi 0, %s131
    %s135 = sphi 0, %s134
    %s151 = sphi 0, %s135
  $region4: #{swin_transformer_forward.7} parent=0 // loop_header_branch
    %14 = sbr.rel (%p12) target = $region8
  $region5: #{swin_transformer_forward.7} parent=0 // loop_body
    %s16 = ssub.s32 %s11, 1
    %s17 = ssub.s32 %s11, 2
    %s18 = sadd.s32 %s11, 1
    %s19 = ssub.s32 %s11, %s18
    %p20 = scmp.eq.s32.totalorder %s19, 0
    %s22 = sadd.s32 %s21, 1
    %s23 = scalar_select %p20, %s21, %s22
    %p26 = pneg %p20
    %p27 = scmp.eq.s32.totalorder %s11, 1
    %p28 = por %p26, %p27
    %p29 = scmp.ne.s32.totalorder %s21, %s24
    %p30 = scmp.eq.s32.totalorder %s11, 0
    %p31 = por %p29, %p30
    %p32 = scmp.ne.s32.totalorder %s21, %s24
    %p33 = scmp.eq.s32.totalorder %s16, 1
    %p34 = por %p32, %p33
    %p35 = scmp.ne.s32.totalorder %s24, %s25
    %p36 = scmp.eq.s32.totalorder %s16, 0
    %p37 = por %p35, %p36
    %p38 = scmp.ne.s32.totalorder %s24, %s25
    %p39 = scmp.eq.s32.totalorder %s17, 1
    %p40 = por %p38, %p39
    %p42 = scmp.ne.s32.totalorder %s25, %s41
    %p43 = scmp.eq.s32.totalorder %s17, 0
    %p44 = por %p42, %p43
    %s46 = sadd.s32 %s45, 1
    %p49 = scmp.eq.s32.totalorder %s11, 1
    %p50 = scmp.ne.s32.totalorder %s45, %s47
    %p51 = scmp.eq.s32.totalorder %s11, 0
    %p52 = por %p50, %p51
    %p53 = scmp.ne.s32.totalorder %s45, %s47
    %p54 = scmp.eq.s32.totalorder %s16, 1
    %p55 = por %p53, %p54
    %p56 = scmp.ne.s32.totalorder %s47, %s48
    %p57 = scmp.eq.s32.totalorder %s16, 0
    %p58 = por %p56, %p57
    %p59 = scmp.ne.s32.totalorder %s47, %s48
    %p60 = scmp.eq.s32.totalorder %s17, 1
    %p61 = por %p59, %p60
    %p63 = scmp.ne.s32.totalorder %s48, %s62
    %p64 = scmp.eq.s32.totalorder %s17, 0
    %p65 = por %p63, %p64
    %s67 = sadd.s32 %s66, 1
    %p70 = scmp.eq.s32.totalorder %s11, 1
    %p71 = scmp.ne.s32.totalorder %s66, %s68
    %p72 = scmp.eq.s32.totalorder %s11, 0
    %p73 = por %p71, %p72
    %p74 = scmp.ne.s32.totalorder %s66, %s68
    %p75 = scmp.eq.s32.totalorder %s16, 1
    %p76 = por %p74, %p75
    %p77 = scmp.ne.s32.totalorder %s68, %s69
    %p78 = scmp.eq.s32.totalorder %s16, 0
    %p79 = por %p77, %p78
    %p80 = scmp.ne.s32.totalorder %s68, %s69
    %p81 = scmp.eq.s32.totalorder %s17, 1
    %p82 = por %p80, %p81
    %p84 = scmp.ne.s32.totalorder %s69, %s83
    %p85 = scmp.eq.s32.totalorder %s17, 0
    %p86 = por %p84, %p85
    %s88 = sadd.s32 %s87, 1
    %p91 = scmp.eq.s32.totalorder %s11, 1
    %p92 = scmp.ne.s32.totalorder %s87, %s89
    %p93 = scmp.eq.s32.totalorder %s11, 0
    %p94 = por %p92, %p93
    %p95 = scmp.ne.s32.totalorder %s87, %s89
    %p96 = scmp.eq.s32.totalorder %s16, 1
    %p97 = por %p95, %p96
    %p98 = scmp.ne.s32.totalorder %s89, %s90
    %p99 = scmp.eq.s32.totalorder %s16, 0
    %p100 = por %p98, %p99
    %p101 = scmp.ne.s32.totalorder %s89, %s90
    %p102 = scmp.eq.s32.totalorder %s17, 1
    %p103 = por %p101, %p102
    %p105 = scmp.ne.s32.totalorder %s90, %s104
    %p106 = scmp.eq.s32.totalorder %s17, 0
    %p107 = por %p105, %p106
    %s109 = sadd.s32 %s108, 1
    %p112 = scmp.eq.s32.totalorder %s11, 1
    %p113 = scmp.ne.s32.totalorder %s108, %s110
    %p114 = scmp.eq.s32.totalorder %s11, 0
    %p115 = por %p113, %p114
    %p116 = scmp.ne.s32.totalorder %s108, %s110
    %p117 = scmp.eq.s32.totalorder %s16, 1
    %p118 = por %p116, %p117
    %p119 = scmp.ne.s32.totalorder %s110, %s111
    %p120 = scmp.eq.s32.totalorder %s16, 0
    %p121 = por %p119, %p120
    %p122 = scmp.ne.s32.totalorder %s110, %s111
    %p123 = scmp.eq.s32.totalorder %s17, 1
    %p124 = por %p122, %p123
    %p126 = scmp.ne.s32.totalorder %s111, %s125
    %p127 = scmp.eq.s32.totalorder %s17, 0
    %p128 = por %p126, %p127
    %s129 = ssub.s32 %s11, %s18
    %p130 = scmp.eq.s32.totalorder %s129, 0
    %s132 = sadd.s32 %s131, 1
    %s133 = scalar_select %p130, %s131, %s132
    %p136 = pneg %p130
    %p137 = scmp.eq.s32.totalorder %s11, 1
    %p138 = por %p136, %p137
    %p139 = scmp.ne.s32.totalorder %s131, %s134
    %p140 = scmp.eq.s32.totalorder %s11, 0
    %p141 = por %p139, %p140
    %p142 = scmp.ne.s32.totalorder %s131, %s134
    %p143 = scmp.eq.s32.totalorder %s16, 1
    %p144 = por %p142, %p143
    %p145 = scmp.ne.s32.totalorder %s134, %s135
    %p146 = scmp.eq.s32.totalorder %s16, 0
    %p147 = por %p145, %p146
    %p148 = scmp.ne.s32.totalorder %s134, %s135
    %p149 = scmp.eq.s32.totalorder %s17, 1
    %p150 = por %p148, %p149
    %p152 = scmp.ne.s32.totalorder %s135, %s151
    %p153 = scmp.eq.s32.totalorder %s17, 0
    %p154 = por %p152, %p153
    %p155 = scmp.le.s32.totalorder 1, %s11
    %p156 = scmp.lt.s32.totalorder %s11, 3
    %p157 = pnand %p155, %p156
    %p158 = pneg %p157
    // Predicated region
    $region9: #{swin_transformer_forward.7} parent=5 // pred_check
      _
    $region10: #{swin_transformer_forward.7} parent=5 // pred_check_branch
      %160 = sbr.rel (%p157) target = $region12
    $region11: #{swin_transformer_forward.7} parent=5 // pred_region
      %s161 = ssub.s32 %s11, 1
      // Predicated region
      $region13: #{swin_transformer_forward.7} parent=11 // pred_check
        %p162 = pneg %p58
      $region14: #{swin_transformer_forward.7} parent=11 // pred_check_branch
        %164 = sbr.rel (%p162) target = $region16
      $region15: #{swin_transformer_forward.7} parent=11 // pred_region
        _
      $region16: #{swin_transformer_forward.7} parent=11 // pred_fallthru
        _
      // Predicated region
      $region17: #{swin_transformer_forward.7} parent=11 // pred_check
        %p165 = pneg %p79
      $region18: #{swin_transformer_forward.7} parent=11 // pred_check_branch
        %167 = sbr.rel (%p165) target = $region20
      $region19: #{swin_transformer_forward.7} parent=11 // pred_region
        _
      $region20: #{swin_transformer_forward.7} parent=11 // pred_fallthru
        _
      // Predicated region
      $region21: #{swin_transformer_forward.7} parent=11 // pred_check
        %p168 = pneg %p100
      $region22: #{swin_transformer_forward.7} parent=11 // pred_check_branch
        %170 = sbr.rel (%p168) target = $region24
      $region23: #{swin_transformer_forward.7} parent=11 // pred_region
        _
      $region24: #{swin_transformer_forward.7} parent=11 // pred_fallthru
        _
      // Predicated region
      $region25: #{swin_transformer_forward.7} parent=11 // pred_check
        %p171 = pneg %p121
      $region26: #{swin_transformer_forward.7} parent=11 // pred_check_branch
        %173 = sbr.rel (%p171) target = $region28
      $region27: #{swin_transformer_forward.7} parent=11 // pred_region
        _
      $region28: #{swin_transformer_forward.7} parent=11 // pred_fallthru
        _
    $region12: #{swin_transformer_forward.7} parent=5 // pred_fallthru
      _
    %p174 = scmp.lt.s32.totalorder %s11, 2
    // Predicated region
    $region29: #{swin_transformer_forward.7} parent=5 // pred_check
      %p175 = pneg %p174
    $region30: #{swin_transformer_forward.7} parent=5 // pred_check_branch
      %177 = sbr.rel (%p175) target = $region32
    $region31: #{swin_transformer_forward.7} parent=5 // pred_region
      // Predicated region
      $region33: #{swin_transformer_forward.7} parent=31 // pred_check
        %p178 = pneg %p31
      $region34: #{swin_transformer_forward.7} parent=31 // pred_check_branch
        %180 = sbr.rel (%p178) target = $region36
      $region35: #{swin_transformer_forward.7} parent=31 // pred_region
        %p181 = scmp.lt.s32.totalorder %s11, 1
        %s182 = scalar_select %p181, %s11, 1
        %s183 = smul.addr %s182, 8
        %s184 = smul.addr %s183, 8
        %s185 = scalar_lea.vmem %s0, %s184
      $region36: #{swin_transformer_forward.7} parent=31 // pred_fallthru
        _
    $region32: #{swin_transformer_forward.7} parent=5 // pred_fallthru
      _
    %p186 = scmp.le.s32.totalorder 1, %s11
    %p187 = scmp.lt.s32.totalorder %s11, 3
    %p188 = pnand %p186, %p187
    %p189 = pneg %p188
    // Predicated region
    $region37: #{swin_transformer_forward.7} parent=5 // pred_check
      _
    $region38: #{swin_transformer_forward.7} parent=5 // pred_check_branch
      %191 = sbr.rel (%p188) target = $region40
    $region39: #{swin_transformer_forward.7} parent=5 // pred_region
      %s192 = ssub.s32 %s11, 1
      %p193 = scmp.lt.s32.totalorder %s16, 1
      %s194 = scalar_select %p193, %s16, 1
      %s195 = smul.addr %s194, 8
      %s196 = smul.addr %s195, 8
      %s197 = scalar_lea.vmem %s0, %s196
      %p198 = pneg %p37
      %p199 = pneg %p34
      %p200 = pneg %p58
      %p201 = pneg %p55
      %p202 = pneg %p79
      %p203 = pneg %p76
      %p204 = pneg %p100
      %p205 = pneg %p97
      %p206 = pneg %p121
      %p207 = pneg %p118
      %p208 = pneg %p147
      %p209 = pneg %p144
      %p210 = scmp.lt.s32.totalorder %s16, 1
      %s211 = scalar_select %p210, %s16, 1
      %s212 = smul.addr %s211, 8
      %s213 = smul.addr %s212, 8
      %s214 = scalar_lea.vmem %s5, %s213
      %p215 = scmp.lt.s32.totalorder %s16, 1
      %s216 = scalar_select %p215, %s16, 1
      %s217 = smul.addr %s216, 8
      %s218 = smul.addr %s217, 8
      %s219 = scalar_lea.vmem %s0, %s218
      %p220 = scmp.lt.s32.totalorder %s16, 1
      %s221 = scalar_select %p220, %s16, 1
      %s222 = smul.addr %s221, 8
      %s223 = smul.addr %s222, 8
      %s224 = scalar_lea.vmem %s5, %s223
      %v226 = vld [vmem:[%s219] sm:$0xff]
      %v227 = vld [vmem:[%s219 + $0x8] sm:$0xff]
      %v228 = vld [vmem:[%s219 + $0x10] sm:$0xff]
      %v229 = vld [vmem:[%s219 + $0x18] sm:$0xff]
      %v230 = vld [vmem:[%s219 + $0x20] sm:$0xff]
      %v231 = vld [vmem:[%s219 + $0x28] sm:$0xff]
      %v232 = vld [vmem:[%s219 + $0x30] sm:$0xff]
      %v233 = vld [vmem:[%s219 + $0x38] sm:$0xff]
      %v234 = vld [vmem:[%s1] sm:$0xf]
      %v235 = vld [vmem:[%s1 + $0x4] sm:$0xf]
      %v236 = vld [vmem:[%s1 + $0x8] sm:$0xf]
      %v237 = vld [vmem:[%s1 + $0xc] sm:$0xf]
      %v238 = vld [vmem:[%s1 + $0x10] sm:$0xf]
      %v239 = vld [vmem:[%s1 + $0x14] sm:$0xf]
      %v240 = vpack.c.bf16 %v227, %v226
      %v241 = vpack.c.bf16 %v229, %v228
      %v242 = vpack.c.bf16 %v231, %v230
      %v243 = vpack.c.bf16 %v233, %v232
      %v244 = vld [vmem:[%s2] sm:$0x1]
      %v246 = vlaneseq
      %v247 = vshrl.u32 %v246, 7
      %v248 = vsub.s32 0, %v247
      %v249 = vrot.slane %v244, %v248
      %v257 = vunpack.c.l.b16 %v234
      %v258 = vunpack.c.l.b16 %v235
      %v259 = vunpack.c.l.b16 %v236
      %v260 = vunpack.c.l.b16 %v237
      %v261 = vunpack.c.l.b16 %v238
      %v262 = vunpack.c.l.b16 %v239
      %v263 = vpack.c.b16 %v258, %v257
      %v264 = vpack.c.b16 %v260, %v259
      %v265 = vpack.c.b16 %v262, %v261
      %vm269 = vcmask 392192
      %v271 = vsel %vm269, %v240, 0
      %v274 = vsel %vm269, %v241, 0
      %v277 = vsel %vm269, %v242, 0
      %v280 = vsel %vm269, %v243, 0
      %282 = vmatprep.subr.bf16.mxu0 0
      %283 = vmatpush1.bf16.msra.mxu0 %v263
      %284 = vmatprep.subr.bf16.mxu0 0
      %285 = vmatpush1.bf16.msra.mxu0 %v264
      %286 = vmatprep.subr.bf16.mxu0 0
      %287 = vmatpush1.bf16.msra.mxu0 %v265
      %288 = vmatprep.subr.bf16.mxu0 0
      %289 = vmatpush1.bf16.msra.mxu0 0
      %290 = vmatprep.subr.bf16.mxu0 0
      %291 = vmatpush1.bf16.msra.mxu0 0
      %292 = vmatprep.subr.bf16.mxu0 0
      %293 = vmatpush1.bf16.msra.mxu0 0
      %294 = vmatprep.subr.bf16.mxu0 0
      %295 = vmatpush1.bf16.msra.mxu0 0
      %296 = vmatprep.subr.bf16.mxu0 0
      %297 = vmatpush1.bf16.msra.mxu0 0
      %298 = vmatprep.subr.bf16.mxu0 0
      %299 = vmatpush1.bf16.msra.mxu0 0
      %300 = vmatprep.subr.bf16.mxu0 0
      %301 = vmatpush1.bf16.msra.mxu0 0
      %302 = vmatprep.subr.bf16.mxu0 0
      %303 = vmatpush1.bf16.msra.mxu0 0
      %304 = vmatprep.subr.bf16.mxu0 0
      %305 = vmatpush1.bf16.msra.mxu0 0
      %306 = vmatprep.subr.bf16.mxu0 0
      %307 = vmatpush1.bf16.msra.mxu0 0
      %308 = vmatprep.subr.bf16.mxu0 0
      %309 = vmatpush1.bf16.msra.mxu0 0
      %310 = vmatprep.subr.bf16.mxu0 0
      %311 = vmatpush1.bf16.msra.mxu0 0
      %312 = vmatprep.subr.bf16.mxu0 0
      %313 = vmatpush1.bf16.msra.mxu0 0
      %314 = vmatprep.mubr.bf16.mxu0 0
      %315 = vmatmul.mubr.bf16.gmra.mrb[0].mxu0 %v271
      %v316 = vpop.f32.mrb[0].mxu0
      %v317 = vadd.f32 %v249, %v316
      %v318 = vpop.f32.mrb[0].mxu0
      %v319 = vpop.f32.mrb[0].mxu0
      %v320 = vadd.f32 %v249, %v319
      %v321 = vpop.f32.mrb[0].mxu0
      %322 = vmatprep.mubr.bf16.mxu0 0
      %323 = vmatmul.mubr.bf16.gmra.mrb[0].mxu0 %v274
      %v324 = vpop.f32.mrb[0].mxu0
      %v325 = vadd.f32 %v249, %v324
      %v326 = vpop.f32.mrb[0].mxu0
      %v327 = vpop.f32.mrb[0].mxu0
      %v328 = vadd.f32 %v249, %v327
      %v329 = vpop.f32.mrb[0].mxu0
      %330 = vmatprep.mubr.bf16.mxu0 0
      %331 = vmatmul.mubr.bf16.gmra.mrb[0].mxu0 %v277
      %v332 = vpop.f32.mrb[0].mxu0
      %v333 = vadd.f32 %v249, %v332
      %v334 = vpop.f32.mrb[0].mxu0
      %v335 = vpop.f32.mrb[0].mxu0
      %v336 = vadd.f32 %v249, %v335
      %v337 = vpop.f32.mrb[0].mxu0
      %338 = vmatprep.mubr.bf16.mxu0 0
      %339 = vmatmul.mubr.bf16.gmra.mrb[0].mxu0 %v280
      %v340 = vpop.f32.mrb[0].mxu0
      %v341 = vadd.f32 %v249, %v340
      %v342 = vpop.f32.mrb[0].mxu0
      %v343 = vpop.f32.mrb[0].mxu0
      %v344 = vadd.f32 %v249, %v343
      %v345 = vpop.f32.mrb[0].mxu0
      %346 = vdwg.mxu0
      %v347 = vld [vmem:[%s3] sm:$0x1]
      %v348 = vld [vmem:[%s4] sm:$0x1]
      %vm349 = vcmask 261120
      %v350 = vsel %vm349, %v317, 0.0
      %351 = vadd.xlane.f32.xlu0 %v350
      %v352 = vpop.xlane.xlu0 %351
      %v353 = vsel %vm349, %v320, 0.0
      %354 = vadd.xlane.f32.xlu0 %v353
      %v355 = vpop.xlane.xlu0 %354
      %v356 = vsel %vm349, %v325, 0.0
      %357 = vadd.xlane.f32.xlu0 %v356
      %v358 = vpop.xlane.xlu0 %357
      %v359 = vsel %vm349, %v328, 0.0
      %360 = vadd.xlane.f32.xlu0 %v359
      %v361 = vpop.xlane.xlu0 %360
      %v362 = vsel %vm349, %v333, 0.0
      %363 = vadd.xlane.f32.xlu0 %v362
      %v364 = vpop.xlane.xlu0 %363
      %v365 = vsel %vm349, %v336, 0.0
      %366 = vadd.xlane.f32.xlu0 %v365
      %v367 = vpop.xlane.xlu0 %366
      %v368 = vsel %vm349, %v341, 0.0
      %369 = vadd.xlane.f32.xlu0 %v368
      %v370 = vpop.xlane.xlu0 %369
      %v371 = vsel %vm349, %v344, 0.0
      %372 = vadd.xlane.f32.xlu0 %v371
      %v373 = vpop.xlane.xlu0 %372
      %v374 = vrcp.pop 32.0
      %v375 = vmul.f32 %v352, %v374
      %v376 = vmul.f32 %v355, %v374
      %v377 = vmul.f32 %v358, %v374
      %v378 = vmul.f32 %v361, %v374
      %v379 = vmul.f32 %v364, %v374
      %v380 = vmul.f32 %v367, %v374
      %v381 = vmul.f32 %v370, %v374
      %v382 = vmul.f32 %v373, %v374
      %v383 = vsub.f32 %v317, %v375
      %v384 = vsub.f32 %v320, %v376
      %v385 = vsub.f32 %v325, %v377
      %v386 = vsub.f32 %v328, %v378
      %v387 = vsub.f32 %v333, %v379
      %v388 = vsub.f32 %v336, %v380
      %v389 = vsub.f32 %v341, %v381
      %v390 = vsub.f32 %v344, %v382
      %v391 = vmul.f32 %v383, %v383
      %v392 = vmul.f32 %v384, %v384
      %v393 = vmul.f32 %v385, %v385
      %v394 = vmul.f32 %v386, %v386
      %v395 = vmul.f32 %v387, %v387
      %v396 = vmul.f32 %v388, %v388
      %v397 = vmul.f32 %v389, %v389
      %v398 = vmul.f32 %v390, %v390
      %v399 = vsel %vm349, %v391, 0.0
      %400 = vadd.xlane.f32.xlu0 %v399
      %v401 = vpop.xlane.xlu0 %400
      %v402 = vsel %vm349, %v392, 0.0
      %403 = vadd.xlane.f32.xlu0 %v402
      %v404 = vpop.xlane.xlu0 %403
      %v405 = vsel %vm349, %v393, 0.0
      %406 = vadd.xlane.f32.xlu0 %v405
      %v407 = vpop.xlane.xlu0 %406
      %v408 = vsel %vm349, %v394, 0.0
      %409 = vadd.xlane.f32.xlu0 %v408
      %v410 = vpop.xlane.xlu0 %409
      %v411 = vsel %vm349, %v395, 0.0
      %412 = vadd.xlane.f32.xlu0 %v411
      %v413 = vpop.xlane.xlu0 %412
      %v414 = vsel %vm349, %v396, 0.0
      %415 = vadd.xlane.f32.xlu0 %v414
      %v416 = vpop.xlane.xlu0 %415
      %v417 = vsel %vm349, %v397, 0.0
      %418 = vadd.xlane.f32.xlu0 %v417
      %v419 = vpop.xlane.xlu0 %418
      %v420 = vsel %vm349, %v398, 0.0
      %421 = vadd.xlane.f32.xlu0 %v420
      %v422 = vpop.xlane.xlu0 %421
      %v423 = vmul.f32 %v401, %v374
      %v424 = vmul.f32 %v404, %v374
      %v425 = vmul.f32 %v407, %v374
      %v426 = vmul.f32 %v410, %v374
      %v427 = vmul.f32 %v413, %v374
      %v428 = vmul.f32 %v416, %v374
      %v429 = vmul.f32 %v419, %v374
      %v430 = vmul.f32 %v422, %v374
      %v431 = vadd.f32 %v423, 1e-05
      %v432 = vadd.f32 %v424, 1e-05
      %v433 = vadd.f32 %v425, 1e-05
      %v434 = vadd.f32 %v426, 1e-05
      %v435 = vadd.f32 %v427, 1e-05
      %v436 = vadd.f32 %v428, 1e-05
      %v437 = vadd.f32 %v429, 1e-05
      %v438 = vadd.f32 %v430, 1e-05
      %v439 = vrsqrt.pop %v431
      %v440 = vrsqrt.pop %v432
      %v441 = vrsqrt.pop %v433
      %v442 = vrsqrt.pop %v434
      %v443 = vrsqrt.pop %v435
      %v444 = vrsqrt.pop %v436
      %v445 = vrsqrt.pop %v437
      %v446 = vrsqrt.pop %v438
      %v447 = vmul.f32 %v383, %v439
      %v448 = vmul.f32 %v384, %v440
      %v449 = vmul.f32 %v385, %v441
      %v450 = vmul.f32 %v386, %v442
      %v451 = vmul.f32 %v387, %v443
      %v452 = vmul.f32 %v388, %v444
      %v453 = vmul.f32 %v389, %v445
      %v454 = vmul.f32 %v390, %v446
      %v456 = vlaneseq
      %v457 = vshrl.u32 %v456, 7
      %v458 = vsub.s32 0, %v457
      %v459 = vrot.slane %v347, %v458
      %v461 = vmul.f32 %v447, %v459
      %v462 = vmul.f32 %v448, %v459
      %v463 = vmul.f32 %v449, %v459
      %v464 = vmul.f32 %v450, %v459
      %v465 = vmul.f32 %v451, %v459
      %v466 = vmul.f32 %v452, %v459
      %v467 = vmul.f32 %v453, %v459
      %v468 = vmul.f32 %v454, %v459
      %v470 = vlaneseq
      %v471 = vshrl.u32 %v470, 7
      %v472 = vsub.s32 0, %v471
      %v473 = vrot.slane %v348, %v472
      %v475 = vadd.f32 %v461, %v473
      %v476 = vadd.f32 %v462, %v473
      %v477 = vadd.f32 %v463, %v473
      %v478 = vadd.f32 %v464, %v473
      %v479 = vadd.f32 %v465, %v473
      %v480 = vadd.f32 %v466, %v473
      %v481 = vadd.f32 %v467, %v473
      %v482 = vadd.f32 %v468, %v473
      %483 = vst.msk [vmem:[%s224] sm:$0xff] %vm349, %v475
      %484 = vst.msk [vmem:[%s224 + $0x8] sm:$0xff] %vm349, %v476
      %485 = vst.msk [vmem:[%s224 + $0x10] sm:$0xff] %vm349, %v477
      %486 = vst.msk [vmem:[%s224 + $0x18] sm:$0xff] %vm349, %v478
      %487 = vst.msk [vmem:[%s224 + $0x20] sm:$0xff] %vm349, %v479
      %488 = vst.msk [vmem:[%s224 + $0x28] sm:$0xff] %vm349, %v480
      %489 = vst.msk [vmem:[%s224 + $0x30] sm:$0xff] %vm349, %v481
      %490 = vst.msk [vmem:[%s224 + $0x38] sm:$0xff] %vm349, %v482
      %p491 = scmp.lt.s32.totalorder %s16, 1
      %s492 = scalar_select %p491, %s16, 1
      %s493 = smul.addr %s492, 8
      %s494 = smul.addr %s493, 8
      %s495 = scalar_lea.vmem %s5, %s494
      // Predicated region
      $region41: #{swin_transformer_forward.7} parent=39 // pred_check
        %p496 = pneg %p144
      $region42: #{swin_transformer_forward.7} parent=39 // pred_check_branch
        %498 = sbr.rel (%p496) target = $region44
      $region43: #{swin_transformer_forward.7} parent=39 // pred_region
        _
      $region44: #{swin_transformer_forward.7} parent=39 // pred_fallthru
        _
    $region40: #{swin_transformer_forward.7} parent=5 // pred_fallthru
      _
    %p499 = scmp.le.s32.totalorder 2, %s11
    // Predicated region
    $region45: #{swin_transformer_forward.7} parent=5 // pred_check
      %p500 = pneg %p499
    $region46: #{swin_transformer_forward.7} parent=5 // pred_check_branch
      %502 = sbr.rel (%p500) target = $region48
    $region47: #{swin_transformer_forward.7} parent=5 // pred_region
      %s503 = ssub.s32 %s11, 2
      // Predicated region
      $region49: #{swin_transformer_forward.7} parent=47 // pred_check
        %p504 = pneg %p150
      $region50: #{swin_transformer_forward.7} parent=47 // pred_check_branch
        %506 = sbr.rel (%p504) target = $region52
      $region51: #{swin_transformer_forward.7} parent=47 // pred_region
        %p507 = scmp.lt.s32.totalorder %s17, 1
        %s508 = scalar_select %p507, %s17, 1
        %s509 = smul.addr %s508, 8
        %s510 = smul.addr %s509, 8
        %s511 = scalar_lea.vmem %s5, %s510
      $region52: #{swin_transformer_forward.7} parent=47 // pred_fallthru
        _
    $region48: #{swin_transformer_forward.7} parent=5 // pred_fallthru
      _
  $region6: #{swin_transformer_forward.7} parent=0 // loop_footer
    %s15 = sadd.s32 1, %s11
  $region7: #{swin_transformer_forward.7} parent=0 // loop_footer_branch
    %10 = sbr.rel target = $region3
  $region8: #{swin_transformer_forward.7} parent=0 // loop_exit
    _

// kernel: swin_transformer_forward.8
$region0: #{swin_transformer_forward.8}
  #allocation0 [shape = 'u32[]', space=smem, size = 0x4, offset = 0x4, fixed_abs, tag = 'smem constant byte address 0x4 - core index']
  #allocation1 [shape = 'u32[144,128]{1,0:T(1,128)}', space=vmem, size = 0x12000, scoped, tag = 'internal scratch']
  %s0 = inlined_call_operand.vmem [shape: f32[2,64,32], index: 0, kind: input, shape index: {}]
  %s1 = inlined_call_operand.vmem [shape: f32[1,32], index: 1, kind: input, shape index: {}]
  %s2 = inlined_call_operand.vmem [shape: f32[1,32], index: 2, kind: input, shape index: {}]
  %s3 = inlined_call_operand.vmem [shape: bf16[32,96], index: 3, kind: input, shape index: {}]
  %s4 = inlined_call_operand.vmem [shape: f32[1,96], index: 4, kind: input, shape index: {}]
  %s5 = inlined_call_operand.vmem [shape: f32[2,64,64], index: 5, kind: input, shape index: {}]
  %s6 = inlined_call_operand.vmem [shape: bf16[32,32], index: 6, kind: input, shape index: {}]
  %s7 = inlined_call_operand.vmem [shape: f32[1,32], index: 7, kind: input, shape index: {}]
  %s8 = inlined_call_operand.vmem [shape: f32[1,32], index: 8, kind: input, shape index: {}]
  %s9 = inlined_call_operand.vmem [shape: f32[1,32], index: 9, kind: input, shape index: {}]
  %s10 = inlined_call_operand.vmem [shape: bf16[32,128], index: 10, kind: input, shape index: {}]
  %s11 = inlined_call_operand.vmem [shape: f32[1,128], index: 11, kind: input, shape index: {}]
  %s12 = inlined_call_operand.vmem [shape: bf16[128,32], index: 12, kind: input, shape index: {}]
  %s13 = inlined_call_operand.vmem [shape: f32[1,32], index: 13, kind: input, shape index: {}]
  %s14 = inlined_call_operand.vmem [shape: f32[2,64,32], index: 14, kind: output, shape index: {}]
  %s15 = sld [smem:[#allocation0]]
  $region89: #{swin_transformer_forward.8} parent=0
    _
  %s17 = ssub.s32 1, %s15
  %s18 = scalar_select 0, %s17, %s15
  loop: start=0, step=1, limit=4
  $region2: #{swin_transformer_forward.8} parent=0 // loop_pre_header
    _
  $region3: #{swin_transformer_forward.8} parent=0 // loop_header
    %s20 = sphi 0, %s24
    %p21 = scmp.ge.s32.totalorder %s20, 4
    %s30 = sphi 0, %s32
    %s33 = sphi 0, %s30
    %s34 = sphi 0, %s33
    %s50 = sphi 0, %s34
    %s54 = sphi 0, %s54
    %s56 = sphi 0, %s54
    %s57 = sphi 0, %s56
    %s71 = sphi 0, %s57
    %s75 = sphi 0, %s75
    %s77 = sphi 0, %s75
    %s78 = sphi 0, %s77
    %s92 = sphi 0, %s78
    %s96 = sphi 0, %s96
    %s98 = sphi 0, %s96
    %s99 = sphi 0, %s98
    %s113 = sphi 0, %s99
    %s117 = sphi 0, %s117
    %s119 = sphi 0, %s117
    %s120 = sphi 0, %s119
    %s134 = sphi 0, %s120
    %s138 = sphi 0, %s138
    %s140 = sphi 0, %s138
    %s141 = sphi 0, %s140
    %s155 = sphi 0, %s141
    %s159 = sphi 0, %s159
    %s161 = sphi 0, %s159
    %s162 = sphi 0, %s161
    %s176 = sphi 0, %s162
    %s180 = sphi 0, %s180
    %s182 = sphi 0, %s180
    %s183 = sphi 0, %s182
    %s197 = sphi 0, %s183
    %s201 = sphi 0, %s201
    %s203 = sphi 0, %s201
    %s204 = sphi 0, %s203
    %s218 = sphi 0, %s204
    %s222 = sphi 0, %s222
    %s224 = sphi 0, %s222
    %s225 = sphi 0, %s224
    %s239 = sphi 0, %s225
    %s243 = sphi 0, %s243
    %s245 = sphi 0, %s243
    %s246 = sphi 0, %s245
    %s260 = sphi 0, %s246
    %s264 = sphi 0, %s264
    %s266 = sphi 0, %s264
    %s267 = sphi 0, %s266
    %s281 = sphi 0, %s267
    %s285 = sphi 0, %s285
    %s287 = sphi 0, %s285
    %s288 = sphi 0, %s287
    %s302 = sphi 0, %s288
    %s306 = sphi 0, %s306
    %s308 = sphi 0, %s306
    %s309 = sphi 0, %s308
    %s323 = sphi 0, %s309
    %s329 = sphi 0, %s331
    %s332 = sphi 0, %s329
    %s333 = sphi 0, %s332
    %s349 = sphi 0, %s333
  $region4: #{swin_transformer_forward.8} parent=0 // loop_header_branch
    %23 = sbr.rel (%p21) target = $region8
  $region5: #{swin_transformer_forward.8} parent=0 // loop_body
    %s25 = ssub.s32 %s20, 1
    %s26 = ssub.s32 %s20, 2
    %s27 = sadd.s32 %s20, 1
    %s28 = ssub.s32 %s20, %s27
    %p29 = scmp.eq.s32.totalorder %s28, 0
    %s31 = sadd.s32 %s30, 1
    %s32 = scalar_select %p29, %s30, %s31
    %p35 = pneg %p29
    %p36 = scmp.eq.s32.totalorder %s20, 1
    %p37 = por %p35, %p36
    %p38 = scmp.ne.s32.totalorder %s30, %s33
    %p39 = scmp.eq.s32.totalorder %s20, 0
    %p40 = por %p38, %p39
    %p41 = scmp.ne.s32.totalorder %s30, %s33
    %p42 = scmp.eq.s32.totalorder %s25, 1
    %p43 = por %p41, %p42
    %p44 = scmp.ne.s32.totalorder %s33, %s34
    %p45 = scmp.eq.s32.totalorder %s25, 0
    %p46 = por %p44, %p45
    %p47 = scmp.ne.s32.totalorder %s33, %s34
    %p48 = scmp.eq.s32.totalorder %s26, 1
    %p49 = por %p47, %p48
    %p51 = scmp.ne.s32.totalorder %s34, %s50
    %p52 = scmp.eq.s32.totalorder %s26, 0
    %p53 = por %p51, %p52
    %s55 = sadd.s32 %s54, 1
    %p58 = scmp.eq.s32.totalorder %s20, 1
    %p59 = scmp.ne.s32.totalorder %s54, %s56
    %p60 = scmp.eq.s32.totalorder %s20, 0
    %p61 = por %p59, %p60
    %p62 = scmp.ne.s32.totalorder %s54, %s56
    %p63 = scmp.eq.s32.totalorder %s25, 1
    %p64 = por %p62, %p63
    %p65 = scmp.ne.s32.totalorder %s56, %s57
    %p66 = scmp.eq.s32.totalorder %s25, 0
    %p67 = por %p65, %p66
    %p68 = scmp.ne.s32.totalorder %s56, %s57
    %p69 = scmp.eq.s32.totalorder %s26, 1
    %p70 = por %p68, %p69
    %p72 = scmp.ne.s32.totalorder %s57, %s71
    %p73 = scmp.eq.s32.totalorder %s26, 0
    %p74 = por %p72, %p73
    %s76 = sadd.s32 %s75, 1
    %p79 = scmp.eq.s32.totalorder %s20, 1
    %p80 = scmp.ne.s32.totalorder %s75, %s77
    %p81 = scmp.eq.s32.totalorder %s20, 0
    %p82 = por %p80, %p81
    %p83 = scmp.ne.s32.totalorder %s75, %s77
    %p84 = scmp.eq.s32.totalorder %s25, 1
    %p85 = por %p83, %p84
    %p86 = scmp.ne.s32.totalorder %s77, %s78
    %p87 = scmp.eq.s32.totalorder %s25, 0
    %p88 = por %p86, %p87
    %p89 = scmp.ne.s32.totalorder %s77, %s78
    %p90 = scmp.eq.s32.totalorder %s26, 1
    %p91 = por %p89, %p90
    %p93 = scmp.ne.s32.totalorder %s78, %s92
    %p94 = scmp.eq.s32.totalorder %s26, 0
    %p95 = por %p93, %p94
    %s97 = sadd.s32 %s96, 1
    %p100 = scmp.eq.s32.totalorder %s20, 1
    %p101 = scmp.ne.s32.totalorder %s96, %s98
    %p102 = scmp.eq.s32.totalorder %s20, 0
    %p103 = por %p101, %p102
    %p104 = scmp.ne.s32.totalorder %s96, %s98
    %p105 = scmp.eq.s32.totalorder %s25, 1
    %p106 = por %p104, %p105
    %p107 = scmp.ne.s32.totalorder %s98, %s99
    %p108 = scmp.eq.s32.totalorder %s25, 0
    %p109 = por %p107, %p108
    %p110 = scmp.ne.s32.totalorder %s98, %s99
    %p111 = scmp.eq.s32.totalorder %s26, 1
    %p112 = por %p110, %p111
    %p114 = scmp.ne.s32.totalorder %s99, %s113
    %p115 = scmp.eq.s32.totalorder %s26, 0
    %p116 = por %p114, %p115
    %s118 = sadd.s32 %s117, 1
    %p121 = scmp.eq.s32.totalorder %s20, 1
    %p122 = scmp.ne.s32.totalorder %s117, %s119
    %p123 = scmp.eq.s32.totalorder %s20, 0
    %p124 = por %p122, %p123
    %p125 = scmp.ne.s32.totalorder %s117, %s119
    %p126 = scmp.eq.s32.totalorder %s25, 1
    %p127 = por %p125, %p126
    %p128 = scmp.ne.s32.totalorder %s119, %s120
    %p129 = scmp.eq.s32.totalorder %s25, 0
    %p130 = por %p128, %p129
    %p131 = scmp.ne.s32.totalorder %s119, %s120
    %p132 = scmp.eq.s32.totalorder %s26, 1
    %p133 = por %p131, %p132
    %p135 = scmp.ne.s32.totalorder %s120, %s134
    %p136 = scmp.eq.s32.totalorder %s26, 0
    %p137 = por %p135, %p136
    %s139 = sadd.s32 %s138, 1
    %p142 = scmp.eq.s32.totalorder %s20, 1
    %p143 = scmp.ne.s32.totalorder %s138, %s140
    %p144 = scmp.eq.s32.totalorder %s20, 0
    %p145 = por %p143, %p144
    %p146 = scmp.ne.s32.totalorder %s138, %s140
    %p147 = scmp.eq.s32.totalorder %s25, 1
    %p148 = por %p146, %p147
    %p149 = scmp.ne.s32.totalorder %s140, %s141
    %p150 = scmp.eq.s32.totalorder %s25, 0
    %p151 = por %p149, %p150
    %p152 = scmp.ne.s32.totalorder %s140, %s141
    %p153 = scmp.eq.s32.totalorder %s26, 1
    %p154 = por %p152, %p153
    %p156 = scmp.ne.s32.totalorder %s141, %s155
    %p157 = scmp.eq.s32.totalorder %s26, 0
    %p158 = por %p156, %p157
    %s160 = sadd.s32 %s159, 1
    %p163 = scmp.eq.s32.totalorder %s20, 1
    %p164 = scmp.ne.s32.totalorder %s159, %s161
    %p165 = scmp.eq.s32.totalorder %s20, 0
    %p166 = por %p164, %p165
    %p167 = scmp.ne.s32.totalorder %s159, %s161
    %p168 = scmp.eq.s32.totalorder %s25, 1
    %p169 = por %p167, %p168
    %p170 = scmp.ne.s32.totalorder %s161, %s162
    %p171 = scmp.eq.s32.totalorder %s25, 0
    %p172 = por %p170, %p171
    %p173 = scmp.ne.s32.totalorder %s161, %s162
    %p174 = scmp.eq.s32.totalorder %s26, 1
    %p175 = por %p173, %p174
    %p177 = scmp.ne.s32.totalorder %s162, %s176
    %p178 = scmp.eq.s32.totalorder %s26, 0
    %p179 = por %p177, %p178
    %s181 = sadd.s32 %s180, 1
    %p184 = scmp.eq.s32.totalorder %s20, 1
    %p185 = scmp.ne.s32.totalorder %s180, %s182
    %p186 = scmp.eq.s32.totalorder %s20, 0
    %p187 = por %p185, %p186
    %p188 = scmp.ne.s32.totalorder %s180, %s182
    %p189 = scmp.eq.s32.totalorder %s25, 1
    %p190 = por %p188, %p189
    %p191 = scmp.ne.s32.totalorder %s182, %s183
    %p192 = scmp.eq.s32.totalorder %s25, 0
    %p193 = por %p191, %p192
    %p194 = scmp.ne.s32.totalorder %s182, %s183
    %p195 = scmp.eq.s32.totalorder %s26, 1
    %p196 = por %p194, %p195
    %p198 = scmp.ne.s32.totalorder %s183, %s197
    %p199 = scmp.eq.s32.totalorder %s26, 0
    %p200 = por %p198, %p199
    %s202 = sadd.s32 %s201, 1
    %p205 = scmp.eq.s32.totalorder %s20, 1
    %p206 = scmp.ne.s32.totalorder %s201, %s203
    %p207 = scmp.eq.s32.totalorder %s20, 0
    %p208 = por %p206, %p207
    %p209 = scmp.ne.s32.totalorder %s201, %s203
    %p210 = scmp.eq.s32.totalorder %s25, 1
    %p211 = por %p209, %p210
    %p212 = scmp.ne.s32.totalorder %s203, %s204
    %p213 = scmp.eq.s32.totalorder %s25, 0
    %p214 = por %p212, %p213
    %p215 = scmp.ne.s32.totalorder %s203, %s204
    %p216 = scmp.eq.s32.totalorder %s26, 1
    %p217 = por %p215, %p216
    %p219 = scmp.ne.s32.totalorder %s204, %s218
    %p220 = scmp.eq.s32.totalorder %s26, 0
    %p221 = por %p219, %p220
    %s223 = sadd.s32 %s222, 1
    %p226 = scmp.eq.s32.totalorder %s20, 1
    %p227 = scmp.ne.s32.totalorder %s222, %s224
    %p228 = scmp.eq.s32.totalorder %s20, 0
    %p229 = por %p227, %p228
    %p230 = scmp.ne.s32.totalorder %s222, %s224
    %p231 = scmp.eq.s32.totalorder %s25, 1
    %p232 = por %p230, %p231
    %p233 = scmp.ne.s32.totalorder %s224, %s225
    %p234 = scmp.eq.s32.totalorder %s25, 0
    %p235 = por %p233, %p234
    %p236 = scmp.ne.s32.totalorder %s224, %s225
    %p237 = scmp.eq.s32.totalorder %s26, 1
    %p238 = por %p236, %p237
    %p240 = scmp.ne.s32.totalorder %s225, %s239
    %p241 = scmp.eq.s32.totalorder %s26, 0
    %p242 = por %p240, %p241
    %s244 = sadd.s32 %s243, 1
    %p247 = scmp.eq.s32.totalorder %s20, 1
    %p248 = scmp.ne.s32.totalorder %s243, %s245
    %p249 = scmp.eq.s32.totalorder %s20, 0
    %p250 = por %p248, %p249
    %p251 = scmp.ne.s32.totalorder %s243, %s245
    %p252 = scmp.eq.s32.totalorder %s25, 1
    %p253 = por %p251, %p252
    %p254 = scmp.ne.s32.totalorder %s245, %s246
    %p255 = scmp.eq.s32.totalorder %s25, 0
    %p256 = por %p254, %p255
    %p257 = scmp.ne.s32.totalorder %s245, %s246
    %p258 = scmp.eq.s32.totalorder %s26, 1
    %p259 = por %p257, %p258
    %p261 = scmp.ne.s32.totalorder %s246, %s260
    %p262 = scmp.eq.s32.totalorder %s26, 0
    %p263 = por %p261, %p262
    %s265 = sadd.s32 %s264, 1
    %p268 = scmp.eq.s32.totalorder %s20, 1
    %p269 = scmp.ne.s32.totalorder %s264, %s266
    %p270 = scmp.eq.s32.totalorder %s20, 0
    %p271 = por %p269, %p270
    %p272 = scmp.ne.s32.totalorder %s264, %s266
    %p273 = scmp.eq.s32.totalorder %s25, 1
    %p274 = por %p272, %p273
    %p275 = scmp.ne.s32.totalorder %s266, %s267
    %p276 = scmp.eq.s32.totalorder %s25, 0
    %p277 = por %p275, %p276
    %p278 = scmp.ne.s32.totalorder %s266, %s267
    %p279 = scmp.eq.s32.totalorder %s26, 1
    %p280 = por %p278, %p279
    %p282 = scmp.ne.s32.totalorder %s267, %s281
    %p283 = scmp.eq.s32.totalorder %s26, 0
    %p284 = por %p282, %p283
    %s286 = sadd.s32 %s285, 1
    %p289 = scmp.eq.s32.totalorder %s20, 1
    %p290 = scmp.ne.s32.totalorder %s285, %s287
    %p291 = scmp.eq.s32.totalorder %s20, 0
    %p292 = por %p290, %p291
    %p293 = scmp.ne.s32.totalorder %s285, %s287
    %p294 = scmp.eq.s32.totalorder %s25, 1
    %p295 = por %p293, %p294
    %p296 = scmp.ne.s32.totalorder %s287, %s288
    %p297 = scmp.eq.s32.totalorder %s25, 0
    %p298 = por %p296, %p297
    %p299 = scmp.ne.s32.totalorder %s287, %s288
    %p300 = scmp.eq.s32.totalorder %s26, 1
    %p301 = por %p299, %p300
    %p303 = scmp.ne.s32.totalorder %s288, %s302
    %p304 = scmp.eq.s32.totalorder %s26, 0
    %p305 = por %p303, %p304
    %s307 = sadd.s32 %s306, 1
    %p310 = scmp.eq.s32.totalorder %s20, 1
    %p311 = scmp.ne.s32.totalorder %s306, %s308
    %p312 = scmp.eq.s32.totalorder %s20, 0
    %p313 = por %p311, %p312
    %p314 = scmp.ne.s32.totalorder %s306, %s308
    %p315 = scmp.eq.s32.totalorder %s25, 1
    %p316 = por %p314, %p315
    %p317 = scmp.ne.s32.totalorder %s308, %s309
    %p318 = scmp.eq.s32.totalorder %s25, 0
    %p319 = por %p317, %p318
    %p320 = scmp.ne.s32.totalorder %s308, %s309
    %p321 = scmp.eq.s32.totalorder %s26, 1
    %p322 = por %p320, %p321
    %p324 = scmp.ne.s32.totalorder %s309, %s323
    %p325 = scmp.eq.s32.totalorder %s26, 0
    %p326 = por %p324, %p325
    %s327 = ssub.s32 %s20, %s27
    %p328 = scmp.eq.s32.totalorder %s327, 0
    %s330 = sadd.s32 %s329, 1
    %s331 = scalar_select %p328, %s329, %s330
    %p334 = pneg %p328
    %p335 = scmp.eq.s32.totalorder %s20, 1
    %p336 = por %p334, %p335
    %p337 = scmp.ne.s32.totalorder %s329, %s332
    %p338 = scmp.eq.s32.totalorder %s20, 0
    %p339 = por %p337, %p338
    %p340 = scmp.ne.s32.totalorder %s329, %s332
    %p341 = scmp.eq.s32.totalorder %s25, 1
    %p342 = por %p340, %p341
    %p343 = scmp.ne.s32.totalorder %s332, %s333
    %p344 = scmp.eq.s32.totalorder %s25, 0
    %p345 = por %p343, %p344
    %p346 = scmp.ne.s32.totalorder %s332, %s333
    %p347 = scmp.eq.s32.totalorder %s26, 1
    %p348 = por %p346, %p347
    %p350 = scmp.ne.s32.totalorder %s333, %s349
    %p351 = scmp.eq.s32.totalorder %s26, 0
    %p352 = por %p350, %p351
    %p353 = scmp.le.s32.totalorder 1, %s20
    %p354 = scmp.lt.s32.totalorder %s20, 3
    %p355 = pnand %p353, %p354
    %p356 = pneg %p355
    // Predicated region
    $region9: #{swin_transformer_forward.8} parent=5 // pred_check
      _
    $region10: #{swin_transformer_forward.8} parent=5 // pred_check_branch
      %358 = sbr.rel (%p355) target = $region12
    $region11: #{swin_transformer_forward.8} parent=5 // pred_region
      %s359 = ssub.s32 %s20, 1
      // Predicated region
      $region13: #{swin_transformer_forward.8} parent=11 // pred_check
        %p360 = pneg %p67
      $region14: #{swin_transformer_forward.8} parent=11 // pred_check_branch
        %362 = sbr.rel (%p360) target = $region16
      $region15: #{swin_transformer_forward.8} parent=11 // pred_region
        _
      $region16: #{swin_transformer_forward.8} parent=11 // pred_fallthru
        _
      // Predicated region
      $region17: #{swin_transformer_forward.8} parent=11 // pred_check
        %p363 = pneg %p88
      $region18: #{swin_transformer_forward.8} parent=11 // pred_check_branch
        %365 = sbr.rel (%p363) target = $region20
      $region19: #{swin_transformer_forward.8} parent=11 // pred_region
        _
      $region20: #{swin_transformer_forward.8} parent=11 // pred_fallthru
        _
      // Predicated region
      $region21: #{swin_transformer_forward.8} parent=11 // pred_check
        %p366 = pneg %p109
      $region22: #{swin_transformer_forward.8} parent=11 // pred_check_branch
        %368 = sbr.rel (%p366) target = $region24
      $region23: #{swin_transformer_forward.8} parent=11 // pred_region
        _
      $region24: #{swin_transformer_forward.8} parent=11 // pred_fallthru
        _
      // Predicated region
      $region25: #{swin_transformer_forward.8} parent=11 // pred_check
        %p369 = pneg %p130
      $region26: #{swin_transformer_forward.8} parent=11 // pred_check_branch
        %371 = sbr.rel (%p369) target = $region28
      $region27: #{swin_transformer_forward.8} parent=11 // pred_region
        _
      $region28: #{swin_transformer_forward.8} parent=11 // pred_fallthru
        _
      // Predicated region
      $region29: #{swin_transformer_forward.8} parent=11 // pred_check
        %p372 = pneg %p151
      $region30: #{swin_transformer_forward.8} parent=11 // pred_check_branch
        %374 = sbr.rel (%p372) target = $region32
      $region31: #{swin_transformer_forward.8} parent=11 // pred_region
        _
      $region32: #{swin_transformer_forward.8} parent=11 // pred_fallthru
        _
      // Predicated region
      $region33: #{swin_transformer_forward.8} parent=11 // pred_check
        %p375 = pneg %p172
      $region34: #{swin_transformer_forward.8} parent=11 // pred_check_branch
        %377 = sbr.rel (%p375) target = $region36
      $region35: #{swin_transformer_forward.8} parent=11 // pred_region
        _
      $region36: #{swin_transformer_forward.8} parent=11 // pred_fallthru
        _
      // Predicated region
      $region37: #{swin_transformer_forward.8} parent=11 // pred_check
        %p378 = pneg %p193
      $region38: #{swin_transformer_forward.8} parent=11 // pred_check_branch
        %380 = sbr.rel (%p378) target = $region40
      $region39: #{swin_transformer_forward.8} parent=11 // pred_region
        _
      $region40: #{swin_transformer_forward.8} parent=11 // pred_fallthru
        _
      // Predicated region
      $region41: #{swin_transformer_forward.8} parent=11 // pred_check
        %p381 = pneg %p214
      $region42: #{swin_transformer_forward.8} parent=11 // pred_check_branch
        %383 = sbr.rel (%p381) target = $region44
      $region43: #{swin_transformer_forward.8} parent=11 // pred_region
        _
      $region44: #{swin_transformer_forward.8} parent=11 // pred_fallthru
        _
      // Predicated region
      $region45: #{swin_transformer_forward.8} parent=11 // pred_check
        %p384 = pneg %p235
      $region46: #{swin_transformer_forward.8} parent=11 // pred_check_branch
        %386 = sbr.rel (%p384) target = $region48
      $region47: #{swin_transformer_forward.8} parent=11 // pred_region
        _
      $region48: #{swin_transformer_forward.8} parent=11 // pred_fallthru
        _
      // Predicated region
      $region49: #{swin_transformer_forward.8} parent=11 // pred_check
        %p387 = pneg %p256
      $region50: #{swin_transformer_forward.8} parent=11 // pred_check_branch
        %389 = sbr.rel (%p387) target = $region52
      $region51: #{swin_transformer_forward.8} parent=11 // pred_region
        _
      $region52: #{swin_transformer_forward.8} parent=11 // pred_fallthru
        _
      // Predicated region
      $region53: #{swin_transformer_forward.8} parent=11 // pred_check
        %p390 = pneg %p277
      $region54: #{swin_transformer_forward.8} parent=11 // pred_check_branch
        %392 = sbr.rel (%p390) target = $region56
      $region55: #{swin_transformer_forward.8} parent=11 // pred_region
        _
      $region56: #{swin_transformer_forward.8} parent=11 // pred_fallthru
        _
      // Predicated region
      $region57: #{swin_transformer_forward.8} parent=11 // pred_check
        %p393 = pneg %p298
      $region58: #{swin_transformer_forward.8} parent=11 // pred_check_branch
        %395 = sbr.rel (%p393) target = $region60
      $region59: #{swin_transformer_forward.8} parent=11 // pred_region
        _
      $region60: #{swin_transformer_forward.8} parent=11 // pred_fallthru
        _
      // Predicated region
      $region61: #{swin_transformer_forward.8} parent=11 // pred_check
        %p396 = pneg %p319
      $region62: #{swin_transformer_forward.8} parent=11 // pred_check_branch
        %398 = sbr.rel (%p396) target = $region64
      $region63: #{swin_transformer_forward.8} parent=11 // pred_region
        _
      $region64: #{swin_transformer_forward.8} parent=11 // pred_fallthru
        _
    $region12: #{swin_transformer_forward.8} parent=5 // pred_fallthru
      _
    %p399 = scmp.lt.s32.totalorder %s20, 2
    // Predicated region
    $region65: #{swin_transformer_forward.8} parent=5 // pred_check
      %p400 = pneg %p399
    $region66: #{swin_transformer_forward.8} parent=5 // pred_check_branch
      %402 = sbr.rel (%p400) target = $region68
    $region67: #{swin_transformer_forward.8} parent=5 // pred_region
      // Predicated region
      $region69: #{swin_transformer_forward.8} parent=67 // pred_check
        %p403 = pneg %p40
      $region70: #{swin_transformer_forward.8} parent=67 // pred_check_branch
        %405 = sbr.rel (%p403) target = $region72
      $region71: #{swin_transformer_forward.8} parent=67 // pred_region
        %p406 = scmp.lt.s32.totalorder %s20, 1
        %s407 = scalar_select %p406, %s20, 1
        %s408 = smul.addr %s407, 8
        %s409 = smul.addr %s408, 8
        %s410 = scalar_lea.vmem %s0, %s409
      $region72: #{swin_transformer_forward.8} parent=67 // pred_fallthru
        _
    $region68: #{swin_transformer_forward.8} parent=5 // pred_fallthru
      _
    %p411 = scmp.le.s32.totalorder 1, %s20
    %p412 = scmp.lt.s32.totalorder %s20, 3
    %p413 = pnand %p411, %p412
    %p414 = pneg %p413
    // Predicated region
    $region73: #{swin_transformer_forward.8} parent=5 // pred_check
      _
    $region74: #{swin_transformer_forward.8} parent=5 // pred_check_branch
      %416 = sbr.rel (%p413) target = $region76
    $region75: #{swin_transformer_forward.8} parent=5 // pred_region
      %s417 = ssub.s32 %s20, 1
      %p418 = scmp.lt.s32.totalorder %s25, 1
      %s419 = scalar_select %p418, %s25, 1
      %s420 = smul.addr %s419, 8
      %s421 = smul.addr %s420, 8
      %s422 = scalar_lea.vmem %s0, %s421
      %p423 = pneg %p46
      %p424 = pneg %p43
      %p425 = pneg %p67
      %p426 = pneg %p64
      %p427 = pneg %p88
      %p428 = pneg %p85
      %p429 = pneg %p109
      %p430 = pneg %p106
      %p431 = pneg %p130
      %p432 = pneg %p127
      %p433 = pneg %p151
      %p434 = pneg %p148
      %p435 = pneg %p172
      %p436 = pneg %p169
      %p437 = pneg %p193
      %p438 = pneg %p190
      %p439 = pneg %p214
      %p440 = pneg %p211
      %p441 = pneg %p235
      %p442 = pneg %p232
      %p443 = pneg %p256
      %p444 = pneg %p253
      %p445 = pneg %p277
      %p446 = pneg %p274
      %p447 = pneg %p298
      %p448 = pneg %p295
      %p449 = pneg %p319
      %p450 = pneg %p316
      %p451 = pneg %p345
      %p452 = pneg %p342
      %p453 = scmp.lt.s32.totalorder %s25, 1
      %s454 = scalar_select %p453, %s25, 1
      %s455 = smul.addr %s454, 8
      %s456 = smul.addr %s455, 8
      %s457 = scalar_lea.vmem %s14, %s456
      %p458 = scmp.lt.s32.totalorder %s25, 1
      %s459 = scalar_select %p458, %s25, 1
      %s460 = smul.addr %s459, 8
      %s461 = smul.addr %s460, 8
      %s462 = scalar_lea.vmem %s0, %s461
      %p463 = scmp.lt.s32.totalorder %s25, 1
      %s464 = scalar_select %p463, %s25, 1
      %s465 = smul.addr %s464, 8
      %s466 = smul.addr %s465, 8
      %s467 = scalar_lea.vmem %s14, %s466
      %v469 = vld [vmem:[%s462] sm:$0xff]
      %v470 = vld [vmem:[%s462 + $0x8] sm:$0xff]
      %v471 = vld [vmem:[%s462 + $0x10] sm:$0xff]
      %v472 = vld [vmem:[%s462 + $0x18] sm:$0xff]
      %v473 = vld [vmem:[%s462 + $0x20] sm:$0xff]
      %v474 = vld [vmem:[%s462 + $0x28] sm:$0xff]
      %v475 = vld [vmem:[%s462 + $0x30] sm:$0xff]
      %v476 = vld [vmem:[%s462 + $0x38] sm:$0xff]
      %v477 = vld [vmem:[%s1] sm:$0x1]
      %v478 = vld [vmem:[%s2] sm:$0x1]
      %vm479 = vcmask 261120
      %v480 = vsel %vm479, %v469, 0.0
      %481 = vadd.xlane.f32.xlu0 %v480
      %v482 = vpop.xlane.xlu0 %481
      %v483 = vsel %vm479, %v470, 0.0
      %484 = vadd.xlane.f32.xlu0 %v483
      %v485 = vpop.xlane.xlu0 %484
      %v486 = vsel %vm479, %v471, 0.0
      %487 = vadd.xlane.f32.xlu0 %v486
      %v488 = vpop.xlane.xlu0 %487
      %v489 = vsel %vm479, %v472, 0.0
      %490 = vadd.xlane.f32.xlu0 %v489
      %v491 = vpop.xlane.xlu0 %490
      %v492 = vsel %vm479, %v473, 0.0
      %493 = vadd.xlane.f32.xlu0 %v492
      %v494 = vpop.xlane.xlu0 %493
      %v495 = vsel %vm479, %v474, 0.0
      %496 = vadd.xlane.f32.xlu0 %v495
      %v497 = vpop.xlane.xlu0 %496
      %v498 = vsel %vm479, %v475, 0.0
      %499 = vadd.xlane.f32.xlu0 %v498
      %v500 = vpop.xlane.xlu0 %499
      %v501 = vsel %vm479, %v476, 0.0
      %502 = vadd.xlane.f32.xlu0 %v501
      %v503 = vpop.xlane.xlu0 %502
      %v504 = vrcp.pop 32.0
      %v505 = vmul.f32 %v482, %v504
      %v506 = vmul.f32 %v485, %v504
      %v507 = vmul.f32 %v488, %v504
      %v508 = vmul.f32 %v491, %v504
      %v509 = vmul.f32 %v494, %v504
      %v510 = vmul.f32 %v497, %v504
      %v511 = vmul.f32 %v500, %v504
      %v512 = vmul.f32 %v503, %v504
      %v513 = vsub.f32 %v469, %v505
      %v514 = vsub.f32 %v470, %v506
      %v515 = vsub.f32 %v471, %v507
      %v516 = vsub.f32 %v472, %v508
      %v517 = vsub.f32 %v473, %v509
      %v518 = vsub.f32 %v474, %v510
      %v519 = vsub.f32 %v475, %v511
      %v520 = vsub.f32 %v476, %v512
      %v521 = vmul.f32 %v513, %v513
      %v522 = vmul.f32 %v514, %v514
      %v523 = vmul.f32 %v515, %v515
      %v524 = vmul.f32 %v516, %v516
      %v525 = vmul.f32 %v517, %v517
      %v526 = vmul.f32 %v518, %v518
      %v527 = vmul.f32 %v519, %v519
      %v528 = vmul.f32 %v520, %v520
      %v529 = vsel %vm479, %v521, 0.0
      %530 = vadd.xlane.f32.xlu0 %v529
      %v531 = vpop.xlane.xlu0 %530
      %v532 = vsel %vm479, %v522, 0.0
      %533 = vadd.xlane.f32.xlu0 %v532
      %v534 = vpop.xlane.xlu0 %533
      %v535 = vsel %vm479, %v523, 0.0
      %536 = vadd.xlane.f32.xlu0 %v535
      %v537 = vpop.xlane.xlu0 %536
      %v538 = vsel %vm479, %v524, 0.0
      %539 = vadd.xlane.f32.xlu0 %v538
      %v540 = vpop.xlane.xlu0 %539
      %v541 = vsel %vm479, %v525, 0.0
      %542 = vadd.xlane.f32.xlu0 %v541
      %v543 = vpop.xlane.xlu0 %542
      %v544 = vsel %vm479, %v526, 0.0
      %545 = vadd.xlane.f32.xlu0 %v544
      %v546 = vpop.xlane.xlu0 %545
      %v547 = vsel %vm479, %v527, 0.0
      %548 = vadd.xlane.f32.xlu0 %v547
      %v549 = vpop.xlane.xlu0 %548
      %v550 = vsel %vm479, %v528, 0.0
      %551 = vadd.xlane.f32.xlu0 %v550
      %v552 = vpop.xlane.xlu0 %551
      %v553 = vmul.f32 %v531, %v504
      %v554 = vmul.f32 %v534, %v504
      %v555 = vmul.f32 %v537, %v504
      %v556 = vmul.f32 %v540, %v504
      %v557 = vmul.f32 %v543, %v504
      %v558 = vmul.f32 %v546, %v504
      %v559 = vmul.f32 %v549, %v504
      %v560 = vmul.f32 %v552, %v504
      %v561 = vadd.f32 %v553, 1e-05
      %v562 = vadd.f32 %v554, 1e-05
      %v563 = vadd.f32 %v555, 1e-05
      %v564 = vadd.f32 %v556, 1e-05
      %v565 = vadd.f32 %v557, 1e-05
      %v566 = vadd.f32 %v558, 1e-05
      %v567 = vadd.f32 %v559, 1e-05
      %v568 = vadd.f32 %v560, 1e-05
      %v569 = vrsqrt.pop %v561
      %v570 = vrsqrt.pop %v562
      %v571 = vrsqrt.pop %v563
      %v572 = vrsqrt.pop %v564
      %v573 = vrsqrt.pop %v565
      %v574 = vrsqrt.pop %v566
      %v575 = vrsqrt.pop %v567
      %v576 = vrsqrt.pop %v568
      %v577 = vmul.f32 %v513, %v569
      %v578 = vmul.f32 %v514, %v570
      %v579 = vmul.f32 %v515, %v571
      %v580 = vmul.f32 %v516, %v572
      %v581 = vmul.f32 %v517, %v573
      %v582 = vmul.f32 %v518, %v574
      %v583 = vmul.f32 %v519, %v575
      %v584 = vmul.f32 %v520, %v576
      %v586 = vlaneseq
      %v587 = vshrl.u32 %v586, 7
      %v588 = vsub.s32 0, %v587
      %v589 = vrot.slane %v477, %v588
      %v591 = vmul.f32 %v577, %v589
      %v592 = vmul.f32 %v578, %v589
      %v593 = vmul.f32 %v579, %v589
      %v594 = vmul.f32 %v580, %v589
      %v595 = vmul.f32 %v581, %v589
      %v596 = vmul.f32 %v582, %v589
      %v597 = vmul.f32 %v583, %v589
      %v598 = vmul.f32 %v584, %v589
      %v600 = vlaneseq
      %v601 = vshrl.u32 %v600, 7
      %v602 = vsub.s32 0, %v601
      %v603 = vrot.slane %v478, %v602
      %v605 = vadd.f32 %v591, %v603
      %v606 = vadd.f32 %v592, %v603
      %v607 = vadd.f32 %v593, %v603
      %v608 = vadd.f32 %v594, %v603
      %v609 = vadd.f32 %v595, %v603
      %v610 = vadd.f32 %v596, %v603
      %v611 = vadd.f32 %v597, %v603
      %v612 = vadd.f32 %v598, %v603
      %v613 = vld [vmem:[%s3] sm:$0xf]
      %v614 = vld [vmem:[%s3 + $0x4] sm:$0xf]
      %v615 = vld [vmem:[%s3 + $0x8] sm:$0xf]
      %v616 = vld [vmem:[%s3 + $0xc] sm:$0xf]
      %v617 = vpack.c.bf16 %v606, %v605
      %v618 = vpack.c.bf16 %v608, %v607
      %v619 = vpack.c.bf16 %v610, %v609
      %v620 = vpack.c.bf16 %v612, %v611
      %v621 = vld [vmem:[%s4] sm:$0x1]
      %v623 = vlaneseq
      %v624 = vshrl.u32 %v623, 7
      %v625 = vsub.s32 0, %v624
      %v626 = vrot.slane %v621, %v625
      %v632 = vunpack.c.l.b16 %v613
      %v633 = vunpack.c.l.b16 %v614
      %v634 = vunpack.c.l.b16 %v615
      %v635 = vunpack.c.l.b16 %v616
      %v636 = vpack.c.b16 %v633, %v632
      %v637 = vpack.c.b16 %v635, %v634
      %v641 = vsel %vm479, %v617, 0
      %v644 = vsel %vm479, %v618, 0
      %v647 = vsel %vm479, %v619, 0
      %v650 = vsel %vm479, %v620, 0
      %652 = vmatprep.subr.bf16.mxu0 0
      %653 = vmatpush1.bf16.msra.mxu0 %v636
      %654 = vmatprep.subr.bf16.mxu0 0
      %655 = vmatpush1.bf16.msra.mxu0 %v637
      %656 = vmatprep.subr.bf16.mxu0 0
      %657 = vmatpush1.bf16.msra.mxu0 0
      %658 = vmatprep.subr.bf16.mxu0 0
      %659 = vmatpush1.bf16.msra.mxu0 0
      %660 = vmatprep.subr.bf16.mxu0 0
      %661 = vmatpush1.bf16.msra.mxu0 0
      %662 = vmatprep.subr.bf16.mxu0 0
      %663 = vmatpush1.bf16.msra.mxu0 0
      %664 = vmatprep.subr.bf16.mxu0 0
      %665 = vmatpush1.bf16.msra.mxu0 0
      %666 = vmatprep.subr.bf16.mxu0 0
      %667 = vmatpush1.bf16.msra.mxu0 0
      %668 = vmatprep.subr.bf16.mxu0 0
      %669 = vmatpush1.bf16.msra.mxu0 0
      %670 = vmatprep.subr.bf16.mxu0 0
      %671 = vmatpush1.bf16.msra.mxu0 0
      %672 = vmatprep.subr.bf16.mxu0 0
      %673 = vmatpush1.bf16.msra.mxu0 0
      %674 = vmatprep.subr.bf16.mxu0 0
      %675 = vmatpush1.bf16.msra.mxu0 0
      %676 = vmatprep.subr.bf16.mxu0 0
      %677 = vmatpush1.bf16.msra.mxu0 0
      %678 = vmatprep.subr.bf16.mxu0 0
      %679 = vmatpush1.bf16.msra.mxu0 0
      %680 = vmatprep.subr.bf16.mxu0 0
      %681 = vmatpush1.bf16.msra.mxu0 0
      %682 = vmatprep.subr.bf16.mxu0 0
      %683 = vmatpush1.bf16.msra.mxu0 0
      %684 = vmatprep.mubr.bf16.mxu0 0
      %685 = vmatmul.mubr.bf16.gmra.mrb[0].mxu0 %v641
      %v686 = vpop.f32.mrb[0].mxu0
      %v687 = vadd.f32 %v626, %v686
      %v688 = vpop.f32.mrb[0].mxu0
      %v689 = vpop.f32.mrb[0].mxu0
      %v690 = vadd.f32 %v626, %v689
      %v691 = vpop.f32.mrb[0].mxu0
      %692 = vmatprep.mubr.bf16.mxu0 0
      %693 = vmatmul.mubr.bf16.gmra.mrb[0].mxu0 %v644
      %v694 = vpop.f32.mrb[0].mxu0
      %v695 = vadd.f32 %v626, %v694
      %v696 = vpop.f32.mrb[0].mxu0
      %v697 = vpop.f32.mrb[0].mxu0
      %v698 = vadd.f32 %v626, %v697
      %v699 = vpop.f32.mrb[0].mxu0
      %700 = vmatprep.mubr.bf16.mxu0 0
      %701 = vmatmul.mubr.bf16.gmra.mrb[0].mxu0 %v647
      %v702 = vpop.f32.mrb[0].mxu0
      %v703 = vadd.f32 %v626, %v702
      %v704 = vpop.f32.mrb[0].mxu0
      %v705 = vpop.f32.mrb[0].mxu0
      %v706 = vadd.f32 %v626, %v705
      %v707 = vpop.f32.mrb[0].mxu0
      %708 = vmatprep.mubr.bf16.mxu0 0
      %709 = vmatmul.mubr.bf16.gmra.mrb[0].mxu0 %v650
      %v710 = vpop.f32.mrb[0].mxu0
      %v711 = vadd.f32 %v626, %v710
      %v712 = vpop.f32.mrb[0].mxu0
      %v713 = vpop.f32.mrb[0].mxu0
      %v714 = vadd.f32 %v626, %v713
      %v715 = vpop.f32.mrb[0].mxu0
      %716 = vdwg.mxu0
      %v717 = vpack.c.bf16 %v690, %v687
      %v718 = vpack.c.bf16 %v698, %v695
      %v719 = vpack.c.bf16 %v706, %v703
      %v720 = vpack.c.bf16 %v714, %v711
      %725 = vrot.lane.b32.xlu0 %v717, 96
      %v726 = vpop.permute.xlu0 %725
      %727 = vrot.lane.b32.xlu0 %v718, 96
      %v728 = vpop.permute.xlu0 %727
      %729 = vrot.lane.b32.xlu0 %v719, 96
      %v730 = vpop.permute.xlu0 %729
      %731 = vrot.lane.b32.xlu0 %v720, 96
      %v732 = vpop.permute.xlu0 %731
      %vm733 = vcmask 130048
      %v735 = vsel %vm733, %v717, 0
      %v738 = vsel %vm733, %v718, 0
      %v741 = vsel %vm733, %v719, 0
      %v744 = vsel %vm733, %v720, 0
      %v747 = vsel %vm733, %v726, 0
      %v750 = vsel %vm733, %v728, 0
      %v753 = vsel %vm733, %v730, 0
      %v756 = vsel %vm733, %v732, 0
      %758 = vmatprep.subr.bf16.mxu0 0
      %759 = vmatpush1.bf16.xpose.msra.mxu0 %v747
      %760 = vmatprep.subr.bf16.mxu0 0
      %761 = vmatpush1.bf16.xpose.msra.mxu0 %v750
      %762 = vmatprep.subr.bf16.mxu0 0
      %763 = vmatpush1.bf16.xpose.msra.mxu0 %v753
      %764 = vmatprep.subr.bf16.mxu0 0
      %765 = vmatpush1.bf16.xpose.msra.mxu0 %v756
      %766 = vmatprep.subr.bf16.mxu0 0
      %767 = vmatpush1.bf16.xpose.msra.mxu0 0
      %768 = vmatprep.subr.bf16.mxu0 0
      %769 = vmatpush1.bf16.xpose.msra.mxu0 0
      %770 = vmatprep.subr.bf16.mxu0 0
      %771 = vmatpush1.bf16.xpose.msra.mxu0 0
      %772 = vmatprep.subr.bf16.mxu0 0
      %773 = vmatpush1.bf16.xpose.msra.mxu0 0
      %774 = vmatprep.subr.bf16.mxu0 0
      %775 = vmatpush1.bf16.xpose.msra.mxu0 0
      %776 = vmatprep.subr.bf16.mxu0 0
      %777 = vmatpush1.bf16.xpose.msra.mxu0 0
      %778 = vmatprep.subr.bf16.mxu0 0
      %779 = vmatpush1.bf16.xpose.msra.mxu0 0
      %780 = vmatprep.subr.bf16.mxu0 0
      %781 = vmatpush1.bf16.xpose.msra.mxu0 0
      %782 = vmatprep.subr.bf16.mxu0 0
      %783 = vmatpush1.bf16.xpose.msra.mxu0 0
      %784 = vmatprep.subr.bf16.mxu0 0
      %785 = vmatpush1.bf16.xpose.msra.mxu0 0
      %786 = vmatprep.subr.bf16.mxu0 0
      %787 = vmatpush1.bf16.xpose.msra.mxu0 0
      %788 = vmatprep.subr.bf16.mxu0 0
      %789 = vmatpush1.bf16.xpose.msra.mxu0 0
      %790 = vmatprep.mubr.bf16.mxu0 0
      %791 = vmatmul.mubr.bf16.gmra.mrb[0].mxu0 %v735
      %v792 = vpop.f32.mrb[0].mxu0
      %v793 = vadd.f32 0.0, %v792
      %v794 = vpop.f32.mrb[0].mxu0
      %v795 = vpop.f32.mrb[0].mxu0
      %v796 = vadd.f32 0.0, %v795
      %v797 = vpop.f32.mrb[0].mxu0
      %798 = vmatprep.mubr.bf16.mxu0 0
      %799 = vmatmul.mubr.bf16.gmra.mrb[0].mxu0 %v738
      %v800 = vpop.f32.mrb[0].mxu0
      %v801 = vadd.f32 0.0, %v800
      %v802 = vpop.f32.mrb[0].mxu0
      %v803 = vpop.f32.mrb[0].mxu0
      %v804 = vadd.f32 0.0, %v803
      %v805 = vpop.f32.mrb[0].mxu0
      %806 = vmatprep.mubr.bf16.mxu0 0
      %807 = vmatmul.mubr.bf16.gmra.mrb[0].mxu0 %v741
      %v808 = vpop.f32.mrb[0].mxu0
      %v809 = vadd.f32 0.0, %v808
      %v810 = vpop.f32.mrb[0].mxu0
      %v811 = vpop.f32.mrb[0].mxu0
      %v812 = vadd.f32 0.0, %v811
      %v813 = vpop.f32.mrb[0].mxu0
      %814 = vmatprep.mubr.bf16.mxu0 0
      %815 = vmatmul.mubr.bf16.gmra.mrb[0].mxu0 %v744
      %v816 = vpop.f32.mrb[0].mxu0
      %v817 = vadd.f32 0.0, %v816
      %v818 = vpop.f32.mrb[0].mxu0
      %v819 = vpop.f32.mrb[0].mxu0
      %v820 = vadd.f32 0.0, %v819
      %v821 = vpop.f32.mrb[0].mxu0
      %822 = vdwg.mxu0
      %v823 = vmul.f32 %v793, 0.25
      %v824 = vmul.f32 %v796, 0.25
      %v825 = vmul.f32 %v801, 0.25
      %v826 = vmul.f32 %v804, 0.25
      %v827 = vmul.f32 %v809, 0.25
      %v828 = vmul.f32 %v812, 0.25
      %v829 = vmul.f32 %v817, 0.25
      %v830 = vmul.f32 %v820, 0.25
      %v831 = vld [vmem:[%s5] sm:$0xff]
      %v832 = vld [vmem:[%s5 + $0x8] sm:$0xff]
      %v833 = vld [vmem:[%s5 + $0x10] sm:$0xff]
      %v834 = vld [vmem:[%s5 + $0x18] sm:$0xff]
      %v835 = vld [vmem:[%s5 + $0x20] sm:$0xff]
      %v836 = vld [vmem:[%s5 + $0x28] sm:$0xff]
      %v837 = vld [vmem:[%s5 + $0x30] sm:$0xff]
      %v838 = vld [vmem:[%s5 + $0x38] sm:$0xff]
      %v839 = vadd.f32 %v823, %v831
      %v840 = vadd.f32 %v824, %v832
      %v841 = vadd.f32 %v825, %v833
      %v842 = vadd.f32 %v826, %v834
      %v843 = vadd.f32 %v827, %v835
      %v844 = vadd.f32 %v828, %v836
      %v845 = vadd.f32 %v829, %v837
      %v846 = vadd.f32 %v830, %v838
      %vm847 = vcmask 523264
      %v848 = vsel %vm847, %v839, -inf
      %849 = vmax.xlane.f32.xlu0 %v848
      %v850 = vpop.xlane.xlu0 %849
      %v851 = vsel %vm847, %v840, -inf
      %852 = vmax.xlane.f32.xlu0 %v851
      %v853 = vpop.xlane.xlu0 %852
      %v854 = vsel %vm847, %v841, -inf
      %855 = vmax.xlane.f32.xlu0 %v854
      %v856 = vpop.xlane.xlu0 %855
      %v857 = vsel %vm847, %v842, -inf
      %858 = vmax.xlane.f32.xlu0 %v857
      %v859 = vpop.xlane.xlu0 %858
      %v860 = vsel %vm847, %v843, -inf
      %861 = vmax.xlane.f32.xlu0 %v860
      %v862 = vpop.xlane.xlu0 %861
      %v863 = vsel %vm847, %v844, -inf
      %864 = vmax.xlane.f32.xlu0 %v863
      %v865 = vpop.xlane.xlu0 %864
      %v866 = vsel %vm847, %v845, -inf
      %867 = vmax.xlane.f32.xlu0 %v866
      %v868 = vpop.xlane.xlu0 %867
      %v869 = vsel %vm847, %v846, -inf
      %870 = vmax.xlane.f32.xlu0 %v869
      %v871 = vpop.xlane.xlu0 %870
      %v872 = vsub.f32 %v839, %v850
      %v873 = vsub.f32 %v840, %v853
      %v874 = vsub.f32 %v841, %v856
      %v875 = vsub.f32 %v842, %v859
      %v876 = vsub.f32 %v843, %v862
      %v877 = vsub.f32 %v844, %v865
      %v878 = vsub.f32 %v845, %v868
      %v879 = vsub.f32 %v846, %v871
      %v880 = vmul.f32 %v872, 1.442695
      %v881 = vpow.pop %v880
      %v882 = vmul.f32 %v873, 1.442695
      %v883 = vpow.pop %v882
      %v884 = vmul.f32 %v874, 1.442695
      %v885 = vpow.pop %v884
      %v886 = vmul.f32 %v875, 1.442695
      %v887 = vpow.pop %v886
      %v888 = vmul.f32 %v876, 1.442695
      %v889 = vpow.pop %v888
      %v890 = vmul.f32 %v877, 1.442695
      %v891 = vpow.pop %v890
      %v892 = vmul.f32 %v878, 1.442695
      %v893 = vpow.pop %v892
      %v894 = vmul.f32 %v879, 1.442695
      %v895 = vpow.pop %v894
      %v896 = vsel %vm847, %v881, 0.0
      %897 = vadd.xlane.f32.xlu0 %v896
      %v898 = vpop.xlane.xlu0 %897
      %v899 = vsel %vm847, %v883, 0.0
      %900 = vadd.xlane.f32.xlu0 %v899
      %v901 = vpop.xlane.xlu0 %900
      %v902 = vsel %vm847, %v885, 0.0
      %903 = vadd.xlane.f32.xlu0 %v902
      %v904 = vpop.xlane.xlu0 %903
      %v905 = vsel %vm847, %v887, 0.0
      %906 = vadd.xlane.f32.xlu0 %v905
      %v907 = vpop.xlane.xlu0 %906
      %v908 = vsel %vm847, %v889, 0.0
      %909 = vadd.xlane.f32.xlu0 %v908
      %v910 = vpop.xlane.xlu0 %909
      %v911 = vsel %vm847, %v891, 0.0
      %912 = vadd.xlane.f32.xlu0 %v911
      %v913 = vpop.xlane.xlu0 %912
      %v914 = vsel %vm847, %v893, 0.0
      %915 = vadd.xlane.f32.xlu0 %v914
      %v916 = vpop.xlane.xlu0 %915
      %v917 = vsel %vm847, %v895, 0.0
      %918 = vadd.xlane.f32.xlu0 %v917
      %v919 = vpop.xlane.xlu0 %918
      %v920 = vrcp.pop %v898
      %v921 = vrcp.pop %v901
      %v922 = vrcp.pop %v904
      %v923 = vrcp.pop %v907
      %v924 = vrcp.pop %v910
      %v925 = vrcp.pop %v913
      %v926 = vrcp.pop %v916
      %v927 = vrcp.pop %v919
      %v928 = vmul.f32 %v881, %v920
      %v929 = vmul.f32 %v883, %v921
      %v930 = vmul.f32 %v885, %v922
      %v931 = vmul.f32 %v887, %v923
      %v932 = vmul.f32 %v889, %v924
      %v933 = vmul.f32 %v891, %v925
      %v934 = vmul.f32 %v893, %v926
      %v935 = vmul.f32 %v895, %v927
      %v936 = vpack.c.bf16 %v929, %v928
      %v937 = vpack.c.bf16 %v931, %v930
      %v938 = vpack.c.bf16 %v933, %v932
      %v939 = vpack.c.bf16 %v935, %v934
      %940 = vrot.lane.b32.xlu0 %v717, 64
      %v941 = vpop.permute.xlu0 %940
      %942 = vrot.lane.b32.xlu0 %v718, 64
      %v943 = vpop.permute.xlu0 %942
      %944 = vrot.lane.b32.xlu0 %v719, 64
      %v945 = vpop.permute.xlu0 %944
      %946 = vrot.lane.b32.xlu0 %v720, 64
      %v947 = vpop.permute.xlu0 %946
      %v953 = vsel %vm847, %v936, 0
      %v956 = vsel %vm847, %v937, 0
      %v959 = vsel %vm847, %v938, 0
      %v962 = vsel %vm847, %v939, 0
      %964 = vmatprep.subr.bf16.mxu0 0
      %965 = vmatpush1.bf16.msra.mxu0 %v941
      %966 = vmatprep.subr.bf16.mxu0 0
      %967 = vmatpush1.bf16.msra.mxu0 %v943
      %968 = vmatprep.subr.bf16.mxu0 0
      %969 = vmatpush1.bf16.msra.mxu0 %v945
      %970 = vmatprep.subr.bf16.mxu0 0
      %971 = vmatpush1.bf16.msra.mxu0 %v947
      %972 = vmatprep.subr.bf16.mxu0 0
      %973 = vmatpush1.bf16.msra.mxu0 0
      %974 = vmatprep.subr.bf16.mxu0 0
      %975 = vmatpush1.bf16.msra.mxu0 0
      %976 = vmatprep.subr.bf16.mxu0 0
      %977 = vmatpush1.bf16.msra.mxu0 0
      %978 = vmatprep.subr.bf16.mxu0 0
      %979 = vmatpush1.bf16.msra.mxu0 0
      %980 = vmatprep.subr.bf16.mxu0 0
      %981 = vmatpush1.bf16.msra.mxu0 0
      %982 = vmatprep.subr.bf16.mxu0 0
      %983 = vmatpush1.bf16.msra.mxu0 0
      %984 = vmatprep.subr.bf16.mxu0 0
      %985 = vmatpush1.bf16.msra.mxu0 0
      %986 = vmatprep.subr.bf16.mxu0 0
      %987 = vmatpush1.bf16.msra.mxu0 0
      %988 = vmatprep.subr.bf16.mxu0 0
      %989 = vmatpush1.bf16.msra.mxu0 0
      %990 = vmatprep.subr.bf16.mxu0 0
      %991 = vmatpush1.bf16.msra.mxu0 0
      %992 = vmatprep.subr.bf16.mxu0 0
      %993 = vmatpush1.bf16.msra.mxu0 0
      %994 = vmatprep.subr.bf16.mxu0 0
      %995 = vmatpush1.bf16.msra.mxu0 0
      %996 = vmatprep.mubr.bf16.mxu0 0
      %997 = vmatmul.mubr.bf16.gmra.mrb[0].mxu0 %v953
      %v998 = vpop.f32.mrb[0].mxu0
      %v999 = vadd.f32 0.0, %v998
      %v1000 = vpop.f32.mrb[0].mxu0
      %v1001 = vpop.f32.mrb[0].mxu0
      %v1002 = vadd.f32 0.0, %v1001
      %v1003 = vpop.f32.mrb[0].mxu0
      %1004 = vmatprep.mubr.bf16.mxu0 0
      %1005 = vmatmul.mubr.bf16.gmra.mrb[0].mxu0 %v956
      %v1006 = vpop.f32.mrb[0].mxu0
      %v1007 = vadd.f32 0.0, %v1006
      %v1008 = vpop.f32.mrb[0].mxu0
      %v1009 = vpop.f32.mrb[0].mxu0
      %v1010 = vadd.f32 0.0, %v1009
      %v1011 = vpop.f32.mrb[0].mxu0
      %1012 = vmatprep.mubr.bf16.mxu0 0
      %1013 = vmatmul.mubr.bf16.gmra.mrb[0].mxu0 %v959
      %v1014 = vpop.f32.mrb[0].mxu0
      %v1015 = vadd.f32 0.0, %v1014
      %v1016 = vpop.f32.mrb[0].mxu0
      %v1017 = vpop.f32.mrb[0].mxu0
      %v1018 = vadd.f32 0.0, %v1017
      %v1019 = vpop.f32.mrb[0].mxu0
      %1020 = vmatprep.mubr.bf16.mxu0 0
      %1021 = vmatmul.mubr.bf16.gmra.mrb[0].mxu0 %v962
      %v1022 = vpop.f32.mrb[0].mxu0
      %v1023 = vadd.f32 0.0, %v1022
      %v1024 = vpop.f32.mrb[0].mxu0
      %v1025 = vpop.f32.mrb[0].mxu0
      %v1026 = vadd.f32 0.0, %v1025
      %v1027 = vpop.f32.mrb[0].mxu0
      %1028 = vdwg.mxu0
      %1029 = vrot.lane.b32.xlu0 %v717, 112
      %v1030 = vpop.permute.xlu0 %1029
      %1031 = vrot.lane.b32.xlu0 %v718, 112
      %v1032 = vpop.permute.xlu0 %1031
      %1033 = vrot.lane.b32.xlu0 %v719, 112
      %v1034 = vpop.permute.xlu0 %1033
      %1035 = vrot.lane.b32.xlu0 %v720, 112
      %v1036 = vpop.permute.xlu0 %1035
      %1037 = vrot.lane.b32.xlu0 %v717, 80
      %v1038 = vpop.permute.xlu0 %1037
      %1039 = vrot.lane.b32.xlu0 %v718, 80
      %v1040 = vpop.permute.xlu0 %1039
      %1041 = vrot.lane.b32.xlu0 %v719, 80
      %v1042 = vpop.permute.xlu0 %1041
      %1043 = vrot.lane.b32.xlu0 %v720, 80
      %v1044 = vpop.permute.xlu0 %1043
      %v1046 = vsel %vm733, %v1030, 0
      %v1049 = vsel %vm733, %v1032, 0
      %v1052 = vsel %vm733, %v1034, 0
      %v1055 = vsel %vm733, %v1036, 0
      %v1058 = vsel %vm733, %v1038, 0
      %v1061 = vsel %vm733, %v1040, 0
      %v1064 = vsel %vm733, %v1042, 0
      %v1067 = vsel %vm733, %v1044, 0
      %1069 = vmatprep.subr.bf16.mxu0 0
      %1070 = vmatpush1.bf16.xpose.msra.mxu0 %v1058
      %1071 = vmatprep.subr.bf16.mxu0 0
      %1072 = vmatpush1.bf16.xpose.msra.mxu0 %v1061
      %1073 = vmatprep.subr.bf16.mxu0 0
      %1074 = vmatpush1.bf16.xpose.msra.mxu0 %v1064
      %1075 = vmatprep.subr.bf16.mxu0 0
      %1076 = vmatpush1.bf16.xpose.msra.mxu0 %v1067
      %1077 = vmatprep.subr.bf16.mxu0 0
      %1078 = vmatpush1.bf16.xpose.msra.mxu0 0
      %1079 = vmatprep.subr.bf16.mxu0 0
      %1080 = vmatpush1.bf16.xpose.msra.mxu0 0
      %1081 = vmatprep.subr.bf16.mxu0 0
      %1082 = vmatpush1.bf16.xpose.msra.mxu0 0
      %1083 = vmatprep.subr.bf16.mxu0 0
      %1084 = vmatpush1.bf16.xpose.msra.mxu0 0
      %1085 = vmatprep.subr.bf16.mxu0 0
      %1086 = vmatpush1.bf16.xpose.msra.mxu0 0
      %1087 = vmatprep.subr.bf16.mxu0 0
      %1088 = vmatpush1.bf16.xpose.msra.mxu0 0
      %1089 = vmatprep.subr.bf16.mxu0 0
      %1090 = vmatpush1.bf16.xpose.msra.mxu0 0
      %1091 = vmatprep.subr.bf16.mxu0 0
      %1092 = vmatpush1.bf16.xpose.msra.mxu0 0
      %1093 = vmatprep.subr.bf16.mxu0 0
      %1094 = vmatpush1.bf16.xpose.msra.mxu0 0
      %1095 = vmatprep.subr.bf16.mxu0 0
      %1096 = vmatpush1.bf16.xpose.msra.mxu0 0
      %1097 = vmatprep.subr.bf16.mxu0 0
      %1098 = vmatpush1.bf16.xpose.msra.mxu0 0
      %1099 = vmatprep.subr.bf16.mxu0 0
      %1100 = vmatpush1.bf16.xpose.msra.mxu0 0
      %1101 = vmatprep.mubr.bf16.mxu0 0
      %1102 = vmatmul.mubr.bf16.gmra.mrb[0].mxu0 %v1046
      %v1103 = vpop.f32.mrb[0].mxu0
      %v1104 = vadd.f32 0.0, %v1103
      %v1105 = vpop.f32.mrb[0].mxu0
      %v1106 = vpop.f32.mrb[0].mxu0
      %v1107 = vadd.f32 0.0, %v1106
      %v1108 = vpop.f32.mrb[0].mxu0
      %1109 = vmatprep.mubr.bf16.mxu0 0
      %1110 = vmatmul.mubr.bf16.gmra.mrb[0].mxu0 %v1049
      %v1111 = vpop.f32.mrb[0].mxu0
      %v1112 = vadd.f32 0.0, %v1111
      %v1113 = vpop.f32.mrb[0].mxu0
      %v1114 = vpop.f32.mrb[0].mxu0
      %v1115 = vadd.f32 0.0, %v1114
      %v1116 = vpop.f32.mrb[0].mxu0
      %1117 = vmatprep.mubr.bf16.mxu0 0
      %1118 = vmatmul.mubr.bf16.gmra.mrb[0].mxu0 %v1052
      %v1119 = vpop.f32.mrb[0].mxu0
      %v1120 = vadd.f32 0.0, %v1119
      %v1121 = vpop.f32.mrb[0].mxu0
      %v1122 = vpop.f32.mrb[0].mxu0
      %v1123 = vadd.f32 0.0, %v1122
      %v1124 = vpop.f32.mrb[0].mxu0
      %1125 = vmatprep.mubr.bf16.mxu0 0
      %1126 = vmatmul.mubr.bf16.gmra.mrb[0].mxu0 %v1055
      %v1127 = vpop.f32.mrb[0].mxu0
      %v1128 = vadd.f32 0.0, %v1127
      %v1129 = vpop.f32.mrb[0].mxu0
      %v1130 = vpop.f32.mrb[0].mxu0
      %v1131 = vadd.f32 0.0, %v1130
      %v1132 = vpop.f32.mrb[0].mxu0
      %1133 = vdwg.mxu0
      %v1134 = vmul.f32 %v1104, 0.25
      %v1135 = vmul.f32 %v1107, 0.25
      %v1136 = vmul.f32 %v1112, 0.25
      %v1137 = vmul.f32 %v1115, 0.25
      %v1138 = vmul.f32 %v1120, 0.25
      %v1139 = vmul.f32 %v1123, 0.25
      %v1140 = vmul.f32 %v1128, 0.25
      %v1141 = vmul.f32 %v1131, 0.25
      %s1142 = scalar_lea.vmem %s5, 64
      %v1143 = vld [vmem:[%s1142] sm:$0xff]
      %v1144 = vld [vmem:[%s1142 + $0x8] sm:$0xff]
      %v1145 = vld [vmem:[%s1142 + $0x10] sm:$0xff]
      %v1146 = vld [vmem:[%s1142 + $0x18] sm:$0xff]
      %v1147 = vld [vmem:[%s1142 + $0x20] sm:$0xff]
      %v1148 = vld [vmem:[%s1142 + $0x28] sm:$0xff]
      %v1149 = vld [vmem:[%s1142 + $0x30] sm:$0xff]
      %v1150 = vld [vmem:[%s1142 + $0x38] sm:$0xff]
      %v1151 = vadd.f32 %v1134, %v1143
      %v1152 = vadd.f32 %v1135, %v1144
      %v1153 = vadd.f32 %v1136, %v1145
      %v1154 = vadd.f32 %v1137, %v1146
      %v1155 = vadd.f32 %v1138, %v1147
      %v1156 = vadd.f32 %v1139, %v1148
      %v1157 = vadd.f32 %v1140, %v1149
      %v1158 = vadd.f32 %v1141, %v1150
      %v1159 = vsel %vm847, %v1151, -inf
      %1160 = vmax.xlane.f32.xlu0 %v1159
      %v1161 = vpop.xlane.xlu0 %1160
      %v1162 = vsel %vm847, %v1152, -inf
      %1163 = vmax.xlane.f32.xlu0 %v1162
      %v1164 = vpop.xlane.xlu0 %1163
      %v1165 = vsel %vm847, %v1153, -inf
      %1166 = vmax.xlane.f32.xlu0 %v1165
      %v1167 = vpop.xlane.xlu0 %1166
      %v1168 = vsel %vm847, %v1154, -inf
      %1169 = vmax.xlane.f32.xlu0 %v1168
      %v1170 = vpop.xlane.xlu0 %1169
      %v1171 = vsel %vm847, %v1155, -inf
      %1172 = vmax.xlane.f32.xlu0 %v1171
      %v1173 = vpop.xlane.xlu0 %1172
      %v1174 = vsel %vm847, %v1156, -inf
      %1175 = vmax.xlane.f32.xlu0 %v1174
      %v1176 = vpop.xlane.xlu0 %1175
      %v1177 = vsel %vm847, %v1157, -inf
      %1178 = vmax.xlane.f32.xlu0 %v1177
      %v1179 = vpop.xlane.xlu0 %1178
      %v1180 = vsel %vm847, %v1158, -inf
      %1181 = vmax.xlane.f32.xlu0 %v1180
      %v1182 = vpop.xlane.xlu0 %1181
      %v1183 = vsub.f32 %v1151, %v1161
      %v1184 = vsub.f32 %v1152, %v1164
      %v1185 = vsub.f32 %v1153, %v1167
      %v1186 = vsub.f32 %v1154, %v1170
      %v1187 = vsub.f32 %v1155, %v1173
      %v1188 = vsub.f32 %v1156, %v1176
      %v1189 = vsub.f32 %v1157, %v1179
      %v1190 = vsub.f32 %v1158, %v1182
      %v1191 = vmul.f32 %v1183, 1.442695
      %v1192 = vpow.pop %v1191
      %v1193 = vmul.f32 %v1184, 1.442695
      %v1194 = vpow.pop %v1193
      %v1195 = vmul.f32 %v1185, 1.442695
      %v1196 = vpow.pop %v1195
      %v1197 = vmul.f32 %v1186, 1.442695
      %v1198 = vpow.pop %v1197
      %v1199 = vmul.f32 %v1187, 1.442695
      %v1200 = vpow.pop %v1199
      %v1201 = vmul.f32 %v1188, 1.442695
      %v1202 = vpow.pop %v1201
      %v1203 = vmul.f32 %v1189, 1.442695
      %v1204 = vpow.pop %v1203
      %v1205 = vmul.f32 %v1190, 1.442695
      %v1206 = vpow.pop %v1205
      %v1207 = vsel %vm847, %v1192, 0.0
      %1208 = vadd.xlane.f32.xlu0 %v1207
      %v1209 = vpop.xlane.xlu0 %1208
      %v1210 = vsel %vm847, %v1194, 0.0
      %1211 = vadd.xlane.f32.xlu0 %v1210
      %v1212 = vpop.xlane.xlu0 %1211
      %v1213 = vsel %vm847, %v1196, 0.0
      %1214 = vadd.xlane.f32.xlu0 %v1213
      %v1215 = vpop.xlane.xlu0 %1214
      %v1216 = vsel %vm847, %v1198, 0.0
      %1217 = vadd.xlane.f32.xlu0 %v1216
      %v1218 = vpop.xlane.xlu0 %1217
      %v1219 = vsel %vm847, %v1200, 0.0
      %1220 = vadd.xlane.f32.xlu0 %v1219
      %v1221 = vpop.xlane.xlu0 %1220
      %v1222 = vsel %vm847, %v1202, 0.0
      %1223 = vadd.xlane.f32.xlu0 %v1222
      %v1224 = vpop.xlane.xlu0 %1223
      %v1225 = vsel %vm847, %v1204, 0.0
      %1226 = vadd.xlane.f32.xlu0 %v1225
      %v1227 = vpop.xlane.xlu0 %1226
      %v1228 = vsel %vm847, %v1206, 0.0
      %1229 = vadd.xlane.f32.xlu0 %v1228
      %v1230 = vpop.xlane.xlu0 %1229
      %v1231 = vrcp.pop %v1209
      %v1232 = vrcp.pop %v1212
      %v1233 = vrcp.pop %v1215
      %v1234 = vrcp.pop %v1218
      %v1235 = vrcp.pop %v1221
      %v1236 = vrcp.pop %v1224
      %v1237 = vrcp.pop %v1227
      %v1238 = vrcp.pop %v1230
      %v1239 = vmul.f32 %v1192, %v1231
      %v1240 = vmul.f32 %v1194, %v1232
      %v1241 = vmul.f32 %v1196, %v1233
      %v1242 = vmul.f32 %v1198, %v1234
      %v1243 = vmul.f32 %v1200, %v1235
      %v1244 = vmul.f32 %v1202, %v1236
      %v1245 = vmul.f32 %v1204, %v1237
      %v1246 = vmul.f32 %v1206, %v1238
      %v1247 = vpack.c.bf16 %v1240, %v1239
      %v1248 = vpack.c.bf16 %v1242, %v1241
      %v1249 = vpack.c.bf16 %v1244, %v1243
      %v1250 = vpack.c.bf16 %v1246, %v1245
      %1251 = vrot.lane.b32.xlu0 %v717, 48
      %v1252 = vpop.permute.xlu0 %1251
      %1253 = vrot.lane.b32.xlu0 %v718, 48
      %v1254 = vpop.permute.xlu0 %1253
      %1255 = vrot.lane.b32.xlu0 %v719, 48
      %v1256 = vpop.permute.xlu0 %1255
      %1257 = vrot.lane.b32.xlu0 %v720, 48
      %v1258 = vpop.permute.xlu0 %1257
      %v1264 = vsel %vm847, %v1247, 0
      %v1267 = vsel %vm847, %v1248, 0
      %v1270 = vsel %vm847, %v1249, 0
      %v1273 = vsel %vm847, %v1250, 0
      %1275 = vmatprep.subr.bf16.mxu0 0
      %1276 = vmatpush1.bf16.msra.mxu0 %v1252
      %1277 = vmatprep.subr.bf16.mxu0 0
      %1278 = vmatpush1.bf16.msra.mxu0 %v1254
      %1279 = vmatprep.subr.bf16.mxu0 0
      %1280 = vmatpush1.bf16.msra.mxu0 %v1256
      %1281 = vmatprep.subr.bf16.mxu0 0
      %1282 = vmatpush1.bf16.msra.mxu0 %v1258
      %1283 = vmatprep.subr.bf16.mxu0 0
      %1284 = vmatpush1.bf16.msra.mxu0 0
      %1285 = vmatprep.subr.bf16.mxu0 0
      %1286 = vmatpush1.bf16.msra.mxu0 0
      %1287 = vmatprep.subr.bf16.mxu0 0
      %1288 = vmatpush1.bf16.msra.mxu0 0
      %1289 = vmatprep.subr.bf16.mxu0 0
      %1290 = vmatpush1.bf16.msra.mxu0 0
      %1291 = vmatprep.subr.bf16.mxu0 0
      %1292 = vmatpush1.bf16.msra.mxu0 0
      %1293 = vmatprep.subr.bf16.mxu0 0
      %1294 = vmatpush1.bf16.msra.mxu0 0
      %1295 = vmatprep.subr.bf16.mxu0 0
      %1296 = vmatpush1.bf16.msra.mxu0 0
      %1297 = vmatprep.subr.bf16.mxu0 0
      %1298 = vmatpush1.bf16.msra.mxu0 0
      %1299 = vmatprep.subr.bf16.mxu0 0
      %1300 = vmatpush1.bf16.msra.mxu0 0
      %1301 = vmatprep.subr.bf16.mxu0 0
      %1302 = vmatpush1.bf16.msra.mxu0 0
      %1303 = vmatprep.subr.bf16.mxu0 0
      %1304 = vmatpush1.bf16.msra.mxu0 0
      %1305 = vmatprep.subr.bf16.mxu0 0
      %1306 = vmatpush1.bf16.msra.mxu0 0
      %1307 = vmatprep.mubr.bf16.mxu0 0
      %1308 = vmatmul.mubr.bf16.gmra.mrb[0].mxu0 %v1264
      %v1309 = vpop.f32.mrb[0].mxu0
      %v1310 = vadd.f32 0.0, %v1309
      %v1311 = vpop.f32.mrb[0].mxu0
      %v1312 = vpop.f32.mrb[0].mxu0
      %v1313 = vadd.f32 0.0, %v1312
      %v1314 = vpop.f32.mrb[0].mxu0
      %1315 = vmatprep.mubr.bf16.mxu0 0
      %1316 = vmatmul.mubr.bf16.gmra.mrb[0].mxu0 %v1267
      %v1317 = vpop.f32.mrb[0].mxu0
      %v1318 = vadd.f32 0.0, %v1317
      %v1319 = vpop.f32.mrb[0].mxu0
      %v1320 = vpop.f32.mrb[0].mxu0
      %v1321 = vadd.f32 0.0, %v1320
      %v1322 = vpop.f32.mrb[0].mxu0
      %1323 = vmatprep.mubr.bf16.mxu0 0
      %1324 = vmatmul.mubr.bf16.gmra.mrb[0].mxu0 %v1270
      %v1325 = vpop.f32.mrb[0].mxu0
      %v1326 = vadd.f32 0.0, %v1325
      %v1327 = vpop.f32.mrb[0].mxu0
      %v1328 = vpop.f32.mrb[0].mxu0
      %v1329 = vadd.f32 0.0, %v1328
      %v1330 = vpop.f32.mrb[0].mxu0
      %1331 = vmatprep.mubr.bf16.mxu0 0
      %1332 = vmatmul.mubr.bf16.gmra.mrb[0].mxu0 %v1273
      %v1333 = vpop.f32.mrb[0].mxu0
      %v1334 = vadd.f32 0.0, %v1333
      %v1335 = vpop.f32.mrb[0].mxu0
      %v1336 = vpop.f32.mrb[0].mxu0
      %v1337 = vadd.f32 0.0, %v1336
      %v1338 = vpop.f32.mrb[0].mxu0
      %1339 = vdwg.mxu0
      %1348 = vrot.lane.b32.xlu0 %v1310, 16
      %v1349 = vpop.permute.xlu0 %1348
      %1350 = vrot.lane.b32.xlu0 %v1313, 16
      %v1351 = vpop.permute.xlu0 %1350
      %1352 = vrot.lane.b32.xlu0 %v1318, 16
      %v1353 = vpop.permute.xlu0 %1352
      %1354 = vrot.lane.b32.xlu0 %v1321, 16
      %v1355 = vpop.permute.xlu0 %1354
      %1356 = vrot.lane.b32.xlu0 %v1326, 16
      %v1357 = vpop.permute.xlu0 %1356
      %1358 = vrot.lane.b32.xlu0 %v1329, 16
      %v1359 = vpop.permute.xlu0 %1358
      %1360 = vrot.lane.b32.xlu0 %v1334, 16
      %v1361 = vpop.permute.xlu0 %1360
      %1362 = vrot.lane.b32.xlu0 %v1337, 16
      %v1363 = vpop.permute.xlu0 %1362
      %v1372 = vsel %vm733, %v999, %v1349
      %v1373 = vsel %vm733, %v1002, %v1351
      %v1374 = vsel %vm733, %v1007, %v1353
      %v1375 = vsel %vm733, %v1010, %v1355
      %v1376 = vsel %vm733, %v1015, %v1357
      %v1377 = vsel %vm733, %v1018, %v1359
      %v1378 = vsel %vm733, %v1023, %v1361
      %v1379 = vsel %vm733, %v1026, %v1363
      %v1380 = vld [vmem:[%s6] sm:$0xf]
      %v1381 = vld [vmem:[%s6 + $0x4] sm:$0xf]
      %v1382 = vld [vmem:[%s6 + $0x8] sm:$0xf]
      %v1383 = vld [vmem:[%s6 + $0xc] sm:$0xf]
      %v1384 = vpack.c.bf16 %v1373, %v1372
      %v1385 = vpack.c.bf16 %v1375, %v1374
      %v1386 = vpack.c.bf16 %v1377, %v1376
      %v1387 = vpack.c.bf16 %v1379, %v1378
      %v1392 = vunpack.c.l.b16 %v1380
      %v1393 = vunpack.c.l.b16 %v1381
      %v1394 = vunpack.c.l.b16 %v1382
      %v1395 = vunpack.c.l.b16 %v1383
      %v1396 = vpack.c.b16 %v1393, %v1392
      %v1397 = vpack.c.b16 %v1395, %v1394
      %v1401 = vsel %vm479, %v1384, 0
      %v1404 = vsel %vm479, %v1385, 0
      %v1407 = vsel %vm479, %v1386, 0
      %v1410 = vsel %vm479, %v1387, 0
      %1412 = vmatprep.subr.bf16.mxu0 0
      %1413 = vmatpush1.bf16.msra.mxu0 %v1396
      %1414 = vmatprep.subr.bf16.mxu0 0
      %1415 = vmatpush1.bf16.msra.mxu0 %v1397
      %1416 = vmatprep.subr.bf16.mxu0 0
      %1417 = vmatpush1.bf16.msra.mxu0 0
      %1418 = vmatprep.subr.bf16.mxu0 0
      %1419 = vmatpush1.bf16.msra.mxu0 0
      %1420 = vmatprep.subr.bf16.mxu0 0
      %1421 = vmatpush1.bf16.msra.mxu0 0
      %1422 = vmatprep.subr.bf16.mxu0 0
      %1423 = vmatpush1.bf16.msra.mxu0 0
      %1424 = vmatprep.subr.bf16.mxu0 0
      %1425 = vmatpush1.bf16.msra.mxu0 0
      %1426 = vmatprep.subr.bf16.mxu0 0
      %1427 = vmatpush1.bf16.msra.mxu0 0
      %1428 = vmatprep.subr.bf16.mxu0 0
      %1429 = vmatpush1.bf16.msra.mxu0 0
      %1430 = vmatprep.subr.bf16.mxu0 0
      %1431 = vmatpush1.bf16.msra.mxu0 0
      %1432 = vmatprep.subr.bf16.mxu0 0
      %1433 = vmatpush1.bf16.msra.mxu0 0
      %1434 = vmatprep.subr.bf16.mxu0 0
      %1435 = vmatpush1.bf16.msra.mxu0 0
      %1436 = vmatprep.subr.bf16.mxu0 0
      %1437 = vmatpush1.bf16.msra.mxu0 0
      %1438 = vmatprep.subr.bf16.mxu0 0
      %1439 = vmatpush1.bf16.msra.mxu0 0
      %1440 = vmatprep.subr.bf16.mxu0 0
      %1441 = vmatpush1.bf16.msra.mxu0 0
      %1442 = vmatprep.subr.bf16.mxu0 0
      %1443 = vmatpush1.bf16.msra.mxu0 0
      %1444 = vmatprep.mubr.bf16.mxu0 0
      %1445 = vmatmul.mubr.bf16.gmra.mrb[0].mxu0 %v1401
      %v1446 = vpop.f32.mrb[0].mxu0
      %v1447 = vadd.f32 0.0, %v1446
      %v1448 = vpop.f32.mrb[0].mxu0
      %v1449 = vpop.f32.mrb[0].mxu0
      %v1450 = vadd.f32 0.0, %v1449
      %v1451 = vpop.f32.mrb[0].mxu0
      %1452 = vmatprep.mubr.bf16.mxu0 0
      %1453 = vmatmul.mubr.bf16.gmra.mrb[0].mxu0 %v1404
      %v1454 = vpop.f32.mrb[0].mxu0
      %v1455 = vadd.f32 0.0, %v1454
      %v1456 = vpop.f32.mrb[0].mxu0
      %v1457 = vpop.f32.mrb[0].mxu0
      %v1458 = vadd.f32 0.0, %v1457
      %v1459 = vpop.f32.mrb[0].mxu0
      %1460 = vmatprep.mubr.bf16.mxu0 0
      %1461 = vmatmul.mubr.bf16.gmra.mrb[0].mxu0 %v1407
      %v1462 = vpop.f32.mrb[0].mxu0
      %v1463 = vadd.f32 0.0, %v1462
      %v1464 = vpop.f32.mrb[0].mxu0
      %v1465 = vpop.f32.mrb[0].mxu0
      %v1466 = vadd.f32 0.0, %v1465
      %v1467 = vpop.f32.mrb[0].mxu0
      %1468 = vmatprep.mubr.bf16.mxu0 0
      %1469 = vmatmul.mubr.bf16.gmra.mrb[0].mxu0 %v1410
      %v1470 = vpop.f32.mrb[0].mxu0
      %v1471 = vadd.f32 0.0, %v1470
      %v1472 = vpop.f32.mrb[0].mxu0
      %v1473 = vpop.f32.mrb[0].mxu0
      %v1474 = vadd.f32 0.0, %v1473
      %v1475 = vpop.f32.mrb[0].mxu0
      %1476 = vdwg.mxu0
      %v1477 = vadd.f32 %v469, %v1447
      %v1478 = vadd.f32 %v470, %v1450
      %v1479 = vadd.f32 %v471, %v1455
      %v1480 = vadd.f32 %v472, %v1458
      %v1481 = vadd.f32 %v473, %v1463
      %v1482 = vadd.f32 %v474, %v1466
      %v1483 = vadd.f32 %v475, %v1471
      %v1484 = vadd.f32 %v476, %v1474
      %v1485 = vld [vmem:[%s7] sm:$0x1]
      %v1487 = vlaneseq
      %v1488 = vshrl.u32 %v1487, 7
      %v1489 = vsub.s32 0, %v1488
      %v1490 = vrot.slane %v1485, %v1489
      %v1492 = vadd.f32 %v1477, %v1490
      %v1493 = vadd.f32 %v1478, %v1490
      %v1494 = vadd.f32 %v1479, %v1490
      %v1495 = vadd.f32 %v1480, %v1490
      %v1496 = vadd.f32 %v1481, %v1490
      %v1497 = vadd.f32 %v1482, %v1490
      %v1498 = vadd.f32 %v1483, %v1490
      %v1499 = vadd.f32 %v1484, %v1490
      %v1500 = vld [vmem:[%s8] sm:$0x1]
      %v1501 = vld [vmem:[%s9] sm:$0x1]
      %v1502 = vsel %vm479, %v1492, 0.0
      %1503 = vadd.xlane.f32.xlu0 %v1502
      %v1504 = vpop.xlane.xlu0 %1503
      %v1505 = vsel %vm479, %v1493, 0.0
      %1506 = vadd.xlane.f32.xlu0 %v1505
      %v1507 = vpop.xlane.xlu0 %1506
      %v1508 = vsel %vm479, %v1494, 0.0
      %1509 = vadd.xlane.f32.xlu0 %v1508
      %v1510 = vpop.xlane.xlu0 %1509
      %v1511 = vsel %vm479, %v1495, 0.0
      %1512 = vadd.xlane.f32.xlu0 %v1511
      %v1513 = vpop.xlane.xlu0 %1512
      %v1514 = vsel %vm479, %v1496, 0.0
      %1515 = vadd.xlane.f32.xlu0 %v1514
      %v1516 = vpop.xlane.xlu0 %1515
      %v1517 = vsel %vm479, %v1497, 0.0
      %1518 = vadd.xlane.f32.xlu0 %v1517
      %v1519 = vpop.xlane.xlu0 %1518
      %v1520 = vsel %vm479, %v1498, 0.0
      %1521 = vadd.xlane.f32.xlu0 %v1520
      %v1522 = vpop.xlane.xlu0 %1521
      %v1523 = vsel %vm479, %v1499, 0.0
      %1524 = vadd.xlane.f32.xlu0 %v1523
      %v1525 = vpop.xlane.xlu0 %1524
      %v1526 = vmul.f32 %v1504, %v504
      %v1527 = vmul.f32 %v1507, %v504
      %v1528 = vmul.f32 %v1510, %v504
      %v1529 = vmul.f32 %v1513, %v504
      %v1530 = vmul.f32 %v1516, %v504
      %v1531 = vmul.f32 %v1519, %v504
      %v1532 = vmul.f32 %v1522, %v504
      %v1533 = vmul.f32 %v1525, %v504
      %v1534 = vsub.f32 %v1492, %v1526
      %v1535 = vsub.f32 %v1493, %v1527
      %v1536 = vsub.f32 %v1494, %v1528
      %v1537 = vsub.f32 %v1495, %v1529
      %v1538 = vsub.f32 %v1496, %v1530
      %v1539 = vsub.f32 %v1497, %v1531
      %v1540 = vsub.f32 %v1498, %v1532
      %v1541 = vsub.f32 %v1499, %v1533
      %v1542 = vmul.f32 %v1534, %v1534
      %v1543 = vmul.f32 %v1535, %v1535
      %v1544 = vmul.f32 %v1536, %v1536
      %v1545 = vmul.f32 %v1537, %v1537
      %v1546 = vmul.f32 %v1538, %v1538
      %v1547 = vmul.f32 %v1539, %v1539
      %v1548 = vmul.f32 %v1540, %v1540
      %v1549 = vmul.f32 %v1541, %v1541
      %v1550 = vsel %vm479, %v1542, 0.0
      %1551 = vadd.xlane.f32.xlu0 %v1550
      %v1552 = vpop.xlane.xlu0 %1551
      %v1553 = vsel %vm479, %v1543, 0.0
      %1554 = vadd.xlane.f32.xlu0 %v1553
      %v1555 = vpop.xlane.xlu0 %1554
      %v1556 = vsel %vm479, %v1544, 0.0
      %1557 = vadd.xlane.f32.xlu0 %v1556
      %v1558 = vpop.xlane.xlu0 %1557
      %v1559 = vsel %vm479, %v1545, 0.0
      %1560 = vadd.xlane.f32.xlu0 %v1559
      %v1561 = vpop.xlane.xlu0 %1560
      %v1562 = vsel %vm479, %v1546, 0.0
      %1563 = vadd.xlane.f32.xlu0 %v1562
      %v1564 = vpop.xlane.xlu0 %1563
      %v1565 = vsel %vm479, %v1547, 0.0
      %1566 = vadd.xlane.f32.xlu0 %v1565
      %v1567 = vpop.xlane.xlu0 %1566
      %v1568 = vsel %vm479, %v1548, 0.0
      %1569 = vadd.xlane.f32.xlu0 %v1568
      %v1570 = vpop.xlane.xlu0 %1569
      %v1571 = vsel %vm479, %v1549, 0.0
      %1572 = vadd.xlane.f32.xlu0 %v1571
      %v1573 = vpop.xlane.xlu0 %1572
      %v1574 = vmul.f32 %v1552, %v504
      %v1575 = vmul.f32 %v1555, %v504
      %v1576 = vmul.f32 %v1558, %v504
      %v1577 = vmul.f32 %v1561, %v504
      %v1578 = vmul.f32 %v1564, %v504
      %v1579 = vmul.f32 %v1567, %v504
      %v1580 = vmul.f32 %v1570, %v504
      %v1581 = vmul.f32 %v1573, %v504
      %v1582 = vadd.f32 %v1574, 1e-05
      %v1583 = vadd.f32 %v1575, 1e-05
      %v1584 = vadd.f32 %v1576, 1e-05
      %v1585 = vadd.f32 %v1577, 1e-05
      %v1586 = vadd.f32 %v1578, 1e-05
      %v1587 = vadd.f32 %v1579, 1e-05
      %v1588 = vadd.f32 %v1580, 1e-05
      %v1589 = vadd.f32 %v1581, 1e-05
      %v1590 = vrsqrt.pop %v1582
      %v1591 = vrsqrt.pop %v1583
      %v1592 = vrsqrt.pop %v1584
      %v1593 = vrsqrt.pop %v1585
      %v1594 = vrsqrt.pop %v1586
      %v1595 = vrsqrt.pop %v1587
      %v1596 = vrsqrt.pop %v1588
      %v1597 = vrsqrt.pop %v1589
      %v1598 = vmul.f32 %v1534, %v1590
      %v1599 = vmul.f32 %v1535, %v1591
      %v1600 = vmul.f32 %v1536, %v1592
      %v1601 = vmul.f32 %v1537, %v1593
      %v1602 = vmul.f32 %v1538, %v1594
      %v1603 = vmul.f32 %v1539, %v1595
      %v1604 = vmul.f32 %v1540, %v1596
      %v1605 = vmul.f32 %v1541, %v1597
      %v1607 = vlaneseq
      %v1608 = vshrl.u32 %v1607, 7
      %v1609 = vsub.s32 0, %v1608
      %v1610 = vrot.slane %v1500, %v1609
      %v1612 = vmul.f32 %v1598, %v1610
      %v1613 = vmul.f32 %v1599, %v1610
      %v1614 = vmul.f32 %v1600, %v1610
      %v1615 = vmul.f32 %v1601, %v1610
      %v1616 = vmul.f32 %v1602, %v1610
      %v1617 = vmul.f32 %v1603, %v1610
      %v1618 = vmul.f32 %v1604, %v1610
      %v1619 = vmul.f32 %v1605, %v1610
      %v1621 = vlaneseq
      %v1622 = vshrl.u32 %v1621, 7
      %v1623 = vsub.s32 0, %v1622
      %v1624 = vrot.slane %v1501, %v1623
      %v1626 = vadd.f32 %v1612, %v1624
      %v1627 = vadd.f32 %v1613, %v1624
      %v1628 = vadd.f32 %v1614, %v1624
      %v1629 = vadd.f32 %v1615, %v1624
      %v1630 = vadd.f32 %v1616, %v1624
      %v1631 = vadd.f32 %v1617, %v1624
      %v1632 = vadd.f32 %v1618, %v1624
      %v1633 = vadd.f32 %v1619, %v1624
      %v1634 = vld [vmem:[%s10] sm:$0xf]
      %v1635 = vld [vmem:[%s10 + $0x4] sm:$0xf]
      %v1636 = vld [vmem:[%s10 + $0x8] sm:$0xf]
      %v1637 = vld [vmem:[%s10 + $0xc] sm:$0xf]
      %v1638 = vpack.c.bf16 %v1627, %v1626
      %v1639 = vpack.c.bf16 %v1629, %v1628
      %v1640 = vpack.c.bf16 %v1631, %v1630
      %v1641 = vpack.c.bf16 %v1633, %v1632
      %v1642 = vld [vmem:[%s11] sm:$0x1]
      %v1644 = vlaneseq
      %v1645 = vshrl.u32 %v1644, 7
      %v1646 = vsub.s32 0, %v1645
      %v1647 = vrot.slane %v1642, %v1646
      %v1653 = vunpack.c.l.b16 %v1634
      %v1654 = vunpack.c.l.b16 %v1635
      %v1655 = vunpack.c.l.b16 %v1636
      %v1656 = vunpack.c.l.b16 %v1637
      %v1657 = vpack.c.b16 %v1654, %v1653
      %v1658 = vpack.c.b16 %v1656, %v1655
      %v1662 = vsel %vm479, %v1638, 0
      %v1665 = vsel %vm479, %v1639, 0
      %v1668 = vsel %vm479, %v1640, 0
      %v1671 = vsel %vm479, %v1641, 0
      %1673 = vmatprep.subr.bf16.mxu0 0
      %1674 = vmatpush1.bf16.msra.mxu0 %v1657
      %1675 = vmatprep.subr.bf16.mxu0 0
      %1676 = vmatpush1.bf16.msra.mxu0 %v1658
      %1677 = vmatprep.subr.bf16.mxu0 0
      %1678 = vmatpush1.bf16.msra.mxu0 0
      %1679 = vmatprep.subr.bf16.mxu0 0
      %1680 = vmatpush1.bf16.msra.mxu0 0
      %1681 = vmatprep.subr.bf16.mxu0 0
      %1682 = vmatpush1.bf16.msra.mxu0 0
      %1683 = vmatprep.subr.bf16.mxu0 0
      %1684 = vmatpush1.bf16.msra.mxu0 0
      %1685 = vmatprep.subr.bf16.mxu0 0
      %1686 = vmatpush1.bf16.msra.mxu0 0
      %1687 = vmatprep.subr.bf16.mxu0 0
      %1688 = vmatpush1.bf16.msra.mxu0 0
      %1689 = vmatprep.subr.bf16.mxu0 0
      %1690 = vmatpush1.bf16.msra.mxu0 0
      %1691 = vmatprep.subr.bf16.mxu0 0
      %1692 = vmatpush1.bf16.msra.mxu0 0
      %1693 = vmatprep.subr.bf16.mxu0 0
      %1694 = vmatpush1.bf16.msra.mxu0 0
      %1695 = vmatprep.subr.bf16.mxu0 0
      %1696 = vmatpush1.bf16.msra.mxu0 0
      %1697 = vmatprep.subr.bf16.mxu0 0
      %1698 = vmatpush1.bf16.msra.mxu0 0
      %1699 = vmatprep.subr.bf16.mxu0 0
      %1700 = vmatpush1.bf16.msra.mxu0 0
      %1701 = vmatprep.subr.bf16.mxu0 0
      %1702 = vmatpush1.bf16.msra.mxu0 0
      %1703 = vmatprep.subr.bf16.mxu0 0
      %1704 = vmatpush1.bf16.msra.mxu0 0
      %1705 = vmatprep.mubr.bf16.mxu0 0
      %1706 = vmatmul.mubr.bf16.gmra.mrb[0].mxu0 %v1662
      %v1707 = vpop.f32.mrb[0].mxu0
      %v1708 = vadd.f32 %v1647, %v1707
      %v1709 = vpop.f32.mrb[0].mxu0
      %v1710 = vpop.f32.mrb[0].mxu0
      %v1711 = vadd.f32 %v1647, %v1710
      %v1712 = vpop.f32.mrb[0].mxu0
      %1713 = vmatprep.mubr.bf16.mxu0 0
      %1714 = vmatmul.mubr.bf16.gmra.mrb[0].mxu0 %v1665
      %v1715 = vpop.f32.mrb[0].mxu0
      %v1716 = vadd.f32 %v1647, %v1715
      %v1717 = vpop.f32.mrb[0].mxu0
      %v1718 = vpop.f32.mrb[0].mxu0
      %v1719 = vadd.f32 %v1647, %v1718
      %v1720 = vpop.f32.mrb[0].mxu0
      %1721 = vmatprep.mubr.bf16.mxu0 0
      %1722 = vmatmul.mubr.bf16.gmra.mrb[0].mxu0 %v1668
      %v1723 = vpop.f32.mrb[0].mxu0
      %v1724 = vadd.f32 %v1647, %v1723
      %v1725 = vpop.f32.mrb[0].mxu0
      %v1726 = vpop.f32.mrb[0].mxu0
      %v1727 = vadd.f32 %v1647, %v1726
      %v1728 = vpop.f32.mrb[0].mxu0
      %1729 = vmatprep.mubr.bf16.mxu0 0
      %1730 = vmatmul.mubr.bf16.gmra.mrb[0].mxu0 %v1671
      %v1731 = vpop.f32.mrb[0].mxu0
      %v1732 = vadd.f32 %v1647, %v1731
      %v1733 = vpop.f32.mrb[0].mxu0
      %v1734 = vpop.f32.mrb[0].mxu0
      %v1735 = vadd.f32 %v1647, %v1734
      %v1736 = vpop.f32.mrb[0].mxu0
      %1737 = vdwg.mxu0
      %v1738 = vmul.f32 %v1708, 0.5
      %v1739 = vmul.f32 %v1711, 0.5
      %v1740 = vmul.f32 %v1716, 0.5
      %v1741 = vmul.f32 %v1719, 0.5
      %v1742 = vmul.f32 %v1724, 0.5
      %v1743 = vmul.f32 %v1727, 0.5
      %v1744 = vmul.f32 %v1732, 0.5
      %v1745 = vmul.f32 %v1735, 0.5
      %v1746 = vmul.f32 %v1708, 0.044715
      %v1747 = vmul.f32 %v1711, 0.044715
      %v1748 = vmul.f32 %v1716, 0.044715
      %v1749 = vmul.f32 %v1719, 0.044715
      %v1750 = vmul.f32 %v1724, 0.044715
      %v1751 = vmul.f32 %v1727, 0.044715
      %v1752 = vmul.f32 %v1732, 0.044715
      %v1753 = vmul.f32 %v1735, 0.044715
      %v1754 = vmul.f32 %v1746, %v1708
      %v1755 = vmul.f32 %v1747, %v1711
      %v1756 = vmul.f32 %v1748, %v1716
      %v1757 = vmul.f32 %v1749, %v1719
      %v1758 = vmul.f32 %v1750, %v1724
      %v1759 = vmul.f32 %v1751, %v1727
      %v1760 = vmul.f32 %v1752, %v1732
      %v1761 = vmul.f32 %v1753, %v1735
      %v1762 = vmul.f32 %v1754, %v1708
      %v1763 = vmul.f32 %v1755, %v1711
      %v1764 = vmul.f32 %v1756, %v1716
      %v1765 = vmul.f32 %v1757, %v1719
      %v1766 = vmul.f32 %v1758, %v1724
      %v1767 = vmul.f32 %v1759, %v1727
      %v1768 = vmul.f32 %v1760, %v1732
      %v1769 = vmul.f32 %v1761, %v1735
      %v1770 = vadd.f32 %v1708, %v1762
      %v1771 = vadd.f32 %v1711, %v1763
      %v1772 = vadd.f32 %v1716, %v1764
      %v1773 = vadd.f32 %v1719, %v1765
      %v1774 = vadd.f32 %v1724, %v1766
      %v1775 = vadd.f32 %v1727, %v1767
      %v1776 = vadd.f32 %v1732, %v1768
      %v1777 = vadd.f32 %v1735, %v1769
      %v1778 = vmul.f32 %v1770, 0.7978846
      %v1779 = vmul.f32 %v1771, 0.7978846
      %v1780 = vmul.f32 %v1772, 0.7978846
      %v1781 = vmul.f32 %v1773, 0.7978846
      %v1782 = vmul.f32 %v1774, 0.7978846
      %v1783 = vmul.f32 %v1775, 0.7978846
      %v1784 = vmul.f32 %v1776, 0.7978846
      %v1785 = vmul.f32 %v1777, 0.7978846
      %v1786 = vtanh.pop %v1778
      %v1787 = vtanh.pop %v1779
      %v1788 = vtanh.pop %v1780
      %v1789 = vtanh.pop %v1781
      %v1790 = vtanh.pop %v1782
      %v1791 = vtanh.pop %v1783
      %v1792 = vtanh.pop %v1784
      %v1793 = vtanh.pop %v1785
      %v1794 = vadd.f32 %v1786, 1.0
      %v1795 = vadd.f32 %v1787, 1.0
      %v1796 = vadd.f32 %v1788, 1.0
      %v1797 = vadd.f32 %v1789, 1.0
      %v1798 = vadd.f32 %v1790, 1.0
      %v1799 = vadd.f32 %v1791, 1.0
      %v1800 = vadd.f32 %v1792, 1.0
      %v1801 = vadd.f32 %v1793, 1.0
      %v1802 = vmul.f32 %v1738, %v1794
      %v1803 = vmul.f32 %v1739, %v1795
      %v1804 = vmul.f32 %v1740, %v1796
      %v1805 = vmul.f32 %v1741, %v1797
      %v1806 = vmul.f32 %v1742, %v1798
      %v1807 = vmul.f32 %v1743, %v1799
      %v1808 = vmul.f32 %v1744, %v1800
      %v1809 = vmul.f32 %v1745, %v1801
      %v1810 = vld [vmem:[%s12] sm:$0xf]
      %v1811 = vld [vmem:[%s12 + $0x4] sm:$0xf]
      %v1812 = vld [vmem:[%s12 + $0x8] sm:$0xf]
      %v1813 = vld [vmem:[%s12 + $0xc] sm:$0xf]
      %v1814 = vld [vmem:[%s12 + $0x10] sm:$0xf]
      %v1815 = vld [vmem:[%s12 + $0x14] sm:$0xf]
      %v1816 = vld [vmem:[%s12 + $0x18] sm:$0xf]
      %v1817 = vld [vmem:[%s12 + $0x1c] sm:$0xf]
      %v1818 = vld [vmem:[%s12 + $0x20] sm:$0xf]
      %v1819 = vld [vmem:[%s12 + $0x24] sm:$0xf]
      %v1820 = vld [vmem:[%s12 + $0x28] sm:$0xf]
      %v1821 = vld [vmem:[%s12 + $0x2c] sm:$0xf]
      %v1822 = vld [vmem:[%s12 + $0x30] sm:$0xf]
      %v1823 = vld [vmem:[%s12 + $0x34] sm:$0xf]
      %v1824 = vld [vmem:[%s12 + $0x38] sm:$0xf]
      %v1825 = vld [vmem:[%s12 + $0x3c] sm:$0xf]
      %v1826 = vpack.c.bf16 %v1803, %v1802
      %v1827 = vpack.c.bf16 %v1805, %v1804
      %v1828 = vpack.c.bf16 %v1807, %v1806
      %v1829 = vpack.c.bf16 %v1809, %v1808
      %v1830 = vld [vmem:[%s13] sm:$0x1]
      %v1832 = vlaneseq
      %v1833 = vshrl.u32 %v1832, 7
      %v1834 = vsub.s32 0, %v1833
      %v1835 = vrot.slane %v1830, %v1834
      %v1853 = vunpack.c.l.b16 %v1810
      %v1854 = vunpack.c.l.b16 %v1811
      %v1855 = vunpack.c.l.b16 %v1812
      %v1856 = vunpack.c.l.b16 %v1813
      %v1857 = vunpack.c.l.b16 %v1814
      %v1858 = vunpack.c.l.b16 %v1815
      %v1859 = vunpack.c.l.b16 %v1816
      %v1860 = vunpack.c.l.b16 %v1817
      %v1861 = vunpack.c.l.b16 %v1818
      %v1862 = vunpack.c.l.b16 %v1819
      %v1863 = vunpack.c.l.b16 %v1820
      %v1864 = vunpack.c.l.b16 %v1821
      %v1865 = vunpack.c.l.b16 %v1822
      %v1866 = vunpack.c.l.b16 %v1823
      %v1867 = vunpack.c.l.b16 %v1824
      %v1868 = vunpack.c.l.b16 %v1825
      %v1869 = vpack.c.b16 %v1854, %v1853
      %v1870 = vpack.c.b16 %v1856, %v1855
      %v1871 = vpack.c.b16 %v1858, %v1857
      %v1872 = vpack.c.b16 %v1860, %v1859
      %v1873 = vpack.c.b16 %v1862, %v1861
      %v1874 = vpack.c.b16 %v1864, %v1863
      %v1875 = vpack.c.b16 %v1866, %v1865
      %v1876 = vpack.c.b16 %v1868, %v1867
      %1885 = vmatprep.subr.bf16.mxu0 0
      %1886 = vmatpush1.bf16.msra.mxu0 %v1869
      %1887 = vmatprep.subr.bf16.mxu0 0
      %1888 = vmatpush1.bf16.msra.mxu0 %v1870
      %1889 = vmatprep.subr.bf16.mxu0 0
      %1890 = vmatpush1.bf16.msra.mxu0 %v1871
      %1891 = vmatprep.subr.bf16.mxu0 0
      %1892 = vmatpush1.bf16.msra.mxu0 %v1872
      %1893 = vmatprep.subr.bf16.mxu0 0
      %1894 = vmatpush1.bf16.msra.mxu0 %v1873
      %1895 = vmatprep.subr.bf16.mxu0 0
      %1896 = vmatpush1.bf16.msra.mxu0 %v1874
      %1897 = vmatprep.subr.bf16.mxu0 0
      %1898 = vmatpush1.bf16.msra.mxu0 %v1875
      %1899 = vmatprep.subr.bf16.mxu0 0
      %1900 = vmatpush1.bf16.msra.mxu0 %v1876
      %1901 = vmatprep.subr.bf16.mxu0 0
      %1902 = vmatpush1.bf16.msra.mxu0 0
      %1903 = vmatprep.subr.bf16.mxu0 0
      %1904 = vmatpush1.bf16.msra.mxu0 0
      %1905 = vmatprep.subr.bf16.mxu0 0
      %1906 = vmatpush1.bf16.msra.mxu0 0
      %1907 = vmatprep.subr.bf16.mxu0 0
      %1908 = vmatpush1.bf16.msra.mxu0 0
      %1909 = vmatprep.subr.bf16.mxu0 0
      %1910 = vmatpush1.bf16.msra.mxu0 0
      %1911 = vmatprep.subr.bf16.mxu0 0
      %1912 = vmatpush1.bf16.msra.mxu0 0
      %1913 = vmatprep.subr.bf16.mxu0 0
      %1914 = vmatpush1.bf16.msra.mxu0 0
      %1915 = vmatprep.subr.bf16.mxu0 0
      %1916 = vmatpush1.bf16.msra.mxu0 0
      %1917 = vmatprep.mubr.bf16.mxu0 0
      %1918 = vmatmul.mubr.bf16.gmra.mrb[0].mxu0 %v1826
      %v1919 = vpop.f32.mrb[0].mxu0
      %v1920 = vadd.f32 %v1835, %v1919
      %v1921 = vpop.f32.mrb[0].mxu0
      %v1922 = vpop.f32.mrb[0].mxu0
      %v1923 = vadd.f32 %v1835, %v1922
      %v1924 = vpop.f32.mrb[0].mxu0
      %1925 = vmatprep.mubr.bf16.mxu0 0
      %1926 = vmatmul.mubr.bf16.gmra.mrb[0].mxu0 %v1827
      %v1927 = vpop.f32.mrb[0].mxu0
      %v1928 = vadd.f32 %v1835, %v1927
      %v1929 = vpop.f32.mrb[0].mxu0
      %v1930 = vpop.f32.mrb[0].mxu0
      %v1931 = vadd.f32 %v1835, %v1930
      %v1932 = vpop.f32.mrb[0].mxu0
      %1933 = vmatprep.mubr.bf16.mxu0 0
      %1934 = vmatmul.mubr.bf16.gmra.mrb[0].mxu0 %v1828
      %v1935 = vpop.f32.mrb[0].mxu0
      %v1936 = vadd.f32 %v1835, %v1935
      %v1937 = vpop.f32.mrb[0].mxu0
      %v1938 = vpop.f32.mrb[0].mxu0
      %v1939 = vadd.f32 %v1835, %v1938
      %v1940 = vpop.f32.mrb[0].mxu0
      %1941 = vmatprep.mubr.bf16.mxu0 0
      %1942 = vmatmul.mubr.bf16.gmra.mrb[0].mxu0 %v1829
      %v1943 = vpop.f32.mrb[0].mxu0
      %v1944 = vadd.f32 %v1835, %v1943
      %v1945 = vpop.f32.mrb[0].mxu0
      %v1946 = vpop.f32.mrb[0].mxu0
      %v1947 = vadd.f32 %v1835, %v1946
      %v1948 = vpop.f32.mrb[0].mxu0
      %1949 = vdwg.mxu0
      %v1950 = vadd.f32 %v1492, %v1920
      %v1951 = vadd.f32 %v1493, %v1923
      %v1952 = vadd.f32 %v1494, %v1928
      %v1953 = vadd.f32 %v1495, %v1931
      %v1954 = vadd.f32 %v1496, %v1936
      %v1955 = vadd.f32 %v1497, %v1939
      %v1956 = vadd.f32 %v1498, %v1944
      %v1957 = vadd.f32 %v1499, %v1947
      %1958 = vst.msk [vmem:[%s467] sm:$0xff] %vm479, %v1950
      %1959 = vst.msk [vmem:[%s467 + $0x8] sm:$0xff] %vm479, %v1951
      %1960 = vst.msk [vmem:[%s467 + $0x10] sm:$0xff] %vm479, %v1952
      %1961 = vst.msk [vmem:[%s467 + $0x18] sm:$0xff] %vm479, %v1953
      %1962 = vst.msk [vmem:[%s467 + $0x20] sm:$0xff] %vm479, %v1954
      %1963 = vst.msk [vmem:[%s467 + $0x28] sm:$0xff] %vm479, %v1955
      %1964 = vst.msk [vmem:[%s467 + $0x30] sm:$0xff] %vm479, %v1956
      %1965 = vst.msk [vmem:[%s467 + $0x38] sm:$0xff] %vm479, %v1957
      %p1966 = scmp.lt.s32.totalorder %s25, 1
      %s1967 = scalar_select %p1966, %s25, 1
      %s1968 = smul.addr %s1967, 8
      %s1969 = smul.addr %s1968, 8
      %s1970 = scalar_lea.vmem %s14, %s1969
      // Predicated region
      $region77: #{swin_transformer_forward.8} parent=75 // pred_check
        %p1971 = pneg %p342
      $region78: #{swin_transformer_forward.8} parent=75 // pred_check_branch
        %1973 = sbr.rel (%p1971) target = $region80
      $region79: #{swin_transformer_forward.8} parent=75 // pred_region
        _
      $region80: #{swin_transformer_forward.8} parent=75 // pred_fallthru
        _
    $region76: #{swin_transformer_forward.8} parent=5 // pred_fallthru
      _
    %p1974 = scmp.le.s32.totalorder 2, %s20
    // Predicated region
    $region81: #{swin_transformer_forward.8} parent=5 // pred_check
      %p1975 = pneg %p1974
    $region82: #{swin_transformer_forward.8} parent=5 // pred_check_branch
      %1977 = sbr.rel (%p1975) target = $region84
    $region83: #{swin_transformer_forward.8} parent=5 // pred_region
      %s1978 = ssub.s32 %s20, 2
      // Predicated region
      $region85: #{swin_transformer_forward.8} parent=83 // pred_check
        %p1979 = pneg %p348
      $region86: #{swin_transformer_forward.8} parent=83 // pred_check_branch
        %1981 = sbr.rel (%p1979) target = $region88
      $region87: #{swin_transformer_forward.8} parent=83 // pred_region
        %p1982 = scmp.lt.s32.totalorder %s26, 1
        %s1983 = scalar_select %p1982, %s26, 1
        %s1984 = smul.addr %s1983, 8
        %s1985 = smul.addr %s1984, 8
        %s1986 = scalar_lea.vmem %s14, %s1985
      $region88: #{swin_transformer_forward.8} parent=83 // pred_fallthru
        _
    $region84: #{swin_transformer_forward.8} parent=5 // pred_fallthru
      _
  $region6: #{swin_transformer_forward.8} parent=0 // loop_footer
    %s24 = sadd.s32 1, %s20
  $region7: #{swin_transformer_forward.8} parent=0 // loop_footer_branch
    %19 = sbr.rel target = $region3
  $region8: #{swin_transformer_forward.8} parent=0 // loop_exit
    _

// kernel: swin_transformer_forward.10
$region0: #{swin_transformer_forward.10}
  #allocation0 [shape = 'u32[]', space=smem, size = 0x4, offset = 0x4, fixed_abs, tag = 'smem constant byte address 0x4 - core index']
  #allocation1 [shape = 'u32[144,128]{1,0:T(1,128)}', space=vmem, size = 0x12000, scoped, tag = 'internal scratch']
  %s0 = inlined_call_operand.vmem [shape: f32[2,16,128], index: 0, kind: input, shape index: {}]
  %s1 = inlined_call_operand.vmem [shape: f32[1,128], index: 1, kind: input, shape index: {}]
  %s2 = inlined_call_operand.vmem [shape: f32[1,128], index: 2, kind: input, shape index: {}]
  %s3 = inlined_call_operand.vmem [shape: bf16[128,64], index: 3, kind: input, shape index: {}]
  %s4 = inlined_call_operand.vmem [shape: f32[2,16,64], index: 4, kind: output, shape index: {}]
  %s5 = sld [smem:[#allocation0]]
  $region49: #{swin_transformer_forward.10} parent=0
    _
  %s7 = ssub.s32 1, %s5
  %s8 = scalar_select 0, %s7, %s5
  loop: start=0, step=1, limit=4
  $region2: #{swin_transformer_forward.10} parent=0 // loop_pre_header
    _
  $region3: #{swin_transformer_forward.10} parent=0 // loop_header
    %s10 = sphi 0, %s14
    %p11 = scmp.ge.s32.totalorder %s10, 4
    %s20 = sphi 0, %s22
    %s23 = sphi 0, %s20
    %s24 = sphi 0, %s23
    %s40 = sphi 0, %s24
    %s44 = sphi 0, %s44
    %s46 = sphi 0, %s44
    %s47 = sphi 0, %s46
    %s61 = sphi 0, %s47
    %s65 = sphi 0, %s65
    %s67 = sphi 0, %s65
    %s68 = sphi 0, %s67
    %s82 = sphi 0, %s68
    %s86 = sphi 0, %s86
    %s88 = sphi 0, %s86
    %s89 = sphi 0, %s88
    %s103 = sphi 0, %s89
    %s109 = sphi 0, %s111
    %s112 = sphi 0, %s109
    %s113 = sphi 0, %s112
    %s129 = sphi 0, %s113
  $region4: #{swin_transformer_forward.10} parent=0 // loop_header_branch
    %13 = sbr.rel (%p11) target = $region8
  $region5: #{swin_transformer_forward.10} parent=0 // loop_body
    %s15 = ssub.s32 %s10, 1
    %s16 = ssub.s32 %s10, 2
    %s17 = sadd.s32 %s10, 1
    %s18 = ssub.s32 %s10, %s17
    %p19 = scmp.eq.s32.totalorder %s18, 0
    %s21 = sadd.s32 %s20, 1
    %s22 = scalar_select %p19, %s20, %s21
    %p25 = pneg %p19
    %p26 = scmp.eq.s32.totalorder %s10, 1
    %p27 = por %p25, %p26
    %p28 = scmp.ne.s32.totalorder %s20, %s23
    %p29 = scmp.eq.s32.totalorder %s10, 0
    %p30 = por %p28, %p29
    %p31 = scmp.ne.s32.totalorder %s20, %s23
    %p32 = scmp.eq.s32.totalorder %s15, 1
    %p33 = por %p31, %p32
    %p34 = scmp.ne.s32.totalorder %s23, %s24
    %p35 = scmp.eq.s32.totalorder %s15, 0
    %p36 = por %p34, %p35
    %p37 = scmp.ne.s32.totalorder %s23, %s24
    %p38 = scmp.eq.s32.totalorder %s16, 1
    %p39 = por %p37, %p38
    %p41 = scmp.ne.s32.totalorder %s24, %s40
    %p42 = scmp.eq.s32.totalorder %s16, 0
    %p43 = por %p41, %p42
    %s45 = sadd.s32 %s44, 1
    %p48 = scmp.eq.s32.totalorder %s10, 1
    %p49 = scmp.ne.s32.totalorder %s44, %s46
    %p50 = scmp.eq.s32.totalorder %s10, 0
    %p51 = por %p49, %p50
    %p52 = scmp.ne.s32.totalorder %s44, %s46
    %p53 = scmp.eq.s32.totalorder %s15, 1
    %p54 = por %p52, %p53
    %p55 = scmp.ne.s32.totalorder %s46, %s47
    %p56 = scmp.eq.s32.totalorder %s15, 0
    %p57 = por %p55, %p56
    %p58 = scmp.ne.s32.totalorder %s46, %s47
    %p59 = scmp.eq.s32.totalorder %s16, 1
    %p60 = por %p58, %p59
    %p62 = scmp.ne.s32.totalorder %s47, %s61
    %p63 = scmp.eq.s32.totalorder %s16, 0
    %p64 = por %p62, %p63
    %s66 = sadd.s32 %s65, 1
    %p69 = scmp.eq.s32.totalorder %s10, 1
    %p70 = scmp.ne.s32.totalorder %s65, %s67
    %p71 = scmp.eq.s32.totalorder %s10, 0
    %p72 = por %p70, %p71
    %p73 = scmp.ne.s32.totalorder %s65, %s67
    %p74 = scmp.eq.s32.totalorder %s15, 1
    %p75 = por %p73, %p74
    %p76 = scmp.ne.s32.totalorder %s67, %s68
    %p77 = scmp.eq.s32.totalorder %s15, 0
    %p78 = por %p76, %p77
    %p79 = scmp.ne.s32.totalorder %s67, %s68
    %p80 = scmp.eq.s32.totalorder %s16, 1
    %p81 = por %p79, %p80
    %p83 = scmp.ne.s32.totalorder %s68, %s82
    %p84 = scmp.eq.s32.totalorder %s16, 0
    %p85 = por %p83, %p84
    %s87 = sadd.s32 %s86, 1
    %p90 = scmp.eq.s32.totalorder %s10, 1
    %p91 = scmp.ne.s32.totalorder %s86, %s88
    %p92 = scmp.eq.s32.totalorder %s10, 0
    %p93 = por %p91, %p92
    %p94 = scmp.ne.s32.totalorder %s86, %s88
    %p95 = scmp.eq.s32.totalorder %s15, 1
    %p96 = por %p94, %p95
    %p97 = scmp.ne.s32.totalorder %s88, %s89
    %p98 = scmp.eq.s32.totalorder %s15, 0
    %p99 = por %p97, %p98
    %p100 = scmp.ne.s32.totalorder %s88, %s89
    %p101 = scmp.eq.s32.totalorder %s16, 1
    %p102 = por %p100, %p101
    %p104 = scmp.ne.s32.totalorder %s89, %s103
    %p105 = scmp.eq.s32.totalorder %s16, 0
    %p106 = por %p104, %p105
    %s107 = ssub.s32 %s10, %s17
    %p108 = scmp.eq.s32.totalorder %s107, 0
    %s110 = sadd.s32 %s109, 1
    %s111 = scalar_select %p108, %s109, %s110
    %p114 = pneg %p108
    %p115 = scmp.eq.s32.totalorder %s10, 1
    %p116 = por %p114, %p115
    %p117 = scmp.ne.s32.totalorder %s109, %s112
    %p118 = scmp.eq.s32.totalorder %s10, 0
    %p119 = por %p117, %p118
    %p120 = scmp.ne.s32.totalorder %s109, %s112
    %p121 = scmp.eq.s32.totalorder %s15, 1
    %p122 = por %p120, %p121
    %p123 = scmp.ne.s32.totalorder %s112, %s113
    %p124 = scmp.eq.s32.totalorder %s15, 0
    %p125 = por %p123, %p124
    %p126 = scmp.ne.s32.totalorder %s112, %s113
    %p127 = scmp.eq.s32.totalorder %s16, 1
    %p128 = por %p126, %p127
    %p130 = scmp.ne.s32.totalorder %s113, %s129
    %p131 = scmp.eq.s32.totalorder %s16, 0
    %p132 = por %p130, %p131
    %p133 = scmp.le.s32.totalorder 1, %s10
    %p134 = scmp.lt.s32.totalorder %s10, 3
    %p135 = pnand %p133, %p134
    %p136 = pneg %p135
    // Predicated region
    $region9: #{swin_transformer_forward.10} parent=5 // pred_check
      _
    $region10: #{swin_transformer_forward.10} parent=5 // pred_check_branch
      %138 = sbr.rel (%p135) target = $region12
    $region11: #{swin_transformer_forward.10} parent=5 // pred_region
      %s139 = ssub.s32 %s10, 1
      // Predicated region
      $region13: #{swin_transformer_forward.10} parent=11 // pred_check
        %p140 = pneg %p57
      $region14: #{swin_transformer_forward.10} parent=11 // pred_check_branch
        %142 = sbr.rel (%p140) target = $region16
      $region15: #{swin_transformer_forward.10} parent=11 // pred_region
        _
      $region16: #{swin_transformer_forward.10} parent=11 // pred_fallthru
        _
      // Predicated region
      $region17: #{swin_transformer_forward.10} parent=11 // pred_check
        %p143 = pneg %p78
      $region18: #{swin_transformer_forward.10} parent=11 // pred_check_branch
        %145 = sbr.rel (%p143) target = $region20
      $region19: #{swin_transformer_forward.10} parent=11 // pred_region
        _
      $region20: #{swin_transformer_forward.10} parent=11 // pred_fallthru
        _
      // Predicated region
      $region21: #{swin_transformer_forward.10} parent=11 // pred_check
        %p146 = pneg %p99
      $region22: #{swin_transformer_forward.10} parent=11 // pred_check_branch
        %148 = sbr.rel (%p146) target = $region24
      $region23: #{swin_transformer_forward.10} parent=11 // pred_region
        _
      $region24: #{swin_transformer_forward.10} parent=11 // pred_fallthru
        _
    $region12: #{swin_transformer_forward.10} parent=5 // pred_fallthru
      _
    %p149 = scmp.lt.s32.totalorder %s10, 2
    // Predicated region
    $region25: #{swin_transformer_forward.10} parent=5 // pred_check
      %p150 = pneg %p149
    $region26: #{swin_transformer_forward.10} parent=5 // pred_check_branch
      %152 = sbr.rel (%p150) target = $region28
    $region27: #{swin_transformer_forward.10} parent=5 // pred_region
      // Predicated region
      $region29: #{swin_transformer_forward.10} parent=27 // pred_check
        %p153 = pneg %p30
      $region30: #{swin_transformer_forward.10} parent=27 // pred_check_branch
        %155 = sbr.rel (%p153) target = $region32
      $region31: #{swin_transformer_forward.10} parent=27 // pred_region
        %p156 = scmp.lt.s32.totalorder %s10, 1
        %s157 = scalar_select %p156, %s10, 1
        %s158 = smul.addr %s157, 2
        %s159 = smul.addr %s158, 8
        %s160 = scalar_lea.vmem %s0, %s159
      $region32: #{swin_transformer_forward.10} parent=27 // pred_fallthru
        _
    $region28: #{swin_transformer_forward.10} parent=5 // pred_fallthru
      _
    %p161 = scmp.le.s32.totalorder 1, %s10
    %p162 = scmp.lt.s32.totalorder %s10, 3
    %p163 = pnand %p161, %p162
    %p164 = pneg %p163
    // Predicated region
    $region33: #{swin_transformer_forward.10} parent=5 // pred_check
      _
    $region34: #{swin_transformer_forward.10} parent=5 // pred_check_branch
      %166 = sbr.rel (%p163) target = $region36
    $region35: #{swin_transformer_forward.10} parent=5 // pred_region
      %s167 = ssub.s32 %s10, 1
      %p168 = scmp.lt.s32.totalorder %s15, 1
      %s169 = scalar_select %p168, %s15, 1
      %s170 = smul.addr %s169, 2
      %s171 = smul.addr %s170, 8
      %s172 = scalar_lea.vmem %s0, %s171
      %p173 = pneg %p36
      %p174 = pneg %p33
      %p175 = pneg %p57
      %p176 = pneg %p54
      %p177 = pneg %p78
      %p178 = pneg %p75
      %p179 = pneg %p99
      %p180 = pneg %p96
      %p181 = pneg %p125
      %p182 = pneg %p122
      %p183 = scmp.lt.s32.totalorder %s15, 1
      %s184 = scalar_select %p183, %s15, 1
      %s185 = smul.addr %s184, 2
      %s186 = smul.addr %s185, 8
      %s187 = scalar_lea.vmem %s4, %s186
      %p188 = scmp.lt.s32.totalorder %s15, 1
      %s189 = scalar_select %p188, %s15, 1
      %s190 = smul.addr %s189, 2
      %s191 = smul.addr %s190, 8
      %s192 = scalar_lea.vmem %s0, %s191
      %p193 = scmp.lt.s32.totalorder %s15, 1
      %s194 = scalar_select %p193, %s15, 1
      %s195 = smul.addr %s194, 2
      %s196 = smul.addr %s195, 8
      %s197 = scalar_lea.vmem %s4, %s196
      %v199 = vld [vmem:[%s192] sm:$0xff]
      %v200 = vld [vmem:[%s192 + $0x8] sm:$0xff]
      %v201 = vld [vmem:[%s1] sm:$0x1]
      %v202 = vld [vmem:[%s2] sm:$0x1]
      %203 = vadd.xlane.f32.xlu0 %v199
      %v204 = vpop.xlane.xlu0 %203
      %205 = vadd.xlane.f32.xlu0 %v200
      %v206 = vpop.xlane.xlu0 %205
      %v207 = vrcp.pop 128.0
      %v208 = vmul.f32 %v204, %v207
      %v209 = vmul.f32 %v206, %v207
      %v210 = vsub.f32 %v199, %v208
      %v211 = vsub.f32 %v200, %v209
      %v212 = vmul.f32 %v210, %v210
      %v213 = vmul.f32 %v211, %v211
      %214 = vadd.xlane.f32.xlu0 %v212
      %v215 = vpop.xlane.xlu0 %214
      %216 = vadd.xlane.f32.xlu0 %v213
      %v217 = vpop.xlane.xlu0 %216
      %v218 = vmul.f32 %v215, %v207
      %v219 = vmul.f32 %v217, %v207
      %v220 = vadd.f32 %v218, 1e-05
      %v221 = vadd.f32 %v219, 1e-05
      %v222 = vrsqrt.pop %v220
      %v223 = vrsqrt.pop %v221
      %v224 = vmul.f32 %v210, %v222
      %v225 = vmul.f32 %v211, %v223
      %v227 = vlaneseq
      %v228 = vshrl.u32 %v227, 7
      %v229 = vsub.s32 0, %v228
      %v230 = vrot.slane %v201, %v229
      %v232 = vmul.f32 %v224, %v230
      %v233 = vmul.f32 %v225, %v230
      %v235 = vlaneseq
      %v236 = vshrl.u32 %v235, 7
      %v237 = vsub.s32 0, %v236
      %v238 = vrot.slane %v202, %v237
      %v240 = vadd.f32 %v232, %v238
      %v241 = vadd.f32 %v233, %v238
      %v242 = vld [vmem:[%s3] sm:$0xf]
      %v243 = vld [vmem:[%s3 + $0x4] sm:$0xf]
      %v244 = vld [vmem:[%s3 + $0x8] sm:$0xf]
      %v245 = vld [vmem:[%s3 + $0xc] sm:$0xf]
      %v246 = vld [vmem:[%s3 + $0x10] sm:$0xf]
      %v247 = vld [vmem:[%s3 + $0x14] sm:$0xf]
      %v248 = vld [vmem:[%s3 + $0x18] sm:$0xf]
      %v249 = vld [vmem:[%s3 + $0x1c] sm:$0xf]
      %v250 = vld [vmem:[%s3 + $0x20] sm:$0xf]
      %v251 = vld [vmem:[%s3 + $0x24] sm:$0xf]
      %v252 = vld [vmem:[%s3 + $0x28] sm:$0xf]
      %v253 = vld [vmem:[%s3 + $0x2c] sm:$0xf]
      %v254 = vld [vmem:[%s3 + $0x30] sm:$0xf]
      %v255 = vld [vmem:[%s3 + $0x34] sm:$0xf]
      %v256 = vld [vmem:[%s3 + $0x38] sm:$0xf]
      %v257 = vld [vmem:[%s3 + $0x3c] sm:$0xf]
      %v258 = vpack.c.bf16 %v241, %v240
      %v275 = vunpack.c.l.b16 %v242
      %v276 = vunpack.c.l.b16 %v243
      %v277 = vunpack.c.l.b16 %v244
      %v278 = vunpack.c.l.b16 %v245
      %v279 = vunpack.c.l.b16 %v246
      %v280 = vunpack.c.l.b16 %v247
      %v281 = vunpack.c.l.b16 %v248
      %v282 = vunpack.c.l.b16 %v249
      %v283 = vunpack.c.l.b16 %v250
      %v284 = vunpack.c.l.b16 %v251
      %v285 = vunpack.c.l.b16 %v252
      %v286 = vunpack.c.l.b16 %v253
      %v287 = vunpack.c.l.b16 %v254
      %v288 = vunpack.c.l.b16 %v255
      %v289 = vunpack.c.l.b16 %v256
      %v290 = vunpack.c.l.b16 %v257
      %v291 = vpack.c.b16 %v276, %v275
      %v292 = vpack.c.b16 %v278, %v277
      %v293 = vpack.c.b16 %v280, %v279
      %v294 = vpack.c.b16 %v282, %v281
      %v295 = vpack.c.b16 %v284, %v283
      %v296 = vpack.c.b16 %v286, %v285
      %v297 = vpack.c.b16 %v288, %v287
      %v298 = vpack.c.b16 %v290, %v289
      %307 = vmatprep.subr.bf16.mxu0 0
      %308 = vmatpush1.bf16.msra.mxu0 %v291
      %309 = vmatprep.subr.bf16.mxu0 0
      %310 = vmatpush1.bf16.msra.mxu0 %v292
      %311 = vmatprep.subr.bf16.mxu0 0
      %312 = vmatpush1.bf16.msra.mxu0 %v293
      %313 = vmatprep.subr.bf16.mxu0 0
      %314 = vmatpush1.bf16.msra.mxu0 %v294
      %315 = vmatprep.subr.bf16.mxu0 0
      %316 = vmatpush1.bf16.msra.mxu0 %v295
      %317 = vmatprep.subr.bf16.mxu0 0
      %318 = vmatpush1.bf16.msra.mxu0 %v296
      %319 = vmatprep.subr.bf16.mxu0 0
      %320 = vmatpush1.bf16.msra.mxu0 %v297
      %321 = vmatprep.subr.bf16.mxu0 0
      %322 = vmatpush1.bf16.msra.mxu0 %v298
      %323 = vmatprep.subr.bf16.mxu0 0
      %324 = vmatpush1.bf16.msra.mxu0 0
      %325 = vmatprep.subr.bf16.mxu0 0
      %326 = vmatpush1.bf16.msra.mxu0 0
      %327 = vmatprep.subr.bf16.mxu0 0
      %328 = vmatpush1.bf16.msra.mxu0 0
      %329 = vmatprep.subr.bf16.mxu0 0
      %330 = vmatpush1.bf16.msra.mxu0 0
      %331 = vmatprep.subr.bf16.mxu0 0
      %332 = vmatpush1.bf16.msra.mxu0 0
      %333 = vmatprep.subr.bf16.mxu0 0
      %334 = vmatpush1.bf16.msra.mxu0 0
      %335 = vmatprep.subr.bf16.mxu0 0
      %336 = vmatpush1.bf16.msra.mxu0 0
      %337 = vmatprep.subr.bf16.mxu0 0
      %338 = vmatpush1.bf16.msra.mxu0 0
      %339 = vmatprep.mubr.bf16.mxu0 0
      %340 = vmatmul.mubr.bf16.gmra.mrb[0].mxu0 %v258
      %v341 = vpop.f32.mrb[0].mxu0
      %v342 = vadd.f32 0.0, %v341
      %v343 = vpop.f32.mrb[0].mxu0
      %v344 = vpop.f32.mrb[0].mxu0
      %v345 = vadd.f32 0.0, %v344
      %v346 = vpop.f32.mrb[0].mxu0
      %347 = vdwg.mxu0
      %vm348 = vcmask 523264
      %349 = vst.msk [vmem:[%s197] sm:$0xff] %vm348, %v342
      %350 = vst.msk [vmem:[%s197 + $0x8] sm:$0xff] %vm348, %v345
      %p351 = scmp.lt.s32.totalorder %s15, 1
      %s352 = scalar_select %p351, %s15, 1
      %s353 = smul.addr %s352, 2
      %s354 = smul.addr %s353, 8
      %s355 = scalar_lea.vmem %s4, %s354
      // Predicated region
      $region37: #{swin_transformer_forward.10} parent=35 // pred_check
        %p356 = pneg %p122
      $region38: #{swin_transformer_forward.10} parent=35 // pred_check_branch
        %358 = sbr.rel (%p356) target = $region40
      $region39: #{swin_transformer_forward.10} parent=35 // pred_region
        _
      $region40: #{swin_transformer_forward.10} parent=35 // pred_fallthru
        _
    $region36: #{swin_transformer_forward.10} parent=5 // pred_fallthru
      _
    %p359 = scmp.le.s32.totalorder 2, %s10
    // Predicated region
    $region41: #{swin_transformer_forward.10} parent=5 // pred_check
      %p360 = pneg %p359
    $region42: #{swin_transformer_forward.10} parent=5 // pred_check_branch
      %362 = sbr.rel (%p360) target = $region44
    $region43: #{swin_transformer_forward.10} parent=5 // pred_region
      %s363 = ssub.s32 %s10, 2
      // Predicated region
      $region45: #{swin_transformer_forward.10} parent=43 // pred_check
        %p364 = pneg %p128
      $region46: #{swin_transformer_forward.10} parent=43 // pred_check_branch
        %366 = sbr.rel (%p364) target = $region48
      $region47: #{swin_transformer_forward.10} parent=43 // pred_region
        %p367 = scmp.lt.s32.totalorder %s16, 1
        %s368 = scalar_select %p367, %s16, 1
        %s369 = smul.addr %s368, 2
        %s370 = smul.addr %s369, 8
        %s371 = scalar_lea.vmem %s4, %s370
      $region48: #{swin_transformer_forward.10} parent=43 // pred_fallthru
        _
    $region44: #{swin_transformer_forward.10} parent=5 // pred_fallthru
      _
  $region6: #{swin_transformer_forward.10} parent=0 // loop_footer
    %s14 = sadd.s32 1, %s10
  $region7: #{swin_transformer_forward.10} parent=0 // loop_footer_branch
    %9 = sbr.rel target = $region3
  $region8: #{swin_transformer_forward.10} parent=0 // loop_exit
    _

// kernel: swin_transformer_forward.13
$region0: #{swin_transformer_forward.13}
  #allocation0 [shape = 'u32[]', space=smem, size = 0x4, offset = 0x4, fixed_abs, tag = 'smem constant byte address 0x4 - core index']
  #allocation1 [shape = 'u32[144,128]{1,0:T(1,128)}', space=vmem, size = 0x12000, scoped, tag = 'internal scratch']
  %s0 = inlined_call_operand.vmem [shape: f32[2,16,64], index: 0, kind: input, shape index: {}]
  %s1 = inlined_call_operand.vmem [shape: f32[1,64], index: 1, kind: input, shape index: {}]
  %s2 = inlined_call_operand.vmem [shape: f32[1,64], index: 2, kind: input, shape index: {}]
  %s3 = inlined_call_operand.vmem [shape: bf16[64,32], index: 3, kind: input, shape index: {}]
  %s4 = inlined_call_operand.vmem [shape: f32[1,32], index: 4, kind: input, shape index: {}]
  %s5 = inlined_call_operand.hbm [shape: f32[1,1], index: 5, kind: output, shape index: {}]
  %s6 = sld [smem:[#allocation0]]
  $region30: #{swin_transformer_forward.13} parent=0
    _
  %s8 = ssub.s32 1, %s6
  %s9 = scalar_select 0, %s8, %s6
  $region1: #{swin_transformer_forward.13} parent=0
    #allocation2 [shape = 'u8[512]{0}', space=vmem, size = 0x400, scoped, tag = 'output window, operand 0, single buffered']
    #allocation3 [shape = 's32[1]{0}', space=sflag, size = 0x4, scoped, tag = 'scoped memory for swin_transformer_forward.13']
    %10 = vsyncpa [#allocation3], 0
    // Predicated region
    $region2: #{swin_transformer_forward.13} parent=1 // pred_check
      _
    $region3: #{swin_transformer_forward.13} parent=1 // pred_check_branch
      %12 = sbr.rel (0) target = $region5
    $region4: #{swin_transformer_forward.13} parent=1 // pred_region
      _
    $region5: #{swin_transformer_forward.13} parent=1 // pred_fallthru
      _
    // Predicated region
    $region6: #{swin_transformer_forward.13} parent=1 // pred_check
      _
    $region7: #{swin_transformer_forward.13} parent=1 // pred_check_branch
      %14 = sbr.rel (0) target = $region9
    $region8: #{swin_transformer_forward.13} parent=1 // pred_region
      _
    $region9: #{swin_transformer_forward.13} parent=1 // pred_fallthru
      _
    // Predicated region
    $region10: #{swin_transformer_forward.13} parent=1 // pred_check
      _
    $region11: #{swin_transformer_forward.13} parent=1 // pred_check_branch
      %16 = sbr.rel (0) target = $region13
    $region12: #{swin_transformer_forward.13} parent=1 // pred_region
      _
    $region13: #{swin_transformer_forward.13} parent=1 // pred_fallthru
      _
    // Predicated region
    $region14: #{swin_transformer_forward.13} parent=1 // pred_check
      _
    $region15: #{swin_transformer_forward.13} parent=1 // pred_check_branch
      %18 = sbr.rel (0) target = $region17
    $region16: #{swin_transformer_forward.13} parent=1 // pred_region
      _
    $region17: #{swin_transformer_forward.13} parent=1 // pred_fallthru
      _
    // Predicated region
    $region18: #{swin_transformer_forward.13} parent=1 // pred_check
      _
    $region19: #{swin_transformer_forward.13} parent=1 // pred_check_branch
      %20 = sbr.rel (0) target = $region21
    $region20: #{swin_transformer_forward.13} parent=1 // pred_region
      _
    $region21: #{swin_transformer_forward.13} parent=1 // pred_fallthru
      _
    %v22 = vld [vmem:[%s0] sm:$0xff]
    %v23 = vld [vmem:[%s0 + $0x8] sm:$0xff]
    %v24 = vld [vmem:[%s1] sm:$0x1]
    %v25 = vld [vmem:[%s2] sm:$0x1]
    %vm26 = vcmask 523264
    %v27 = vsel %vm26, %v22, 0.0
    %28 = vadd.xlane.f32.xlu0 %v27
    %v29 = vpop.xlane.xlu0 %28
    %v30 = vsel %vm26, %v23, 0.0
    %31 = vadd.xlane.f32.xlu0 %v30
    %v32 = vpop.xlane.xlu0 %31
    %v33 = vrcp.pop 64.0
    %v34 = vmul.f32 %v29, %v33
    %v35 = vmul.f32 %v32, %v33
    %v36 = vsub.f32 %v22, %v34
    %v37 = vsub.f32 %v23, %v35
    %v38 = vmul.f32 %v36, %v36
    %v39 = vmul.f32 %v37, %v37
    %v40 = vsel %vm26, %v38, 0.0
    %41 = vadd.xlane.f32.xlu0 %v40
    %v42 = vpop.xlane.xlu0 %41
    %v43 = vsel %vm26, %v39, 0.0
    %44 = vadd.xlane.f32.xlu0 %v43
    %v45 = vpop.xlane.xlu0 %44
    %v46 = vmul.f32 %v42, %v33
    %v47 = vmul.f32 %v45, %v33
    %v48 = vadd.f32 %v46, 1e-05
    %v49 = vadd.f32 %v47, 1e-05
    %v50 = vrsqrt.pop %v48
    %v51 = vrsqrt.pop %v49
    %v52 = vmul.f32 %v36, %v50
    %v53 = vmul.f32 %v37, %v51
    %v55 = vlaneseq
    %v56 = vshrl.u32 %v55, 7
    %v57 = vsub.s32 0, %v56
    %v58 = vrot.slane %v24, %v57
    %v60 = vmul.f32 %v52, %v58
    %v61 = vmul.f32 %v53, %v58
    %v63 = vlaneseq
    %v64 = vshrl.u32 %v63, 7
    %v65 = vsub.s32 0, %v64
    %v66 = vrot.slane %v25, %v65
    %v68 = vadd.f32 %v60, %v66
    %v69 = vadd.f32 %v61, %v66
    %v70 = vsel %vm26, %v68, 0.0
    %v71 = vsel %vm26, %v69, 0.0
    %v72 = vadd.f32 %v70, %v71
    %v73 = vrot.slane %v72, 4
    %v74 = vadd.f32 %v72, %v73
    %v75 = vrot.slane %v74, 2
    %v76 = vadd.f32 %v74, %v75
    %v77 = vrot.slane %v76, 1
    %v78 = vadd.f32 %v76, %v77
    %v79 = vrcp.pop 16.0
    %v80 = vmul.f32 %v78, %v79
    %v81 = vld [vmem:[%s3] sm:$0xf]
    %v82 = vld [vmem:[%s3 + $0x4] sm:$0xf]
    %v83 = vld [vmem:[%s3 + $0x8] sm:$0xf]
    %v84 = vld [vmem:[%s3 + $0xc] sm:$0xf]
    %v85 = vld [vmem:[%s3 + $0x10] sm:$0xf]
    %v86 = vld [vmem:[%s3 + $0x14] sm:$0xf]
    %v87 = vld [vmem:[%s3 + $0x18] sm:$0xf]
    %v88 = vld [vmem:[%s3 + $0x1c] sm:$0xf]
    %v89 = vpack.c.bf16 %v80, %v80
    %v90 = vld [vmem:[%s4] sm:$0x1]
    %v99 = vunpack.c.l.b16 %v81
    %v100 = vunpack.c.l.b16 %v82
    %v101 = vunpack.c.l.b16 %v83
    %v102 = vunpack.c.l.b16 %v84
    %v103 = vunpack.c.l.b16 %v85
    %v104 = vunpack.c.l.b16 %v86
    %v105 = vunpack.c.l.b16 %v87
    %v106 = vunpack.c.l.b16 %v88
    %v107 = vpack.c.b16 %v100, %v99
    %v108 = vpack.c.b16 %v102, %v101
    %v109 = vpack.c.b16 %v104, %v103
    %v110 = vpack.c.b16 %v106, %v105
    %v116 = vsel %vm26, %v89, 0
    %118 = vmatprep.subr.bf16.mxu0 0
    %119 = vmatpush1.bf16.msra.mxu0 %v107
    %120 = vmatprep.subr.bf16.mxu0 0
    %121 = vmatpush1.bf16.msra.mxu0 %v108
    %122 = vmatprep.subr.bf16.mxu0 0
    %123 = vmatpush1.bf16.msra.mxu0 %v109
    %124 = vmatprep.subr.bf16.mxu0 0
    %125 = vmatpush1.bf16.msra.mxu0 %v110
    %126 = vmatprep.subr.bf16.mxu0 0
    %127 = vmatpush1.bf16.msra.mxu0 0
    %128 = vmatprep.subr.bf16.mxu0 0
    %129 = vmatpush1.bf16.msra.mxu0 0
    %130 = vmatprep.subr.bf16.mxu0 0
    %131 = vmatpush1.bf16.msra.mxu0 0
    %132 = vmatprep.subr.bf16.mxu0 0
    %133 = vmatpush1.bf16.msra.mxu0 0
    %134 = vmatprep.subr.bf16.mxu0 0
    %135 = vmatpush1.bf16.msra.mxu0 0
    %136 = vmatprep.subr.bf16.mxu0 0
    %137 = vmatpush1.bf16.msra.mxu0 0
    %138 = vmatprep.subr.bf16.mxu0 0
    %139 = vmatpush1.bf16.msra.mxu0 0
    %140 = vmatprep.subr.bf16.mxu0 0
    %141 = vmatpush1.bf16.msra.mxu0 0
    %142 = vmatprep.subr.bf16.mxu0 0
    %143 = vmatpush1.bf16.msra.mxu0 0
    %144 = vmatprep.subr.bf16.mxu0 0
    %145 = vmatpush1.bf16.msra.mxu0 0
    %146 = vmatprep.subr.bf16.mxu0 0
    %147 = vmatpush1.bf16.msra.mxu0 0
    %148 = vmatprep.subr.bf16.mxu0 0
    %149 = vmatpush1.bf16.msra.mxu0 0
    %150 = vmatprep.mubr.bf16.mxu0 0
    %151 = vmatmul.mubr.bf16.gmra.mrb[0].mxu0 %v116
    %v152 = vpop.f32.mrb[0].mxu0
    %v153 = vadd.f32 %v90, %v152
    %v154 = vpop.f32.mrb[0].mxu0
    %v155 = vpop.f32.mrb[0].mxu0
    %v156 = vpop.f32.mrb[0].mxu0
    %157 = vdwg.mxu0
    %s158 = scalar_lea.vmem %s0, 16
    %v159 = vld [vmem:[%s158] sm:$0xff]
    %v160 = vld [vmem:[%s158 + $0x8] sm:$0xff]
    %v161 = vsel %vm26, %v159, 0.0
    %162 = vadd.xlane.f32.xlu0 %v161
    %v163 = vpop.xlane.xlu0 %162
    %v164 = vsel %vm26, %v160, 0.0
    %165 = vadd.xlane.f32.xlu0 %v164
    %v166 = vpop.xlane.xlu0 %165
    %v167 = vmul.f32 %v163, %v33
    %v168 = vmul.f32 %v166, %v33
    %v169 = vsub.f32 %v159, %v167
    %v170 = vsub.f32 %v160, %v168
    %v171 = vmul.f32 %v169, %v169
    %v172 = vmul.f32 %v170, %v170
    %v173 = vsel %vm26, %v171, 0.0
    %174 = vadd.xlane.f32.xlu0 %v173
    %v175 = vpop.xlane.xlu0 %174
    %v176 = vsel %vm26, %v172, 0.0
    %177 = vadd.xlane.f32.xlu0 %v176
    %v178 = vpop.xlane.xlu0 %177
    %v179 = vmul.f32 %v175, %v33
    %v180 = vmul.f32 %v178, %v33
    %v181 = vadd.f32 %v179, 1e-05
    %v182 = vadd.f32 %v180, 1e-05
    %v183 = vrsqrt.pop %v181
    %v184 = vrsqrt.pop %v182
    %v185 = vmul.f32 %v169, %v183
    %v186 = vmul.f32 %v170, %v184
    %v187 = vmul.f32 %v185, %v58
    %v188 = vmul.f32 %v186, %v58
    %v189 = vadd.f32 %v187, %v66
    %v190 = vadd.f32 %v188, %v66
    %v191 = vsel %vm26, %v189, 0.0
    %v192 = vsel %vm26, %v190, 0.0
    %v193 = vadd.f32 %v191, %v192
    %v194 = vrot.slane %v193, 4
    %v195 = vadd.f32 %v193, %v194
    %v196 = vrot.slane %v195, 2
    %v197 = vadd.f32 %v195, %v196
    %v198 = vrot.slane %v197, 1
    %v199 = vadd.f32 %v197, %v198
    %v200 = vmul.f32 %v199, %v79
    %v201 = vpack.c.bf16 %v200, %v200
    %v203 = vsel %vm26, %v201, 0
    %205 = vmatprep.subr.bf16.mxu0 0
    %206 = vmatpush1.bf16.msra.mxu0 %v107
    %207 = vmatprep.subr.bf16.mxu0 0
    %208 = vmatpush1.bf16.msra.mxu0 %v108
    %209 = vmatprep.subr.bf16.mxu0 0
    %210 = vmatpush1.bf16.msra.mxu0 %v109
    %211 = vmatprep.subr.bf16.mxu0 0
    %212 = vmatpush1.bf16.msra.mxu0 %v110
    %213 = vmatprep.subr.bf16.mxu0 0
    %214 = vmatpush1.bf16.msra.mxu0 0
    %215 = vmatprep.subr.bf16.mxu0 0
    %216 = vmatpush1.bf16.msra.mxu0 0
    %217 = vmatprep.subr.bf16.mxu0 0
    %218 = vmatpush1.bf16.msra.mxu0 0
    %219 = vmatprep.subr.bf16.mxu0 0
    %220 = vmatpush1.bf16.msra.mxu0 0
    %221 = vmatprep.subr.bf16.mxu0 0
    %222 = vmatpush1.bf16.msra.mxu0 0
    %223 = vmatprep.subr.bf16.mxu0 0
    %224 = vmatpush1.bf16.msra.mxu0 0
    %225 = vmatprep.subr.bf16.mxu0 0
    %226 = vmatpush1.bf16.msra.mxu0 0
    %227 = vmatprep.subr.bf16.mxu0 0
    %228 = vmatpush1.bf16.msra.mxu0 0
    %229 = vmatprep.subr.bf16.mxu0 0
    %230 = vmatpush1.bf16.msra.mxu0 0
    %231 = vmatprep.subr.bf16.mxu0 0
    %232 = vmatpush1.bf16.msra.mxu0 0
    %233 = vmatprep.subr.bf16.mxu0 0
    %234 = vmatpush1.bf16.msra.mxu0 0
    %235 = vmatprep.subr.bf16.mxu0 0
    %236 = vmatpush1.bf16.msra.mxu0 0
    %237 = vmatprep.mubr.bf16.mxu0 0
    %238 = vmatmul.mubr.bf16.gmra.mrb[0].mxu0 %v203
    %v239 = vpop.f32.mrb[0].mxu0
    %v240 = vadd.f32 %v90, %v239
    %v241 = vpop.f32.mrb[0].mxu0
    %v242 = vpop.f32.mrb[0].mxu0
    %v243 = vpop.f32.mrb[0].mxu0
    %244 = vdwg.mxu0
    %v245 = vmul.f32 %v153, %v240
    %vm246 = vcmask 253952
    %v247 = vsel %vm246, %v245, 0.0
    %248 = vadd.xlane.f32.xlu0 %v247
    %v249 = vpop.xlane.xlu0 %248
    %vm250 = vcmask 0
    %251 = vst.msk [vmem:[#allocation2] sm:$0x1] %vm250, %v249
    // Predicated region
    $region22: #{swin_transformer_forward.13} parent=1 // pred_check
      _
    $region23: #{swin_transformer_forward.13} parent=1 // pred_check_branch
      %253 = sbr.rel (0) target = $region25
    $region24: #{swin_transformer_forward.13} parent=1 // pred_region
      %s255 = ssub.s32 16, 16
      %256 = vsyncadd [#allocation3], %s255
      %s258 = sshll.u32 [#allocation2], 4
      %s259 = int_to_ptr.vmem [resolvable:$true] %s258
      %261 = dma.vmem_to_hbm [thread:$0]  %s259, 16, %s5, [#allocation3]
    $region25: #{swin_transformer_forward.13} parent=1 // pred_fallthru
      _
    // Predicated region
    $region26: #{swin_transformer_forward.13} parent=1 // pred_check
      _
    $region27: #{swin_transformer_forward.13} parent=1 // pred_check_branch
      %263 = sbr.rel (0) target = $region29
    $region28: #{swin_transformer_forward.13} parent=1 // pred_region
      %264 = dma.done [#allocation3], 16
    $region29: #{swin_transformer_forward.13} parent=1 // pred_fallthru
      _
    %265 = vsyncpa [#allocation3], 1

// kernel: swin_transformer_forward.11
$region0: #{swin_transformer_forward.11}
  #allocation0 [shape = 'u32[]', space=smem, size = 0x4, offset = 0x4, fixed_abs, tag = 'smem constant byte address 0x4 - core index']
  #allocation1 [shape = 'u32[144,128]{1,0:T(1,128)}', space=vmem, size = 0x12000, scoped, tag = 'internal scratch']
  %s0 = inlined_call_operand.vmem [shape: f32[2,16,64], index: 0, kind: input, shape index: {}]
  %s1 = inlined_call_operand.vmem [shape: f32[1,64], index: 1, kind: input, shape index: {}]
  %s2 = inlined_call_operand.vmem [shape: f32[1,64], index: 2, kind: input, shape index: {}]
  %s3 = inlined_call_operand.vmem [shape: bf16[64,192], index: 3, kind: input, shape index: {}]
  %s4 = inlined_call_operand.vmem [shape: f32[1,192], index: 4, kind: input, shape index: {}]
  %s5 = inlined_call_operand.vmem [shape: f32[4,16,16], index: 5, kind: input, shape index: {}]
  %s6 = inlined_call_operand.vmem [shape: bf16[64,64], index: 6, kind: input, shape index: {}]
  %s7 = inlined_call_operand.vmem [shape: f32[1,64], index: 7, kind: input, shape index: {}]
  %s8 = inlined_call_operand.vmem [shape: f32[1,64], index: 8, kind: input, shape index: {}]
  %s9 = inlined_call_operand.vmem [shape: f32[1,64], index: 9, kind: input, shape index: {}]
  %s10 = inlined_call_operand.vmem [shape: bf16[64,256], index: 10, kind: input, shape index: {}]
  %s11 = inlined_call_operand.vmem [shape: f32[1,256], index: 11, kind: input, shape index: {}]
  %s12 = inlined_call_operand.vmem [shape: bf16[256,64], index: 12, kind: input, shape index: {}]
  %s13 = inlined_call_operand.vmem [shape: f32[1,64], index: 13, kind: input, shape index: {}]
  %s14 = inlined_call_operand.vmem [shape: f32[2,16,64], index: 14, kind: output, shape index: {}]
  %s15 = sld [smem:[#allocation0]]
  $region89: #{swin_transformer_forward.11} parent=0
    _
  %s17 = ssub.s32 1, %s15
  %s18 = scalar_select 0, %s17, %s15
  loop: start=0, step=1, limit=4
  $region2: #{swin_transformer_forward.11} parent=0 // loop_pre_header
    _
  $region3: #{swin_transformer_forward.11} parent=0 // loop_header
    %s20 = sphi 0, %s24
    %p21 = scmp.ge.s32.totalorder %s20, 4
    %s30 = sphi 0, %s32
    %s33 = sphi 0, %s30
    %s34 = sphi 0, %s33
    %s50 = sphi 0, %s34
    %s54 = sphi 0, %s54
    %s56 = sphi 0, %s54
    %s57 = sphi 0, %s56
    %s71 = sphi 0, %s57
    %s75 = sphi 0, %s75
    %s77 = sphi 0, %s75
    %s78 = sphi 0, %s77
    %s92 = sphi 0, %s78
    %s96 = sphi 0, %s96
    %s98 = sphi 0, %s96
    %s99 = sphi 0, %s98
    %s113 = sphi 0, %s99
    %s117 = sphi 0, %s117
    %s119 = sphi 0, %s117
    %s120 = sphi 0, %s119
    %s134 = sphi 0, %s120
    %s138 = sphi 0, %s138
    %s140 = sphi 0, %s138
    %s141 = sphi 0, %s140
    %s155 = sphi 0, %s141
    %s159 = sphi 0, %s159
    %s161 = sphi 0, %s159
    %s162 = sphi 0, %s161
    %s176 = sphi 0, %s162
    %s180 = sphi 0, %s180
    %s182 = sphi 0, %s180
    %s183 = sphi 0, %s182
    %s197 = sphi 0, %s183
    %s201 = sphi 0, %s201
    %s203 = sphi 0, %s201
    %s204 = sphi 0, %s203
    %s218 = sphi 0, %s204
    %s222 = sphi 0, %s222
    %s224 = sphi 0, %s222
    %s225 = sphi 0, %s224
    %s239 = sphi 0, %s225
    %s243 = sphi 0, %s243
    %s245 = sphi 0, %s243
    %s246 = sphi 0, %s245
    %s260 = sphi 0, %s246
    %s264 = sphi 0, %s264
    %s266 = sphi 0, %s264
    %s267 = sphi 0, %s266
    %s281 = sphi 0, %s267
    %s285 = sphi 0, %s285
    %s287 = sphi 0, %s285
    %s288 = sphi 0, %s287
    %s302 = sphi 0, %s288
    %s306 = sphi 0, %s306
    %s308 = sphi 0, %s306
    %s309 = sphi 0, %s308
    %s323 = sphi 0, %s309
    %s329 = sphi 0, %s331
    %s332 = sphi 0, %s329
    %s333 = sphi 0, %s332
    %s349 = sphi 0, %s333
  $region4: #{swin_transformer_forward.11} parent=0 // loop_header_branch
    %23 = sbr.rel (%p21) target = $region8
  $region5: #{swin_transformer_forward.11} parent=0 // loop_body
    %s25 = ssub.s32 %s20, 1
    %s26 = ssub.s32 %s20, 2
    %s27 = sadd.s32 %s20, 1
    %s28 = ssub.s32 %s20, %s27
    %p29 = scmp.eq.s32.totalorder %s28, 0
    %s31 = sadd.s32 %s30, 1
    %s32 = scalar_select %p29, %s30, %s31
    %p35 = pneg %p29
    %p36 = scmp.eq.s32.totalorder %s20, 1
    %p37 = por %p35, %p36
    %p38 = scmp.ne.s32.totalorder %s30, %s33
    %p39 = scmp.eq.s32.totalorder %s20, 0
    %p40 = por %p38, %p39
    %p41 = scmp.ne.s32.totalorder %s30, %s33
    %p42 = scmp.eq.s32.totalorder %s25, 1
    %p43 = por %p41, %p42
    %p44 = scmp.ne.s32.totalorder %s33, %s34
    %p45 = scmp.eq.s32.totalorder %s25, 0
    %p46 = por %p44, %p45
    %p47 = scmp.ne.s32.totalorder %s33, %s34
    %p48 = scmp.eq.s32.totalorder %s26, 1
    %p49 = por %p47, %p48
    %p51 = scmp.ne.s32.totalorder %s34, %s50
    %p52 = scmp.eq.s32.totalorder %s26, 0
    %p53 = por %p51, %p52
    %s55 = sadd.s32 %s54, 1
    %p58 = scmp.eq.s32.totalorder %s20, 1
    %p59 = scmp.ne.s32.totalorder %s54, %s56
    %p60 = scmp.eq.s32.totalorder %s20, 0
    %p61 = por %p59, %p60
    %p62 = scmp.ne.s32.totalorder %s54, %s56
    %p63 = scmp.eq.s32.totalorder %s25, 1
    %p64 = por %p62, %p63
    %p65 = scmp.ne.s32.totalorder %s56, %s57
    %p66 = scmp.eq.s32.totalorder %s25, 0
    %p67 = por %p65, %p66
    %p68 = scmp.ne.s32.totalorder %s56, %s57
    %p69 = scmp.eq.s32.totalorder %s26, 1
    %p70 = por %p68, %p69
    %p72 = scmp.ne.s32.totalorder %s57, %s71
    %p73 = scmp.eq.s32.totalorder %s26, 0
    %p74 = por %p72, %p73
    %s76 = sadd.s32 %s75, 1
    %p79 = scmp.eq.s32.totalorder %s20, 1
    %p80 = scmp.ne.s32.totalorder %s75, %s77
    %p81 = scmp.eq.s32.totalorder %s20, 0
    %p82 = por %p80, %p81
    %p83 = scmp.ne.s32.totalorder %s75, %s77
    %p84 = scmp.eq.s32.totalorder %s25, 1
    %p85 = por %p83, %p84
    %p86 = scmp.ne.s32.totalorder %s77, %s78
    %p87 = scmp.eq.s32.totalorder %s25, 0
    %p88 = por %p86, %p87
    %p89 = scmp.ne.s32.totalorder %s77, %s78
    %p90 = scmp.eq.s32.totalorder %s26, 1
    %p91 = por %p89, %p90
    %p93 = scmp.ne.s32.totalorder %s78, %s92
    %p94 = scmp.eq.s32.totalorder %s26, 0
    %p95 = por %p93, %p94
    %s97 = sadd.s32 %s96, 1
    %p100 = scmp.eq.s32.totalorder %s20, 1
    %p101 = scmp.ne.s32.totalorder %s96, %s98
    %p102 = scmp.eq.s32.totalorder %s20, 0
    %p103 = por %p101, %p102
    %p104 = scmp.ne.s32.totalorder %s96, %s98
    %p105 = scmp.eq.s32.totalorder %s25, 1
    %p106 = por %p104, %p105
    %p107 = scmp.ne.s32.totalorder %s98, %s99
    %p108 = scmp.eq.s32.totalorder %s25, 0
    %p109 = por %p107, %p108
    %p110 = scmp.ne.s32.totalorder %s98, %s99
    %p111 = scmp.eq.s32.totalorder %s26, 1
    %p112 = por %p110, %p111
    %p114 = scmp.ne.s32.totalorder %s99, %s113
    %p115 = scmp.eq.s32.totalorder %s26, 0
    %p116 = por %p114, %p115
    %s118 = sadd.s32 %s117, 1
    %p121 = scmp.eq.s32.totalorder %s20, 1
    %p122 = scmp.ne.s32.totalorder %s117, %s119
    %p123 = scmp.eq.s32.totalorder %s20, 0
    %p124 = por %p122, %p123
    %p125 = scmp.ne.s32.totalorder %s117, %s119
    %p126 = scmp.eq.s32.totalorder %s25, 1
    %p127 = por %p125, %p126
    %p128 = scmp.ne.s32.totalorder %s119, %s120
    %p129 = scmp.eq.s32.totalorder %s25, 0
    %p130 = por %p128, %p129
    %p131 = scmp.ne.s32.totalorder %s119, %s120
    %p132 = scmp.eq.s32.totalorder %s26, 1
    %p133 = por %p131, %p132
    %p135 = scmp.ne.s32.totalorder %s120, %s134
    %p136 = scmp.eq.s32.totalorder %s26, 0
    %p137 = por %p135, %p136
    %s139 = sadd.s32 %s138, 1
    %p142 = scmp.eq.s32.totalorder %s20, 1
    %p143 = scmp.ne.s32.totalorder %s138, %s140
    %p144 = scmp.eq.s32.totalorder %s20, 0
    %p145 = por %p143, %p144
    %p146 = scmp.ne.s32.totalorder %s138, %s140
    %p147 = scmp.eq.s32.totalorder %s25, 1
    %p148 = por %p146, %p147
    %p149 = scmp.ne.s32.totalorder %s140, %s141
    %p150 = scmp.eq.s32.totalorder %s25, 0
    %p151 = por %p149, %p150
    %p152 = scmp.ne.s32.totalorder %s140, %s141
    %p153 = scmp.eq.s32.totalorder %s26, 1
    %p154 = por %p152, %p153
    %p156 = scmp.ne.s32.totalorder %s141, %s155
    %p157 = scmp.eq.s32.totalorder %s26, 0
    %p158 = por %p156, %p157
    %s160 = sadd.s32 %s159, 1
    %p163 = scmp.eq.s32.totalorder %s20, 1
    %p164 = scmp.ne.s32.totalorder %s159, %s161
    %p165 = scmp.eq.s32.totalorder %s20, 0
    %p166 = por %p164, %p165
    %p167 = scmp.ne.s32.totalorder %s159, %s161
    %p168 = scmp.eq.s32.totalorder %s25, 1
    %p169 = por %p167, %p168
    %p170 = scmp.ne.s32.totalorder %s161, %s162
    %p171 = scmp.eq.s32.totalorder %s25, 0
    %p172 = por %p170, %p171
    %p173 = scmp.ne.s32.totalorder %s161, %s162
    %p174 = scmp.eq.s32.totalorder %s26, 1
    %p175 = por %p173, %p174
    %p177 = scmp.ne.s32.totalorder %s162, %s176
    %p178 = scmp.eq.s32.totalorder %s26, 0
    %p179 = por %p177, %p178
    %s181 = sadd.s32 %s180, 1
    %p184 = scmp.eq.s32.totalorder %s20, 1
    %p185 = scmp.ne.s32.totalorder %s180, %s182
    %p186 = scmp.eq.s32.totalorder %s20, 0
    %p187 = por %p185, %p186
    %p188 = scmp.ne.s32.totalorder %s180, %s182
    %p189 = scmp.eq.s32.totalorder %s25, 1
    %p190 = por %p188, %p189
    %p191 = scmp.ne.s32.totalorder %s182, %s183
    %p192 = scmp.eq.s32.totalorder %s25, 0
    %p193 = por %p191, %p192
    %p194 = scmp.ne.s32.totalorder %s182, %s183
    %p195 = scmp.eq.s32.totalorder %s26, 1
    %p196 = por %p194, %p195
    %p198 = scmp.ne.s32.totalorder %s183, %s197
    %p199 = scmp.eq.s32.totalorder %s26, 0
    %p200 = por %p198, %p199
    %s202 = sadd.s32 %s201, 1
    %p205 = scmp.eq.s32.totalorder %s20, 1
    %p206 = scmp.ne.s32.totalorder %s201, %s203
    %p207 = scmp.eq.s32.totalorder %s20, 0
    %p208 = por %p206, %p207
    %p209 = scmp.ne.s32.totalorder %s201, %s203
    %p210 = scmp.eq.s32.totalorder %s25, 1
    %p211 = por %p209, %p210
    %p212 = scmp.ne.s32.totalorder %s203, %s204
    %p213 = scmp.eq.s32.totalorder %s25, 0
    %p214 = por %p212, %p213
    %p215 = scmp.ne.s32.totalorder %s203, %s204
    %p216 = scmp.eq.s32.totalorder %s26, 1
    %p217 = por %p215, %p216
    %p219 = scmp.ne.s32.totalorder %s204, %s218
    %p220 = scmp.eq.s32.totalorder %s26, 0
    %p221 = por %p219, %p220
    %s223 = sadd.s32 %s222, 1
    %p226 = scmp.eq.s32.totalorder %s20, 1
    %p227 = scmp.ne.s32.totalorder %s222, %s224
    %p228 = scmp.eq.s32.totalorder %s20, 0
    %p229 = por %p227, %p228
    %p230 = scmp.ne.s32.totalorder %s222, %s224
    %p231 = scmp.eq.s32.totalorder %s25, 1
    %p232 = por %p230, %p231
    %p233 = scmp.ne.s32.totalorder %s224, %s225
    %p234 = scmp.eq.s32.totalorder %s25, 0
    %p235 = por %p233, %p234
    %p236 = scmp.ne.s32.totalorder %s224, %s225
    %p237 = scmp.eq.s32.totalorder %s26, 1
    %p238 = por %p236, %p237
    %p240 = scmp.ne.s32.totalorder %s225, %s239
    %p241 = scmp.eq.s32.totalorder %s26, 0
    %p242 = por %p240, %p241
    %s244 = sadd.s32 %s243, 1
    %p247 = scmp.eq.s32.totalorder %s20, 1
    %p248 = scmp.ne.s32.totalorder %s243, %s245
    %p249 = scmp.eq.s32.totalorder %s20, 0
    %p250 = por %p248, %p249
    %p251 = scmp.ne.s32.totalorder %s243, %s245
    %p252 = scmp.eq.s32.totalorder %s25, 1
    %p253 = por %p251, %p252
    %p254 = scmp.ne.s32.totalorder %s245, %s246
    %p255 = scmp.eq.s32.totalorder %s25, 0
    %p256 = por %p254, %p255
    %p257 = scmp.ne.s32.totalorder %s245, %s246
    %p258 = scmp.eq.s32.totalorder %s26, 1
    %p259 = por %p257, %p258
    %p261 = scmp.ne.s32.totalorder %s246, %s260
    %p262 = scmp.eq.s32.totalorder %s26, 0
    %p263 = por %p261, %p262
    %s265 = sadd.s32 %s264, 1
    %p268 = scmp.eq.s32.totalorder %s20, 1
    %p269 = scmp.ne.s32.totalorder %s264, %s266
    %p270 = scmp.eq.s32.totalorder %s20, 0
    %p271 = por %p269, %p270
    %p272 = scmp.ne.s32.totalorder %s264, %s266
    %p273 = scmp.eq.s32.totalorder %s25, 1
    %p274 = por %p272, %p273
    %p275 = scmp.ne.s32.totalorder %s266, %s267
    %p276 = scmp.eq.s32.totalorder %s25, 0
    %p277 = por %p275, %p276
    %p278 = scmp.ne.s32.totalorder %s266, %s267
    %p279 = scmp.eq.s32.totalorder %s26, 1
    %p280 = por %p278, %p279
    %p282 = scmp.ne.s32.totalorder %s267, %s281
    %p283 = scmp.eq.s32.totalorder %s26, 0
    %p284 = por %p282, %p283
    %s286 = sadd.s32 %s285, 1
    %p289 = scmp.eq.s32.totalorder %s20, 1
    %p290 = scmp.ne.s32.totalorder %s285, %s287
    %p291 = scmp.eq.s32.totalorder %s20, 0
    %p292 = por %p290, %p291
    %p293 = scmp.ne.s32.totalorder %s285, %s287
    %p294 = scmp.eq.s32.totalorder %s25, 1
    %p295 = por %p293, %p294
    %p296 = scmp.ne.s32.totalorder %s287, %s288
    %p297 = scmp.eq.s32.totalorder %s25, 0
    %p298 = por %p296, %p297
    %p299 = scmp.ne.s32.totalorder %s287, %s288
    %p300 = scmp.eq.s32.totalorder %s26, 1
    %p301 = por %p299, %p300
    %p303 = scmp.ne.s32.totalorder %s288, %s302
    %p304 = scmp.eq.s32.totalorder %s26, 0
    %p305 = por %p303, %p304
    %s307 = sadd.s32 %s306, 1
    %p310 = scmp.eq.s32.totalorder %s20, 1
    %p311 = scmp.ne.s32.totalorder %s306, %s308
    %p312 = scmp.eq.s32.totalorder %s20, 0
    %p313 = por %p311, %p312
    %p314 = scmp.ne.s32.totalorder %s306, %s308
    %p315 = scmp.eq.s32.totalorder %s25, 1
    %p316 = por %p314, %p315
    %p317 = scmp.ne.s32.totalorder %s308, %s309
    %p318 = scmp.eq.s32.totalorder %s25, 0
    %p319 = por %p317, %p318
    %p320 = scmp.ne.s32.totalorder %s308, %s309
    %p321 = scmp.eq.s32.totalorder %s26, 1
    %p322 = por %p320, %p321
    %p324 = scmp.ne.s32.totalorder %s309, %s323
    %p325 = scmp.eq.s32.totalorder %s26, 0
    %p326 = por %p324, %p325
    %s327 = ssub.s32 %s20, %s27
    %p328 = scmp.eq.s32.totalorder %s327, 0
    %s330 = sadd.s32 %s329, 1
    %s331 = scalar_select %p328, %s329, %s330
    %p334 = pneg %p328
    %p335 = scmp.eq.s32.totalorder %s20, 1
    %p336 = por %p334, %p335
    %p337 = scmp.ne.s32.totalorder %s329, %s332
    %p338 = scmp.eq.s32.totalorder %s20, 0
    %p339 = por %p337, %p338
    %p340 = scmp.ne.s32.totalorder %s329, %s332
    %p341 = scmp.eq.s32.totalorder %s25, 1
    %p342 = por %p340, %p341
    %p343 = scmp.ne.s32.totalorder %s332, %s333
    %p344 = scmp.eq.s32.totalorder %s25, 0
    %p345 = por %p343, %p344
    %p346 = scmp.ne.s32.totalorder %s332, %s333
    %p347 = scmp.eq.s32.totalorder %s26, 1
    %p348 = por %p346, %p347
    %p350 = scmp.ne.s32.totalorder %s333, %s349
    %p351 = scmp.eq.s32.totalorder %s26, 0
    %p352 = por %p350, %p351
    %p353 = scmp.le.s32.totalorder 1, %s20
    %p354 = scmp.lt.s32.totalorder %s20, 3
    %p355 = pnand %p353, %p354
    %p356 = pneg %p355
    // Predicated region
    $region9: #{swin_transformer_forward.11} parent=5 // pred_check
      _
    $region10: #{swin_transformer_forward.11} parent=5 // pred_check_branch
      %358 = sbr.rel (%p355) target = $region12
    $region11: #{swin_transformer_forward.11} parent=5 // pred_region
      %s359 = ssub.s32 %s20, 1
      // Predicated region
      $region13: #{swin_transformer_forward.11} parent=11 // pred_check
        %p360 = pneg %p67
      $region14: #{swin_transformer_forward.11} parent=11 // pred_check_branch
        %362 = sbr.rel (%p360) target = $region16
      $region15: #{swin_transformer_forward.11} parent=11 // pred_region
        _
      $region16: #{swin_transformer_forward.11} parent=11 // pred_fallthru
        _
      // Predicated region
      $region17: #{swin_transformer_forward.11} parent=11 // pred_check
        %p363 = pneg %p88
      $region18: #{swin_transformer_forward.11} parent=11 // pred_check_branch
        %365 = sbr.rel (%p363) target = $region20
      $region19: #{swin_transformer_forward.11} parent=11 // pred_region
        _
      $region20: #{swin_transformer_forward.11} parent=11 // pred_fallthru
        _
      // Predicated region
      $region21: #{swin_transformer_forward.11} parent=11 // pred_check
        %p366 = pneg %p109
      $region22: #{swin_transformer_forward.11} parent=11 // pred_check_branch
        %368 = sbr.rel (%p366) target = $region24
      $region23: #{swin_transformer_forward.11} parent=11 // pred_region
        _
      $region24: #{swin_transformer_forward.11} parent=11 // pred_fallthru
        _
      // Predicated region
      $region25: #{swin_transformer_forward.11} parent=11 // pred_check
        %p369 = pneg %p130
      $region26: #{swin_transformer_forward.11} parent=11 // pred_check_branch
        %371 = sbr.rel (%p369) target = $region28
      $region27: #{swin_transformer_forward.11} parent=11 // pred_region
        _
      $region28: #{swin_transformer_forward.11} parent=11 // pred_fallthru
        _
      // Predicated region
      $region29: #{swin_transformer_forward.11} parent=11 // pred_check
        %p372 = pneg %p151
      $region30: #{swin_transformer_forward.11} parent=11 // pred_check_branch
        %374 = sbr.rel (%p372) target = $region32
      $region31: #{swin_transformer_forward.11} parent=11 // pred_region
        _
      $region32: #{swin_transformer_forward.11} parent=11 // pred_fallthru
        _
      // Predicated region
      $region33: #{swin_transformer_forward.11} parent=11 // pred_check
        %p375 = pneg %p172
      $region34: #{swin_transformer_forward.11} parent=11 // pred_check_branch
        %377 = sbr.rel (%p375) target = $region36
      $region35: #{swin_transformer_forward.11} parent=11 // pred_region
        _
      $region36: #{swin_transformer_forward.11} parent=11 // pred_fallthru
        _
      // Predicated region
      $region37: #{swin_transformer_forward.11} parent=11 // pred_check
        %p378 = pneg %p193
      $region38: #{swin_transformer_forward.11} parent=11 // pred_check_branch
        %380 = sbr.rel (%p378) target = $region40
      $region39: #{swin_transformer_forward.11} parent=11 // pred_region
        _
      $region40: #{swin_transformer_forward.11} parent=11 // pred_fallthru
        _
      // Predicated region
      $region41: #{swin_transformer_forward.11} parent=11 // pred_check
        %p381 = pneg %p214
      $region42: #{swin_transformer_forward.11} parent=11 // pred_check_branch
        %383 = sbr.rel (%p381) target = $region44
      $region43: #{swin_transformer_forward.11} parent=11 // pred_region
        _
      $region44: #{swin_transformer_forward.11} parent=11 // pred_fallthru
        _
      // Predicated region
      $region45: #{swin_transformer_forward.11} parent=11 // pred_check
        %p384 = pneg %p235
      $region46: #{swin_transformer_forward.11} parent=11 // pred_check_branch
        %386 = sbr.rel (%p384) target = $region48
      $region47: #{swin_transformer_forward.11} parent=11 // pred_region
        _
      $region48: #{swin_transformer_forward.11} parent=11 // pred_fallthru
        _
      // Predicated region
      $region49: #{swin_transformer_forward.11} parent=11 // pred_check
        %p387 = pneg %p256
      $region50: #{swin_transformer_forward.11} parent=11 // pred_check_branch
        %389 = sbr.rel (%p387) target = $region52
      $region51: #{swin_transformer_forward.11} parent=11 // pred_region
        _
      $region52: #{swin_transformer_forward.11} parent=11 // pred_fallthru
        _
      // Predicated region
      $region53: #{swin_transformer_forward.11} parent=11 // pred_check
        %p390 = pneg %p277
      $region54: #{swin_transformer_forward.11} parent=11 // pred_check_branch
        %392 = sbr.rel (%p390) target = $region56
      $region55: #{swin_transformer_forward.11} parent=11 // pred_region
        _
      $region56: #{swin_transformer_forward.11} parent=11 // pred_fallthru
        _
      // Predicated region
      $region57: #{swin_transformer_forward.11} parent=11 // pred_check
        %p393 = pneg %p298
      $region58: #{swin_transformer_forward.11} parent=11 // pred_check_branch
        %395 = sbr.rel (%p393) target = $region60
      $region59: #{swin_transformer_forward.11} parent=11 // pred_region
        _
      $region60: #{swin_transformer_forward.11} parent=11 // pred_fallthru
        _
      // Predicated region
      $region61: #{swin_transformer_forward.11} parent=11 // pred_check
        %p396 = pneg %p319
      $region62: #{swin_transformer_forward.11} parent=11 // pred_check_branch
        %398 = sbr.rel (%p396) target = $region64
      $region63: #{swin_transformer_forward.11} parent=11 // pred_region
        _
      $region64: #{swin_transformer_forward.11} parent=11 // pred_fallthru
        _
    $region12: #{swin_transformer_forward.11} parent=5 // pred_fallthru
      _
    %p399 = scmp.lt.s32.totalorder %s20, 2
    // Predicated region
    $region65: #{swin_transformer_forward.11} parent=5 // pred_check
      %p400 = pneg %p399
    $region66: #{swin_transformer_forward.11} parent=5 // pred_check_branch
      %402 = sbr.rel (%p400) target = $region68
    $region67: #{swin_transformer_forward.11} parent=5 // pred_region
      // Predicated region
      $region69: #{swin_transformer_forward.11} parent=67 // pred_check
        %p403 = pneg %p40
      $region70: #{swin_transformer_forward.11} parent=67 // pred_check_branch
        %405 = sbr.rel (%p403) target = $region72
      $region71: #{swin_transformer_forward.11} parent=67 // pred_region
        %p406 = scmp.lt.s32.totalorder %s20, 1
        %s407 = scalar_select %p406, %s20, 1
        %s408 = smul.addr %s407, 2
        %s409 = smul.addr %s408, 8
        %s410 = scalar_lea.vmem %s0, %s409
      $region72: #{swin_transformer_forward.11} parent=67 // pred_fallthru
        _
    $region68: #{swin_transformer_forward.11} parent=5 // pred_fallthru
      _
    %p411 = scmp.le.s32.totalorder 1, %s20
    %p412 = scmp.lt.s32.totalorder %s20, 3
    %p413 = pnand %p411, %p412
    %p414 = pneg %p413
    // Predicated region
    $region73: #{swin_transformer_forward.11} parent=5 // pred_check
      _
    $region74: #{swin_transformer_forward.11} parent=5 // pred_check_branch
      %416 = sbr.rel (%p413) target = $region76
    $region75: #{swin_transformer_forward.11} parent=5 // pred_region
      %s417 = ssub.s32 %s20, 1
      %p418 = scmp.lt.s32.totalorder %s25, 1
      %s419 = scalar_select %p418, %s25, 1
      %s420 = smul.addr %s419, 2
      %s421 = smul.addr %s420, 8
      %s422 = scalar_lea.vmem %s0, %s421
      %p423 = pneg %p46
      %p424 = pneg %p43
      %p425 = pneg %p67
      %p426 = pneg %p64
      %p427 = pneg %p88
      %p428 = pneg %p85
      %p429 = pneg %p109
      %p430 = pneg %p106
      %p431 = pneg %p130
      %p432 = pneg %p127
      %p433 = pneg %p151
      %p434 = pneg %p148
      %p435 = pneg %p172
      %p436 = pneg %p169
      %p437 = pneg %p193
      %p438 = pneg %p190
      %p439 = pneg %p214
      %p440 = pneg %p211
      %p441 = pneg %p235
      %p442 = pneg %p232
      %p443 = pneg %p256
      %p444 = pneg %p253
      %p445 = pneg %p277
      %p446 = pneg %p274
      %p447 = pneg %p298
      %p448 = pneg %p295
      %p449 = pneg %p319
      %p450 = pneg %p316
      %p451 = pneg %p345
      %p452 = pneg %p342
      %p453 = scmp.lt.s32.totalorder %s25, 1
      %s454 = scalar_select %p453, %s25, 1
      %s455 = smul.addr %s454, 2
      %s456 = smul.addr %s455, 8
      %s457 = scalar_lea.vmem %s14, %s456
      %p458 = scmp.lt.s32.totalorder %s25, 1
      %s459 = scalar_select %p458, %s25, 1
      %s460 = smul.addr %s459, 2
      %s461 = smul.addr %s460, 8
      %s462 = scalar_lea.vmem %s0, %s461
      %p463 = scmp.lt.s32.totalorder %s25, 1
      %s464 = scalar_select %p463, %s25, 1
      %s465 = smul.addr %s464, 2
      %s466 = smul.addr %s465, 8
      %s467 = scalar_lea.vmem %s14, %s466
      %v469 = vld [vmem:[%s462] sm:$0xff]
      %v470 = vld [vmem:[%s462 + $0x8] sm:$0xff]
      %v471 = vld [vmem:[%s1] sm:$0x1]
      %v472 = vld [vmem:[%s2] sm:$0x1]
      %vm473 = vcmask 523264
      %v474 = vsel %vm473, %v469, 0.0
      %475 = vadd.xlane.f32.xlu0 %v474
      %v476 = vpop.xlane.xlu0 %475
      %v477 = vsel %vm473, %v470, 0.0
      %478 = vadd.xlane.f32.xlu0 %v477
      %v479 = vpop.xlane.xlu0 %478
      %v480 = vrcp.pop 64.0
      %v481 = vmul.f32 %v476, %v480
      %v482 = vmul.f32 %v479, %v480
      %v483 = vsub.f32 %v469, %v481
      %v484 = vsub.f32 %v470, %v482
      %v485 = vmul.f32 %v483, %v483
      %v486 = vmul.f32 %v484, %v484
      %v487 = vsel %vm473, %v485, 0.0
      %488 = vadd.xlane.f32.xlu0 %v487
      %v489 = vpop.xlane.xlu0 %488
      %v490 = vsel %vm473, %v486, 0.0
      %491 = vadd.xlane.f32.xlu0 %v490
      %v492 = vpop.xlane.xlu0 %491
      %v493 = vmul.f32 %v489, %v480
      %v494 = vmul.f32 %v492, %v480
      %v495 = vadd.f32 %v493, 1e-05
      %v496 = vadd.f32 %v494, 1e-05
      %v497 = vrsqrt.pop %v495
      %v498 = vrsqrt.pop %v496
      %v499 = vmul.f32 %v483, %v497
      %v500 = vmul.f32 %v484, %v498
      %v502 = vlaneseq
      %v503 = vshrl.u32 %v502, 7
      %v504 = vsub.s32 0, %v503
      %v505 = vrot.slane %v471, %v504
      %v507 = vmul.f32 %v499, %v505
      %v508 = vmul.f32 %v500, %v505
      %v510 = vlaneseq
      %v511 = vshrl.u32 %v510, 7
      %v512 = vsub.s32 0, %v511
      %v513 = vrot.slane %v472, %v512
      %v515 = vadd.f32 %v507, %v513
      %v516 = vadd.f32 %v508, %v513
      %v517 = vld [vmem:[%s3] sm:$0xff]
      %v518 = vld [vmem:[%s3 + $0x8] sm:$0xff]
      %v519 = vld [vmem:[%s3 + $0x10] sm:$0xff]
      %v520 = vld [vmem:[%s3 + $0x18] sm:$0xff]
      %v521 = vld [vmem:[%s3 + $0x20] sm:$0xff]
      %v522 = vld [vmem:[%s3 + $0x28] sm:$0xff]
      %v523 = vld [vmem:[%s3 + $0x30] sm:$0xff]
      %v524 = vld [vmem:[%s3 + $0x38] sm:$0xff]
      %v525 = vpack.c.bf16 %v516, %v515
      %v526 = vld [vmem:[%s4] sm:$0x3]
      %v528 = vlaneseq
      %v529 = vshrl.u32 %v528, 7
      %v530 = vsub.s32 0, %v529
      %v531 = vrot.slane %v526, %v530
      %v532 = vlaneseq
      %v533 = vshrl.u32 %v532, 7
      %v534 = vsub.s32 1, %v533
      %v535 = vrot.slane %v526, %v534
      %v546 = vunpack.c.l.b16 %v517
      %v547 = vunpack.c.h.b16 %v517
      %v548 = vunpack.c.l.b16 %v518
      %v549 = vunpack.c.h.b16 %v518
      %v550 = vunpack.c.l.b16 %v519
      %v551 = vunpack.c.h.b16 %v519
      %v552 = vunpack.c.l.b16 %v520
      %v553 = vunpack.c.h.b16 %v520
      %v554 = vunpack.c.l.b16 %v521
      %v555 = vunpack.c.h.b16 %v521
      %v556 = vunpack.c.l.b16 %v522
      %v557 = vunpack.c.h.b16 %v522
      %v558 = vunpack.c.l.b16 %v523
      %v559 = vunpack.c.h.b16 %v523
      %v560 = vunpack.c.l.b16 %v524
      %v561 = vunpack.c.h.b16 %v524
      %v562 = vpack.c.b16 %v548, %v546
      %v563 = vpack.c.b16 %v549, %v547
      %v564 = vpack.c.b16 %v552, %v550
      %v565 = vpack.c.b16 %v553, %v551
      %v566 = vpack.c.b16 %v556, %v554
      %v567 = vpack.c.b16 %v557, %v555
      %v568 = vpack.c.b16 %v560, %v558
      %v569 = vpack.c.b16 %v561, %v559
      %v579 = vsel %vm473, %v525, 0
      %581 = vmatprep.subr.bf16.mxu0 %v563
      %582 = vmatpush1.bf16.msra.mxu0 %v562
      %583 = vmatprep.subr.bf16.mxu0 %v565
      %584 = vmatpush1.bf16.msra.mxu0 %v564
      %585 = vmatprep.subr.bf16.mxu0 %v567
      %586 = vmatpush1.bf16.msra.mxu0 %v566
      %587 = vmatprep.subr.bf16.mxu0 %v569
      %588 = vmatpush1.bf16.msra.mxu0 %v568
      %589 = vmatprep.subr.bf16.mxu0 0
      %590 = vmatpush1.bf16.msra.mxu0 0
      %591 = vmatprep.subr.bf16.mxu0 0
      %592 = vmatpush1.bf16.msra.mxu0 0
      %593 = vmatprep.subr.bf16.mxu0 0
      %594 = vmatpush1.bf16.msra.mxu0 0
      %595 = vmatprep.subr.bf16.mxu0 0
      %596 = vmatpush1.bf16.msra.mxu0 0
      %597 = vmatprep.subr.bf16.mxu0 0
      %598 = vmatpush1.bf16.msra.mxu0 0
      %599 = vmatprep.subr.bf16.mxu0 0
      %600 = vmatpush1.bf16.msra.mxu0 0
      %601 = vmatprep.subr.bf16.mxu0 0
      %602 = vmatpush1.bf16.msra.mxu0 0
      %603 = vmatprep.subr.bf16.mxu0 0
      %604 = vmatpush1.bf16.msra.mxu0 0
      %605 = vmatprep.subr.bf16.mxu0 0
      %606 = vmatpush1.bf16.msra.mxu0 0
      %607 = vmatprep.subr.bf16.mxu0 0
      %608 = vmatpush1.bf16.msra.mxu0 0
      %609 = vmatprep.subr.bf16.mxu0 0
      %610 = vmatpush1.bf16.msra.mxu0 0
      %611 = vmatprep.subr.bf16.mxu0 0
      %612 = vmatpush1.bf16.msra.mxu0 0
      %613 = vmatprep.mubr.bf16.mxu0 0
      %614 = vmatmul.mubr.bf16.gmra.mrb[0].mxu0 %v579
      %v615 = vpop.f32.mrb[0].mxu0
      %v616 = vadd.f32 %v531, %v615
      %v617 = vpop.f32.mrb[0].mxu0
      %v618 = vadd.f32 %v535, %v617
      %v619 = vpop.f32.mrb[0].mxu0
      %v620 = vadd.f32 %v531, %v619
      %v621 = vpop.f32.mrb[0].mxu0
      %v622 = vadd.f32 %v535, %v621
      %623 = vdwg.mxu0
      %v624 = vpack.c.bf16 %v620, %v616
      %v625 = vpack.c.bf16 %v622, %v618
      %627 = vrot.lane.b32.xlu0 %v624, 64
      %v628 = vpop.permute.xlu0 %627
      %vm629 = vcmask 130048
      %v631 = vsel %vm629, %v624, 0
      %v634 = vsel %vm629, %v628, 0
      %636 = vmatprep.subr.bf16.mxu0 0
      %637 = vmatpush1.bf16.xpose.msra.mxu0 %v634
      %638 = vmatprep.subr.bf16.mxu0 0
      %639 = vmatpush1.bf16.xpose.msra.mxu0 0
      %640 = vmatprep.subr.bf16.mxu0 0
      %641 = vmatpush1.bf16.xpose.msra.mxu0 0
      %642 = vmatprep.subr.bf16.mxu0 0
      %643 = vmatpush1.bf16.xpose.msra.mxu0 0
      %644 = vmatprep.subr.bf16.mxu0 0
      %645 = vmatpush1.bf16.xpose.msra.mxu0 0
      %646 = vmatprep.subr.bf16.mxu0 0
      %647 = vmatpush1.bf16.xpose.msra.mxu0 0
      %648 = vmatprep.subr.bf16.mxu0 0
      %649 = vmatpush1.bf16.xpose.msra.mxu0 0
      %650 = vmatprep.subr.bf16.mxu0 0
      %651 = vmatpush1.bf16.xpose.msra.mxu0 0
      %652 = vmatprep.subr.bf16.mxu0 0
      %653 = vmatpush1.bf16.xpose.msra.mxu0 0
      %654 = vmatprep.subr.bf16.mxu0 0
      %655 = vmatpush1.bf16.xpose.msra.mxu0 0
      %656 = vmatprep.subr.bf16.mxu0 0
      %657 = vmatpush1.bf16.xpose.msra.mxu0 0
      %658 = vmatprep.subr.bf16.mxu0 0
      %659 = vmatpush1.bf16.xpose.msra.mxu0 0
      %660 = vmatprep.subr.bf16.mxu0 0
      %661 = vmatpush1.bf16.xpose.msra.mxu0 0
      %662 = vmatprep.subr.bf16.mxu0 0
      %663 = vmatpush1.bf16.xpose.msra.mxu0 0
      %664 = vmatprep.subr.bf16.mxu0 0
      %665 = vmatpush1.bf16.xpose.msra.mxu0 0
      %666 = vmatprep.subr.bf16.mxu0 0
      %667 = vmatpush1.bf16.xpose.msra.mxu0 0
      %668 = vmatprep.mubr.bf16.mxu0 0
      %669 = vmatmul.mubr.bf16.gmra.mrb[0].mxu0 %v631
      %v670 = vpop.f32.mrb[0].mxu0
      %v671 = vadd.f32 0.0, %v670
      %v672 = vpop.f32.mrb[0].mxu0
      %v673 = vpop.f32.mrb[0].mxu0
      %v674 = vadd.f32 0.0, %v673
      %v675 = vpop.f32.mrb[0].mxu0
      %676 = vdwg.mxu0
      %v677 = vmul.f32 %v671, 0.25
      %v678 = vmul.f32 %v674, 0.25
      %v679 = vld [vmem:[%s5] sm:$0xff]
      %v680 = vld [vmem:[%s5 + $0x8] sm:$0xff]
      %v681 = vadd.f32 %v677, %v679
      %v682 = vadd.f32 %v678, %v680
      %v683 = vsel %vm629, %v681, -inf
      %684 = vmax.xlane.f32.xlu0 %v683
      %v685 = vpop.xlane.xlu0 %684
      %v686 = vsel %vm629, %v682, -inf
      %687 = vmax.xlane.f32.xlu0 %v686
      %v688 = vpop.xlane.xlu0 %687
      %v689 = vsub.f32 %v681, %v685
      %v690 = vsub.f32 %v682, %v688
      %v691 = vmul.f32 %v689, 1.442695
      %v692 = vpow.pop %v691
      %v693 = vmul.f32 %v690, 1.442695
      %v694 = vpow.pop %v693
      %v695 = vsel %vm629, %v692, 0.0
      %696 = vadd.xlane.f32.xlu0 %v695
      %v697 = vpop.xlane.xlu0 %696
      %v698 = vsel %vm629, %v694, 0.0
      %699 = vadd.xlane.f32.xlu0 %v698
      %v700 = vpop.xlane.xlu0 %699
      %v701 = vrcp.pop %v697
      %v702 = vrcp.pop %v700
      %v703 = vmul.f32 %v692, %v701
      %v704 = vmul.f32 %v694, %v702
      %v705 = vpack.c.bf16 %v704, %v703
      %v707 = vsel %vm629, %v705, 0
      %709 = vmatprep.subr.bf16.mxu0 0
      %710 = vmatpush1.bf16.msra.mxu0 %v625
      %711 = vmatprep.subr.bf16.mxu0 0
      %712 = vmatpush1.bf16.msra.mxu0 0
      %713 = vmatprep.subr.bf16.mxu0 0
      %714 = vmatpush1.bf16.msra.mxu0 0
      %715 = vmatprep.subr.bf16.mxu0 0
      %716 = vmatpush1.bf16.msra.mxu0 0
      %717 = vmatprep.subr.bf16.mxu0 0
      %718 = vmatpush1.bf16.msra.mxu0 0
      %719 = vmatprep.subr.bf16.mxu0 0
      %720 = vmatpush1.bf16.msra.mxu0 0
      %721 = vmatprep.subr.bf16.mxu0 0
      %722 = vmatpush1.bf16.msra.mxu0 0
      %723 = vmatprep.subr.bf16.mxu0 0
      %724 = vmatpush1.bf16.msra.mxu0 0
      %725 = vmatprep.subr.bf16.mxu0 0
      %726 = vmatpush1.bf16.msra.mxu0 0
      %727 = vmatprep.subr.bf16.mxu0 0
      %728 = vmatpush1.bf16.msra.mxu0 0
      %729 = vmatprep.subr.bf16.mxu0 0
      %730 = vmatpush1.bf16.msra.mxu0 0
      %731 = vmatprep.subr.bf16.mxu0 0
      %732 = vmatpush1.bf16.msra.mxu0 0
      %733 = vmatprep.subr.bf16.mxu0 0
      %734 = vmatpush1.bf16.msra.mxu0 0
      %735 = vmatprep.subr.bf16.mxu0 0
      %736 = vmatpush1.bf16.msra.mxu0 0
      %737 = vmatprep.subr.bf16.mxu0 0
      %738 = vmatpush1.bf16.msra.mxu0 0
      %739 = vmatprep.subr.bf16.mxu0 0
      %740 = vmatpush1.bf16.msra.mxu0 0
      %741 = vmatprep.mubr.bf16.mxu0 0
      %742 = vmatmul.mubr.bf16.gmra.mrb[0].mxu0 %v707
      %v743 = vpop.f32.mrb[0].mxu0
      %v744 = vadd.f32 0.0, %v743
      %v745 = vpop.f32.mrb[0].mxu0
      %v746 = vpop.f32.mrb[0].mxu0
      %v747 = vadd.f32 0.0, %v746
      %v748 = vpop.f32.mrb[0].mxu0
      %749 = vdwg.mxu0
      %750 = vrot.lane.b32.xlu0 %v624, 112
      %v751 = vpop.permute.xlu0 %750
      %752 = vrot.lane.b32.xlu0 %v624, 48
      %v753 = vpop.permute.xlu0 %752
      %v755 = vsel %vm629, %v751, 0
      %v758 = vsel %vm629, %v753, 0
      %760 = vmatprep.subr.bf16.mxu0 0
      %761 = vmatpush1.bf16.xpose.msra.mxu0 %v758
      %762 = vmatprep.subr.bf16.mxu0 0
      %763 = vmatpush1.bf16.xpose.msra.mxu0 0
      %764 = vmatprep.subr.bf16.mxu0 0
      %765 = vmatpush1.bf16.xpose.msra.mxu0 0
      %766 = vmatprep.subr.bf16.mxu0 0
      %767 = vmatpush1.bf16.xpose.msra.mxu0 0
      %768 = vmatprep.subr.bf16.mxu0 0
      %769 = vmatpush1.bf16.xpose.msra.mxu0 0
      %770 = vmatprep.subr.bf16.mxu0 0
      %771 = vmatpush1.bf16.xpose.msra.mxu0 0
      %772 = vmatprep.subr.bf16.mxu0 0
      %773 = vmatpush1.bf16.xpose.msra.mxu0 0
      %774 = vmatprep.subr.bf16.mxu0 0
      %775 = vmatpush1.bf16.xpose.msra.mxu0 0
      %776 = vmatprep.subr.bf16.mxu0 0
      %777 = vmatpush1.bf16.xpose.msra.mxu0 0
      %778 = vmatprep.subr.bf16.mxu0 0
      %779 = vmatpush1.bf16.xpose.msra.mxu0 0
      %780 = vmatprep.subr.bf16.mxu0 0
      %781 = vmatpush1.bf16.xpose.msra.mxu0 0
      %782 = vmatprep.subr.bf16.mxu0 0
      %783 = vmatpush1.bf16.xpose.msra.mxu0 0
      %784 = vmatprep.subr.bf16.mxu0 0
      %785 = vmatpush1.bf16.xpose.msra.mxu0 0
      %786 = vmatprep.subr.bf16.mxu0 0
      %787 = vmatpush1.bf16.xpose.msra.mxu0 0
      %788 = vmatprep.subr.bf16.mxu0 0
      %789 = vmatpush1.bf16.xpose.msra.mxu0 0
      %790 = vmatprep.subr.bf16.mxu0 0
      %791 = vmatpush1.bf16.xpose.msra.mxu0 0
      %792 = vmatprep.mubr.bf16.mxu0 0
      %793 = vmatmul.mubr.bf16.gmra.mrb[0].mxu0 %v755
      %v794 = vpop.f32.mrb[0].mxu0
      %v795 = vadd.f32 0.0, %v794
      %v796 = vpop.f32.mrb[0].mxu0
      %v797 = vpop.f32.mrb[0].mxu0
      %v798 = vadd.f32 0.0, %v797
      %v799 = vpop.f32.mrb[0].mxu0
      %800 = vdwg.mxu0
      %v801 = vmul.f32 %v795, 0.25
      %v802 = vmul.f32 %v798, 0.25
      %s803 = scalar_lea.vmem %s5, 16
      %v804 = vld [vmem:[%s803] sm:$0xff]
      %v805 = vld [vmem:[%s803 + $0x8] sm:$0xff]
      %v806 = vadd.f32 %v801, %v804
      %v807 = vadd.f32 %v802, %v805
      %v808 = vsel %vm629, %v806, -inf
      %809 = vmax.xlane.f32.xlu0 %v808
      %v810 = vpop.xlane.xlu0 %809
      %v811 = vsel %vm629, %v807, -inf
      %812 = vmax.xlane.f32.xlu0 %v811
      %v813 = vpop.xlane.xlu0 %812
      %v814 = vsub.f32 %v806, %v810
      %v815 = vsub.f32 %v807, %v813
      %v816 = vmul.f32 %v814, 1.442695
      %v817 = vpow.pop %v816
      %v818 = vmul.f32 %v815, 1.442695
      %v819 = vpow.pop %v818
      %v820 = vsel %vm629, %v817, 0.0
      %821 = vadd.xlane.f32.xlu0 %v820
      %v822 = vpop.xlane.xlu0 %821
      %v823 = vsel %vm629, %v819, 0.0
      %824 = vadd.xlane.f32.xlu0 %v823
      %v825 = vpop.xlane.xlu0 %824
      %v826 = vrcp.pop %v822
      %v827 = vrcp.pop %v825
      %v828 = vmul.f32 %v817, %v826
      %v829 = vmul.f32 %v819, %v827
      %v830 = vpack.c.bf16 %v829, %v828
      %832 = vrot.lane.b32.xlu0 %v625, 112
      %v833 = vpop.permute.xlu0 %832
      %v836 = vsel %vm629, %v830, 0
      %838 = vmatprep.subr.bf16.mxu0 0
      %839 = vmatpush1.bf16.msra.mxu0 %v833
      %840 = vmatprep.subr.bf16.mxu0 0
      %841 = vmatpush1.bf16.msra.mxu0 0
      %842 = vmatprep.subr.bf16.mxu0 0
      %843 = vmatpush1.bf16.msra.mxu0 0
      %844 = vmatprep.subr.bf16.mxu0 0
      %845 = vmatpush1.bf16.msra.mxu0 0
      %846 = vmatprep.subr.bf16.mxu0 0
      %847 = vmatpush1.bf16.msra.mxu0 0
      %848 = vmatprep.subr.bf16.mxu0 0
      %849 = vmatpush1.bf16.msra.mxu0 0
      %850 = vmatprep.subr.bf16.mxu0 0
      %851 = vmatpush1.bf16.msra.mxu0 0
      %852 = vmatprep.subr.bf16.mxu0 0
      %853 = vmatpush1.bf16.msra.mxu0 0
      %854 = vmatprep.subr.bf16.mxu0 0
      %855 = vmatpush1.bf16.msra.mxu0 0
      %856 = vmatprep.subr.bf16.mxu0 0
      %857 = vmatpush1.bf16.msra.mxu0 0
      %858 = vmatprep.subr.bf16.mxu0 0
      %859 = vmatpush1.bf16.msra.mxu0 0
      %860 = vmatprep.subr.bf16.mxu0 0
      %861 = vmatpush1.bf16.msra.mxu0 0
      %862 = vmatprep.subr.bf16.mxu0 0
      %863 = vmatpush1.bf16.msra.mxu0 0
      %864 = vmatprep.subr.bf16.mxu0 0
      %865 = vmatpush1.bf16.msra.mxu0 0
      %866 = vmatprep.subr.bf16.mxu0 0
      %867 = vmatpush1.bf16.msra.mxu0 0
      %868 = vmatprep.subr.bf16.mxu0 0
      %869 = vmatpush1.bf16.msra.mxu0 0
      %870 = vmatprep.mubr.bf16.mxu0 0
      %871 = vmatmul.mubr.bf16.gmra.mrb[0].mxu0 %v836
      %v872 = vpop.f32.mrb[0].mxu0
      %v873 = vadd.f32 0.0, %v872
      %v874 = vpop.f32.mrb[0].mxu0
      %v875 = vpop.f32.mrb[0].mxu0
      %v876 = vadd.f32 0.0, %v875
      %v877 = vpop.f32.mrb[0].mxu0
      %878 = vdwg.mxu0
      %879 = vrot.lane.b32.xlu0 %v624, 96
      %v880 = vpop.permute.xlu0 %879
      %881 = vrot.lane.b32.xlu0 %v624, 32
      %v882 = vpop.permute.xlu0 %881
      %v884 = vsel %vm629, %v880, 0
      %v887 = vsel %vm629, %v882, 0
      %889 = vmatprep.subr.bf16.mxu0 0
      %890 = vmatpush1.bf16.xpose.msra.mxu0 %v887
      %891 = vmatprep.subr.bf16.mxu0 0
      %892 = vmatpush1.bf16.xpose.msra.mxu0 0
      %893 = vmatprep.subr.bf16.mxu0 0
      %894 = vmatpush1.bf16.xpose.msra.mxu0 0
      %895 = vmatprep.subr.bf16.mxu0 0
      %896 = vmatpush1.bf16.xpose.msra.mxu0 0
      %897 = vmatprep.subr.bf16.mxu0 0
      %898 = vmatpush1.bf16.xpose.msra.mxu0 0
      %899 = vmatprep.subr.bf16.mxu0 0
      %900 = vmatpush1.bf16.xpose.msra.mxu0 0
      %901 = vmatprep.subr.bf16.mxu0 0
      %902 = vmatpush1.bf16.xpose.msra.mxu0 0
      %903 = vmatprep.subr.bf16.mxu0 0
      %904 = vmatpush1.bf16.xpose.msra.mxu0 0
      %905 = vmatprep.subr.bf16.mxu0 0
      %906 = vmatpush1.bf16.xpose.msra.mxu0 0
      %907 = vmatprep.subr.bf16.mxu0 0
      %908 = vmatpush1.bf16.xpose.msra.mxu0 0
      %909 = vmatprep.subr.bf16.mxu0 0
      %910 = vmatpush1.bf16.xpose.msra.mxu0 0
      %911 = vmatprep.subr.bf16.mxu0 0
      %912 = vmatpush1.bf16.xpose.msra.mxu0 0
      %913 = vmatprep.subr.bf16.mxu0 0
      %914 = vmatpush1.bf16.xpose.msra.mxu0 0
      %915 = vmatprep.subr.bf16.mxu0 0
      %916 = vmatpush1.bf16.xpose.msra.mxu0 0
      %917 = vmatprep.subr.bf16.mxu0 0
      %918 = vmatpush1.bf16.xpose.msra.mxu0 0
      %919 = vmatprep.subr.bf16.mxu0 0
      %920 = vmatpush1.bf16.xpose.msra.mxu0 0
      %921 = vmatprep.mubr.bf16.mxu0 0
      %922 = vmatmul.mubr.bf16.gmra.mrb[0].mxu0 %v884
      %v923 = vpop.f32.mrb[0].mxu0
      %v924 = vadd.f32 0.0, %v923
      %v925 = vpop.f32.mrb[0].mxu0
      %v926 = vpop.f32.mrb[0].mxu0
      %v927 = vadd.f32 0.0, %v926
      %v928 = vpop.f32.mrb[0].mxu0
      %929 = vdwg.mxu0
      %v930 = vmul.f32 %v924, 0.25
      %v931 = vmul.f32 %v927, 0.25
      %s932 = scalar_lea.vmem %s5, 32
      %v933 = vld [vmem:[%s932] sm:$0xff]
      %v934 = vld [vmem:[%s932 + $0x8] sm:$0xff]
      %v935 = vadd.f32 %v930, %v933
      %v936 = vadd.f32 %v931, %v934
      %v937 = vsel %vm629, %v935, -inf
      %938 = vmax.xlane.f32.xlu0 %v937
      %v939 = vpop.xlane.xlu0 %938
      %v940 = vsel %vm629, %v936, -inf
      %941 = vmax.xlane.f32.xlu0 %v940
      %v942 = vpop.xlane.xlu0 %941
      %v943 = vsub.f32 %v935, %v939
      %v944 = vsub.f32 %v936, %v942
      %v945 = vmul.f32 %v943, 1.442695
      %v946 = vpow.pop %v945
      %v947 = vmul.f32 %v944, 1.442695
      %v948 = vpow.pop %v947
      %v949 = vsel %vm629, %v946, 0.0
      %950 = vadd.xlane.f32.xlu0 %v949
      %v951 = vpop.xlane.xlu0 %950
      %v952 = vsel %vm629, %v948, 0.0
      %953 = vadd.xlane.f32.xlu0 %v952
      %v954 = vpop.xlane.xlu0 %953
      %v955 = vrcp.pop %v951
      %v956 = vrcp.pop %v954
      %v957 = vmul.f32 %v946, %v955
      %v958 = vmul.f32 %v948, %v956
      %v959 = vpack.c.bf16 %v958, %v957
      %960 = vrot.lane.b32.xlu0 %v625, 96
      %v961 = vpop.permute.xlu0 %960
      %v964 = vsel %vm629, %v959, 0
      %966 = vmatprep.subr.bf16.mxu0 0
      %967 = vmatpush1.bf16.msra.mxu0 %v961
      %968 = vmatprep.subr.bf16.mxu0 0
      %969 = vmatpush1.bf16.msra.mxu0 0
      %970 = vmatprep.subr.bf16.mxu0 0
      %971 = vmatpush1.bf16.msra.mxu0 0
      %972 = vmatprep.subr.bf16.mxu0 0
      %973 = vmatpush1.bf16.msra.mxu0 0
      %974 = vmatprep.subr.bf16.mxu0 0
      %975 = vmatpush1.bf16.msra.mxu0 0
      %976 = vmatprep.subr.bf16.mxu0 0
      %977 = vmatpush1.bf16.msra.mxu0 0
      %978 = vmatprep.subr.bf16.mxu0 0
      %979 = vmatpush1.bf16.msra.mxu0 0
      %980 = vmatprep.subr.bf16.mxu0 0
      %981 = vmatpush1.bf16.msra.mxu0 0
      %982 = vmatprep.subr.bf16.mxu0 0
      %983 = vmatpush1.bf16.msra.mxu0 0
      %984 = vmatprep.subr.bf16.mxu0 0
      %985 = vmatpush1.bf16.msra.mxu0 0
      %986 = vmatprep.subr.bf16.mxu0 0
      %987 = vmatpush1.bf16.msra.mxu0 0
      %988 = vmatprep.subr.bf16.mxu0 0
      %989 = vmatpush1.bf16.msra.mxu0 0
      %990 = vmatprep.subr.bf16.mxu0 0
      %991 = vmatpush1.bf16.msra.mxu0 0
      %992 = vmatprep.subr.bf16.mxu0 0
      %993 = vmatpush1.bf16.msra.mxu0 0
      %994 = vmatprep.subr.bf16.mxu0 0
      %995 = vmatpush1.bf16.msra.mxu0 0
      %996 = vmatprep.subr.bf16.mxu0 0
      %997 = vmatpush1.bf16.msra.mxu0 0
      %998 = vmatprep.mubr.bf16.mxu0 0
      %999 = vmatmul.mubr.bf16.gmra.mrb[0].mxu0 %v964
      %v1000 = vpop.f32.mrb[0].mxu0
      %v1001 = vadd.f32 0.0, %v1000
      %v1002 = vpop.f32.mrb[0].mxu0
      %v1003 = vpop.f32.mrb[0].mxu0
      %v1004 = vadd.f32 0.0, %v1003
      %v1005 = vpop.f32.mrb[0].mxu0
      %1006 = vdwg.mxu0
      %1007 = vrot.lane.b32.xlu0 %v624, 80
      %v1008 = vpop.permute.xlu0 %1007
      %1009 = vrot.lane.b32.xlu0 %v624, 16
      %v1010 = vpop.permute.xlu0 %1009
      %v1012 = vsel %vm629, %v1008, 0
      %v1015 = vsel %vm629, %v1010, 0
      %1017 = vmatprep.subr.bf16.mxu0 0
      %1018 = vmatpush1.bf16.xpose.msra.mxu0 %v1015
      %1019 = vmatprep.subr.bf16.mxu0 0
      %1020 = vmatpush1.bf16.xpose.msra.mxu0 0
      %1021 = vmatprep.subr.bf16.mxu0 0
      %1022 = vmatpush1.bf16.xpose.msra.mxu0 0
      %1023 = vmatprep.subr.bf16.mxu0 0
      %1024 = vmatpush1.bf16.xpose.msra.mxu0 0
      %1025 = vmatprep.subr.bf16.mxu0 0
      %1026 = vmatpush1.bf16.xpose.msra.mxu0 0
      %1027 = vmatprep.subr.bf16.mxu0 0
      %1028 = vmatpush1.bf16.xpose.msra.mxu0 0
      %1029 = vmatprep.subr.bf16.mxu0 0
      %1030 = vmatpush1.bf16.xpose.msra.mxu0 0
      %1031 = vmatprep.subr.bf16.mxu0 0
      %1032 = vmatpush1.bf16.xpose.msra.mxu0 0
      %1033 = vmatprep.subr.bf16.mxu0 0
      %1034 = vmatpush1.bf16.xpose.msra.mxu0 0
      %1035 = vmatprep.subr.bf16.mxu0 0
      %1036 = vmatpush1.bf16.xpose.msra.mxu0 0
      %1037 = vmatprep.subr.bf16.mxu0 0
      %1038 = vmatpush1.bf16.xpose.msra.mxu0 0
      %1039 = vmatprep.subr.bf16.mxu0 0
      %1040 = vmatpush1.bf16.xpose.msra.mxu0 0
      %1041 = vmatprep.subr.bf16.mxu0 0
      %1042 = vmatpush1.bf16.xpose.msra.mxu0 0
      %1043 = vmatprep.subr.bf16.mxu0 0
      %1044 = vmatpush1.bf16.xpose.msra.mxu0 0
      %1045 = vmatprep.subr.bf16.mxu0 0
      %1046 = vmatpush1.bf16.xpose.msra.mxu0 0
      %1047 = vmatprep.subr.bf16.mxu0 0
      %1048 = vmatpush1.bf16.xpose.msra.mxu0 0
      %1049 = vmatprep.mubr.bf16.mxu0 0
      %1050 = vmatmul.mubr.bf16.gmra.mrb[0].mxu0 %v1012
      %v1051 = vpop.f32.mrb[0].mxu0
      %v1052 = vadd.f32 0.0, %v1051
      %v1053 = vpop.f32.mrb[0].mxu0
      %v1054 = vpop.f32.mrb[0].mxu0
      %v1055 = vadd.f32 0.0, %v1054
      %v1056 = vpop.f32.mrb[0].mxu0
      %1057 = vdwg.mxu0
      %v1058 = vmul.f32 %v1052, 0.25
      %v1059 = vmul.f32 %v1055, 0.25
      %s1060 = scalar_lea.vmem %s5, 48
      %v1061 = vld [vmem:[%s1060] sm:$0xff]
      %v1062 = vld [vmem:[%s1060 + $0x8] sm:$0xff]
      %v1063 = vadd.f32 %v1058, %v1061
      %v1064 = vadd.f32 %v1059, %v1062
      %v1065 = vsel %vm629, %v1063, -inf
      %1066 = vmax.xlane.f32.xlu0 %v1065
      %v1067 = vpop.xlane.xlu0 %1066
      %v1068 = vsel %vm629, %v1064, -inf
      %1069 = vmax.xlane.f32.xlu0 %v1068
      %v1070 = vpop.xlane.xlu0 %1069
      %v1071 = vsub.f32 %v1063, %v1067
      %v1072 = vsub.f32 %v1064, %v1070
      %v1073 = vmul.f32 %v1071, 1.442695
      %v1074 = vpow.pop %v1073
      %v1075 = vmul.f32 %v1072, 1.442695
      %v1076 = vpow.pop %v1075
      %v1077 = vsel %vm629, %v1074, 0.0
      %1078 = vadd.xlane.f32.xlu0 %v1077
      %v1079 = vpop.xlane.xlu0 %1078
      %v1080 = vsel %vm629, %v1076, 0.0
      %1081 = vadd.xlane.f32.xlu0 %v1080
      %v1082 = vpop.xlane.xlu0 %1081
      %v1083 = vrcp.pop %v1079
      %v1084 = vrcp.pop %v1082
      %v1085 = vmul.f32 %v1074, %v1083
      %v1086 = vmul.f32 %v1076, %v1084
      %v1087 = vpack.c.bf16 %v1086, %v1085
      %1088 = vrot.lane.b32.xlu0 %v625, 80
      %v1089 = vpop.permute.xlu0 %1088
      %v1092 = vsel %vm629, %v1087, 0
      %1094 = vmatprep.subr.bf16.mxu0 0
      %1095 = vmatpush1.bf16.msra.mxu0 %v1089
      %1096 = vmatprep.subr.bf16.mxu0 0
      %1097 = vmatpush1.bf16.msra.mxu0 0
      %1098 = vmatprep.subr.bf16.mxu0 0
      %1099 = vmatpush1.bf16.msra.mxu0 0
      %1100 = vmatprep.subr.bf16.mxu0 0
      %1101 = vmatpush1.bf16.msra.mxu0 0
      %1102 = vmatprep.subr.bf16.mxu0 0
      %1103 = vmatpush1.bf16.msra.mxu0 0
      %1104 = vmatprep.subr.bf16.mxu0 0
      %1105 = vmatpush1.bf16.msra.mxu0 0
      %1106 = vmatprep.subr.bf16.mxu0 0
      %1107 = vmatpush1.bf16.msra.mxu0 0
      %1108 = vmatprep.subr.bf16.mxu0 0
      %1109 = vmatpush1.bf16.msra.mxu0 0
      %1110 = vmatprep.subr.bf16.mxu0 0
      %1111 = vmatpush1.bf16.msra.mxu0 0
      %1112 = vmatprep.subr.bf16.mxu0 0
      %1113 = vmatpush1.bf16.msra.mxu0 0
      %1114 = vmatprep.subr.bf16.mxu0 0
      %1115 = vmatpush1.bf16.msra.mxu0 0
      %1116 = vmatprep.subr.bf16.mxu0 0
      %1117 = vmatpush1.bf16.msra.mxu0 0
      %1118 = vmatprep.subr.bf16.mxu0 0
      %1119 = vmatpush1.bf16.msra.mxu0 0
      %1120 = vmatprep.subr.bf16.mxu0 0
      %1121 = vmatpush1.bf16.msra.mxu0 0
      %1122 = vmatprep.subr.bf16.mxu0 0
      %1123 = vmatpush1.bf16.msra.mxu0 0
      %1124 = vmatprep.subr.bf16.mxu0 0
      %1125 = vmatpush1.bf16.msra.mxu0 0
      %1126 = vmatprep.mubr.bf16.mxu0 0
      %1127 = vmatmul.mubr.bf16.gmra.mrb[0].mxu0 %v1092
      %v1128 = vpop.f32.mrb[0].mxu0
      %v1129 = vadd.f32 0.0, %v1128
      %v1130 = vpop.f32.mrb[0].mxu0
      %v1131 = vpop.f32.mrb[0].mxu0
      %v1132 = vadd.f32 0.0, %v1131
      %v1133 = vpop.f32.mrb[0].mxu0
      %1134 = vdwg.mxu0
      %1137 = vrot.lane.b32.xlu0 %v873, 16
      %v1138 = vpop.permute.xlu0 %1137
      %1139 = vrot.lane.b32.xlu0 %v876, 16
      %v1140 = vpop.permute.xlu0 %1139
      %1145 = vrot.lane.b32.xlu0 %v1001, 32
      %v1146 = vpop.permute.xlu0 %1145
      %1147 = vrot.lane.b32.xlu0 %v1004, 32
      %v1148 = vpop.permute.xlu0 %1147
      %1153 = vrot.lane.b32.xlu0 %v1129, 48
      %v1154 = vpop.permute.xlu0 %1153
      %1155 = vrot.lane.b32.xlu0 %v1132, 48
      %v1156 = vpop.permute.xlu0 %1155
      %v1159 = vsel %vm629, %v744, %v1138
      %v1160 = vsel %vm629, %v747, %v1140
      %vm1161 = vcmask 261120
      %v1162 = vsel %vm1161, %v1159, %v1146
      %v1163 = vsel %vm1161, %v1160, %v1148
      %vm1164 = vcmask 392192
      %v1165 = vsel %vm1164, %v1162, %v1154
      %v1166 = vsel %vm1164, %v1163, %v1156
      %v1167 = vld [vmem:[%s6] sm:$0xf]
      %v1168 = vld [vmem:[%s6 + $0x4] sm:$0xf]
      %v1169 = vld [vmem:[%s6 + $0x8] sm:$0xf]
      %v1170 = vld [vmem:[%s6 + $0xc] sm:$0xf]
      %v1171 = vld [vmem:[%s6 + $0x10] sm:$0xf]
      %v1172 = vld [vmem:[%s6 + $0x14] sm:$0xf]
      %v1173 = vld [vmem:[%s6 + $0x18] sm:$0xf]
      %v1174 = vld [vmem:[%s6 + $0x1c] sm:$0xf]
      %v1175 = vpack.c.bf16 %v1166, %v1165
      %v1184 = vunpack.c.l.b16 %v1167
      %v1185 = vunpack.c.l.b16 %v1168
      %v1186 = vunpack.c.l.b16 %v1169
      %v1187 = vunpack.c.l.b16 %v1170
      %v1188 = vunpack.c.l.b16 %v1171
      %v1189 = vunpack.c.l.b16 %v1172
      %v1190 = vunpack.c.l.b16 %v1173
      %v1191 = vunpack.c.l.b16 %v1174
      %v1192 = vpack.c.b16 %v1185, %v1184
      %v1193 = vpack.c.b16 %v1187, %v1186
      %v1194 = vpack.c.b16 %v1189, %v1188
      %v1195 = vpack.c.b16 %v1191, %v1190
      %v1201 = vsel %vm473, %v1175, 0
      %1203 = vmatprep.subr.bf16.mxu0 0
      %1204 = vmatpush1.bf16.msra.mxu0 %v1192
      %1205 = vmatprep.subr.bf16.mxu0 0
      %1206 = vmatpush1.bf16.msra.mxu0 %v1193
      %1207 = vmatprep.subr.bf16.mxu0 0
      %1208 = vmatpush1.bf16.msra.mxu0 %v1194
      %1209 = vmatprep.subr.bf16.mxu0 0
      %1210 = vmatpush1.bf16.msra.mxu0 %v1195
      %1211 = vmatprep.subr.bf16.mxu0 0
      %1212 = vmatpush1.bf16.msra.mxu0 0
      %1213 = vmatprep.subr.bf16.mxu0 0
      %1214 = vmatpush1.bf16.msra.mxu0 0
      %1215 = vmatprep.subr.bf16.mxu0 0
      %1216 = vmatpush1.bf16.msra.mxu0 0
      %1217 = vmatprep.subr.bf16.mxu0 0
      %1218 = vmatpush1.bf16.msra.mxu0 0
      %1219 = vmatprep.subr.bf16.mxu0 0
      %1220 = vmatpush1.bf16.msra.mxu0 0
      %1221 = vmatprep.subr.bf16.mxu0 0
      %1222 = vmatpush1.bf16.msra.mxu0 0
      %1223 = vmatprep.subr.bf16.mxu0 0
      %1224 = vmatpush1.bf16.msra.mxu0 0
      %1225 = vmatprep.subr.bf16.mxu0 0
      %1226 = vmatpush1.bf16.msra.mxu0 0
      %1227 = vmatprep.subr.bf16.mxu0 0
      %1228 = vmatpush1.bf16.msra.mxu0 0
      %1229 = vmatprep.subr.bf16.mxu0 0
      %1230 = vmatpush1.bf16.msra.mxu0 0
      %1231 = vmatprep.subr.bf16.mxu0 0
      %1232 = vmatpush1.bf16.msra.mxu0 0
      %1233 = vmatprep.subr.bf16.mxu0 0
      %1234 = vmatpush1.bf16.msra.mxu0 0
      %1235 = vmatprep.mubr.bf16.mxu0 0
      %1236 = vmatmul.mubr.bf16.gmra.mrb[0].mxu0 %v1201
      %v1237 = vpop.f32.mrb[0].mxu0
      %v1238 = vadd.f32 0.0, %v1237
      %v1239 = vpop.f32.mrb[0].mxu0
      %v1240 = vpop.f32.mrb[0].mxu0
      %v1241 = vadd.f32 0.0, %v1240
      %v1242 = vpop.f32.mrb[0].mxu0
      %1243 = vdwg.mxu0
      %v1244 = vadd.f32 %v469, %v1238
      %v1245 = vadd.f32 %v470, %v1241
      %v1246 = vld [vmem:[%s7] sm:$0x1]
      %v1248 = vlaneseq
      %v1249 = vshrl.u32 %v1248, 7
      %v1250 = vsub.s32 0, %v1249
      %v1251 = vrot.slane %v1246, %v1250
      %v1253 = vadd.f32 %v1244, %v1251
      %v1254 = vadd.f32 %v1245, %v1251
      %v1255 = vld [vmem:[%s8] sm:$0x1]
      %v1256 = vld [vmem:[%s9] sm:$0x1]
      %v1257 = vsel %vm473, %v1253, 0.0
      %1258 = vadd.xlane.f32.xlu0 %v1257
      %v1259 = vpop.xlane.xlu0 %1258
      %v1260 = vsel %vm473, %v1254, 0.0
      %1261 = vadd.xlane.f32.xlu0 %v1260
      %v1262 = vpop.xlane.xlu0 %1261
      %v1263 = vmul.f32 %v1259, %v480
      %v1264 = vmul.f32 %v1262, %v480
      %v1265 = vsub.f32 %v1253, %v1263
      %v1266 = vsub.f32 %v1254, %v1264
      %v1267 = vmul.f32 %v1265, %v1265
      %v1268 = vmul.f32 %v1266, %v1266
      %v1269 = vsel %vm473, %v1267, 0.0
      %1270 = vadd.xlane.f32.xlu0 %v1269
      %v1271 = vpop.xlane.xlu0 %1270
      %v1272 = vsel %vm473, %v1268, 0.0
      %1273 = vadd.xlane.f32.xlu0 %v1272
      %v1274 = vpop.xlane.xlu0 %1273
      %v1275 = vmul.f32 %v1271, %v480
      %v1276 = vmul.f32 %v1274, %v480
      %v1277 = vadd.f32 %v1275, 1e-05
      %v1278 = vadd.f32 %v1276, 1e-05
      %v1279 = vrsqrt.pop %v1277
      %v1280 = vrsqrt.pop %v1278
      %v1281 = vmul.f32 %v1265, %v1279
      %v1282 = vmul.f32 %v1266, %v1280
      %v1284 = vlaneseq
      %v1285 = vshrl.u32 %v1284, 7
      %v1286 = vsub.s32 0, %v1285
      %v1287 = vrot.slane %v1255, %v1286
      %v1289 = vmul.f32 %v1281, %v1287
      %v1290 = vmul.f32 %v1282, %v1287
      %v1292 = vlaneseq
      %v1293 = vshrl.u32 %v1292, 7
      %v1294 = vsub.s32 0, %v1293
      %v1295 = vrot.slane %v1256, %v1294
      %v1297 = vadd.f32 %v1289, %v1295
      %v1298 = vadd.f32 %v1290, %v1295
      %v1299 = vld [vmem:[%s10] sm:$0xff]
      %v1300 = vld [vmem:[%s10 + $0x8] sm:$0xff]
      %v1301 = vld [vmem:[%s10 + $0x10] sm:$0xff]
      %v1302 = vld [vmem:[%s10 + $0x18] sm:$0xff]
      %v1303 = vld [vmem:[%s10 + $0x20] sm:$0xff]
      %v1304 = vld [vmem:[%s10 + $0x28] sm:$0xff]
      %v1305 = vld [vmem:[%s10 + $0x30] sm:$0xff]
      %v1306 = vld [vmem:[%s10 + $0x38] sm:$0xff]
      %v1307 = vpack.c.bf16 %v1298, %v1297
      %v1308 = vld [vmem:[%s11] sm:$0x3]
      %v1310 = vlaneseq
      %v1311 = vshrl.u32 %v1310, 7
      %v1312 = vsub.s32 0, %v1311
      %v1313 = vrot.slane %v1308, %v1312
      %v1314 = vlaneseq
      %v1315 = vshrl.u32 %v1314, 7
      %v1316 = vsub.s32 1, %v1315
      %v1317 = vrot.slane %v1308, %v1316
      %v1328 = vunpack.c.l.b16 %v1299
      %v1329 = vunpack.c.h.b16 %v1299
      %v1330 = vunpack.c.l.b16 %v1300
      %v1331 = vunpack.c.h.b16 %v1300
      %v1332 = vunpack.c.l.b16 %v1301
      %v1333 = vunpack.c.h.b16 %v1301
      %v1334 = vunpack.c.l.b16 %v1302
      %v1335 = vunpack.c.h.b16 %v1302
      %v1336 = vunpack.c.l.b16 %v1303
      %v1337 = vunpack.c.h.b16 %v1303
      %v1338 = vunpack.c.l.b16 %v1304
      %v1339 = vunpack.c.h.b16 %v1304
      %v1340 = vunpack.c.l.b16 %v1305
      %v1341 = vunpack.c.h.b16 %v1305
      %v1342 = vunpack.c.l.b16 %v1306
      %v1343 = vunpack.c.h.b16 %v1306
      %v1344 = vpack.c.b16 %v1330, %v1328
      %v1345 = vpack.c.b16 %v1331, %v1329
      %v1346 = vpack.c.b16 %v1334, %v1332
      %v1347 = vpack.c.b16 %v1335, %v1333
      %v1348 = vpack.c.b16 %v1338, %v1336
      %v1349 = vpack.c.b16 %v1339, %v1337
      %v1350 = vpack.c.b16 %v1342, %v1340
      %v1351 = vpack.c.b16 %v1343, %v1341
      %v1361 = vsel %vm473, %v1307, 0
      %1363 = vmatprep.subr.bf16.mxu0 %v1345
      %1364 = vmatpush1.bf16.msra.mxu0 %v1344
      %1365 = vmatprep.subr.bf16.mxu0 %v1347
      %1366 = vmatpush1.bf16.msra.mxu0 %v1346
      %1367 = vmatprep.subr.bf16.mxu0 %v1349
      %1368 = vmatpush1.bf16.msra.mxu0 %v1348
      %1369 = vmatprep.subr.bf16.mxu0 %v1351
      %1370 = vmatpush1.bf16.msra.mxu0 %v1350
      %1371 = vmatprep.subr.bf16.mxu0 0
      %1372 = vmatpush1.bf16.msra.mxu0 0
      %1373 = vmatprep.subr.bf16.mxu0 0
      %1374 = vmatpush1.bf16.msra.mxu0 0
      %1375 = vmatprep.subr.bf16.mxu0 0
      %1376 = vmatpush1.bf16.msra.mxu0 0
      %1377 = vmatprep.subr.bf16.mxu0 0
      %1378 = vmatpush1.bf16.msra.mxu0 0
      %1379 = vmatprep.subr.bf16.mxu0 0
      %1380 = vmatpush1.bf16.msra.mxu0 0
      %1381 = vmatprep.subr.bf16.mxu0 0
      %1382 = vmatpush1.bf16.msra.mxu0 0
      %1383 = vmatprep.subr.bf16.mxu0 0
      %1384 = vmatpush1.bf16.msra.mxu0 0
      %1385 = vmatprep.subr.bf16.mxu0 0
      %1386 = vmatpush1.bf16.msra.mxu0 0
      %1387 = vmatprep.subr.bf16.mxu0 0
      %1388 = vmatpush1.bf16.msra.mxu0 0
      %1389 = vmatprep.subr.bf16.mxu0 0
      %1390 = vmatpush1.bf16.msra.mxu0 0
      %1391 = vmatprep.subr.bf16.mxu0 0
      %1392 = vmatpush1.bf16.msra.mxu0 0
      %1393 = vmatprep.subr.bf16.mxu0 0
      %1394 = vmatpush1.bf16.msra.mxu0 0
      %1395 = vmatprep.mubr.bf16.mxu0 0
      %1396 = vmatmul.mubr.bf16.gmra.mrb[0].mxu0 %v1361
      %v1397 = vpop.f32.mrb[0].mxu0
      %v1398 = vadd.f32 %v1313, %v1397
      %v1399 = vpop.f32.mrb[0].mxu0
      %v1400 = vadd.f32 %v1317, %v1399
      %v1401 = vpop.f32.mrb[0].mxu0
      %v1402 = vadd.f32 %v1313, %v1401
      %v1403 = vpop.f32.mrb[0].mxu0
      %v1404 = vadd.f32 %v1317, %v1403
      %1405 = vdwg.mxu0
      %v1406 = vmul.f32 %v1398, 0.5
      %v1407 = vmul.f32 %v1400, 0.5
      %v1408 = vmul.f32 %v1402, 0.5
      %v1409 = vmul.f32 %v1404, 0.5
      %v1410 = vmul.f32 %v1398, 0.044715
      %v1411 = vmul.f32 %v1400, 0.044715
      %v1412 = vmul.f32 %v1402, 0.044715
      %v1413 = vmul.f32 %v1404, 0.044715
      %v1414 = vmul.f32 %v1410, %v1398
      %v1415 = vmul.f32 %v1411, %v1400
      %v1416 = vmul.f32 %v1412, %v1402
      %v1417 = vmul.f32 %v1413, %v1404
      %v1418 = vmul.f32 %v1414, %v1398
      %v1419 = vmul.f32 %v1415, %v1400
      %v1420 = vmul.f32 %v1416, %v1402
      %v1421 = vmul.f32 %v1417, %v1404
      %v1422 = vadd.f32 %v1398, %v1418
      %v1423 = vadd.f32 %v1400, %v1419
      %v1424 = vadd.f32 %v1402, %v1420
      %v1425 = vadd.f32 %v1404, %v1421
      %v1426 = vmul.f32 %v1422, 0.7978846
      %v1427 = vmul.f32 %v1423, 0.7978846
      %v1428 = vmul.f32 %v1424, 0.7978846
      %v1429 = vmul.f32 %v1425, 0.7978846
      %v1430 = vtanh.pop %v1426
      %v1431 = vtanh.pop %v1427
      %v1432 = vtanh.pop %v1428
      %v1433 = vtanh.pop %v1429
      %v1434 = vadd.f32 %v1430, 1.0
      %v1435 = vadd.f32 %v1431, 1.0
      %v1436 = vadd.f32 %v1432, 1.0
      %v1437 = vadd.f32 %v1433, 1.0
      %v1438 = vmul.f32 %v1406, %v1434
      %v1439 = vmul.f32 %v1407, %v1435
      %v1440 = vmul.f32 %v1408, %v1436
      %v1441 = vmul.f32 %v1409, %v1437
      %v1442 = vld [vmem:[%s12] sm:$0xf]
      %v1443 = vld [vmem:[%s12 + $0x4] sm:$0xf]
      %v1444 = vld [vmem:[%s12 + $0x8] sm:$0xf]
      %v1445 = vld [vmem:[%s12 + $0xc] sm:$0xf]
      %v1446 = vld [vmem:[%s12 + $0x10] sm:$0xf]
      %v1447 = vld [vmem:[%s12 + $0x14] sm:$0xf]
      %v1448 = vld [vmem:[%s12 + $0x18] sm:$0xf]
      %v1449 = vld [vmem:[%s12 + $0x1c] sm:$0xf]
      %v1450 = vld [vmem:[%s12 + $0x20] sm:$0xf]
      %v1451 = vld [vmem:[%s12 + $0x24] sm:$0xf]
      %v1452 = vld [vmem:[%s12 + $0x28] sm:$0xf]
      %v1453 = vld [vmem:[%s12 + $0x2c] sm:$0xf]
      %v1454 = vld [vmem:[%s12 + $0x30] sm:$0xf]
      %v1455 = vld [vmem:[%s12 + $0x34] sm:$0xf]
      %v1456 = vld [vmem:[%s12 + $0x38] sm:$0xf]
      %v1457 = vld [vmem:[%s12 + $0x3c] sm:$0xf]
      %v1458 = vld [vmem:[%s12 + $0x40] sm:$0xf]
      %v1459 = vld [vmem:[%s12 + $0x44] sm:$0xf]
      %v1460 = vld [vmem:[%s12 + $0x48] sm:$0xf]
      %v1461 = vld [vmem:[%s12 + $0x4c] sm:$0xf]
      %v1462 = vld [vmem:[%s12 + $0x50] sm:$0xf]
      %v1463 = vld [vmem:[%s12 + $0x54] sm:$0xf]
      %v1464 = vld [vmem:[%s12 + $0x58] sm:$0xf]
      %v1465 = vld [vmem:[%s12 + $0x5c] sm:$0xf]
      %v1466 = vld [vmem:[%s12 + $0x60] sm:$0xf]
      %v1467 = vld [vmem:[%s12 + $0x64] sm:$0xf]
      %v1468 = vld [vmem:[%s12 + $0x68] sm:$0xf]
      %v1469 = vld [vmem:[%s12 + $0x6c] sm:$0xf]
      %v1470 = vld [vmem:[%s12 + $0x70] sm:$0xf]
      %v1471 = vld [vmem:[%s12 + $0x74] sm:$0xf]
      %v1472 = vld [vmem:[%s12 + $0x78] sm:$0xf]
      %v1473 = vld [vmem:[%s12 + $0x7c] sm:$0xf]
      %v1474 = vpack.c.bf16 %v1440, %v1438
      %v1475 = vpack.c.bf16 %v1441, %v1439
      %v1476 = vld [vmem:[%s13] sm:$0x1]
      %v1478 = vlaneseq
      %v1479 = vshrl.u32 %v1478, 7
      %v1480 = vsub.s32 0, %v1479
      %v1481 = vrot.slane %v1476, %v1480
      %v1515 = vunpack.c.l.b16 %v1442
      %v1516 = vunpack.c.l.b16 %v1443
      %v1517 = vunpack.c.l.b16 %v1444
      %v1518 = vunpack.c.l.b16 %v1445
      %v1519 = vunpack.c.l.b16 %v1446
      %v1520 = vunpack.c.l.b16 %v1447
      %v1521 = vunpack.c.l.b16 %v1448
      %v1522 = vunpack.c.l.b16 %v1449
      %v1523 = vunpack.c.l.b16 %v1450
      %v1524 = vunpack.c.l.b16 %v1451
      %v1525 = vunpack.c.l.b16 %v1452
      %v1526 = vunpack.c.l.b16 %v1453
      %v1527 = vunpack.c.l.b16 %v1454
      %v1528 = vunpack.c.l.b16 %v1455
      %v1529 = vunpack.c.l.b16 %v1456
      %v1530 = vunpack.c.l.b16 %v1457
      %v1531 = vunpack.c.l.b16 %v1458
      %v1532 = vunpack.c.l.b16 %v1459
      %v1533 = vunpack.c.l.b16 %v1460
      %v1534 = vunpack.c.l.b16 %v1461
      %v1535 = vunpack.c.l.b16 %v1462
      %v1536 = vunpack.c.l.b16 %v1463
      %v1537 = vunpack.c.l.b16 %v1464
      %v1538 = vunpack.c.l.b16 %v1465
      %v1539 = vunpack.c.l.b16 %v1466
      %v1540 = vunpack.c.l.b16 %v1467
      %v1541 = vunpack.c.l.b16 %v1468
      %v1542 = vunpack.c.l.b16 %v1469
      %v1543 = vunpack.c.l.b16 %v1470
      %v1544 = vunpack.c.l.b16 %v1471
      %v1545 = vunpack.c.l.b16 %v1472
      %v1546 = vunpack.c.l.b16 %v1473
      %v1547 = vpack.c.b16 %v1516, %v1515
      %v1548 = vpack.c.b16 %v1518, %v1517
      %v1549 = vpack.c.b16 %v1520, %v1519
      %v1550 = vpack.c.b16 %v1522, %v1521
      %v1551 = vpack.c.b16 %v1524, %v1523
      %v1552 = vpack.c.b16 %v1526, %v1525
      %v1553 = vpack.c.b16 %v1528, %v1527
      %v1554 = vpack.c.b16 %v1530, %v1529
      %v1555 = vpack.c.b16 %v1532, %v1531
      %v1556 = vpack.c.b16 %v1534, %v1533
      %v1557 = vpack.c.b16 %v1536, %v1535
      %v1558 = vpack.c.b16 %v1538, %v1537
      %v1559 = vpack.c.b16 %v1540, %v1539
      %v1560 = vpack.c.b16 %v1542, %v1541
      %v1561 = vpack.c.b16 %v1544, %v1543
      %v1562 = vpack.c.b16 %v1546, %v1545
      %1579 = vmatprep.subr.bf16.mxu0 0
      %1580 = vmatpush1.bf16.msra.mxu0 %v1547
      %1581 = vmatprep.subr.bf16.mxu0 0
      %1582 = vmatpush1.bf16.msra.mxu0 %v1548
      %1583 = vmatprep.subr.bf16.mxu0 0
      %1584 = vmatpush1.bf16.msra.mxu0 %v1549
      %1585 = vmatprep.subr.bf16.mxu0 0
      %1586 = vmatpush1.bf16.msra.mxu0 %v1550
      %1587 = vmatprep.subr.bf16.mxu0 0
      %1588 = vmatpush1.bf16.msra.mxu0 %v1551
      %1589 = vmatprep.subr.bf16.mxu0 0
      %1590 = vmatpush1.bf16.msra.mxu0 %v1552
      %1591 = vmatprep.subr.bf16.mxu0 0
      %1592 = vmatpush1.bf16.msra.mxu0 %v1553
      %1593 = vmatprep.subr.bf16.mxu0 0
      %1594 = vmatpush1.bf16.msra.mxu0 %v1554
      %1595 = vmatprep.subr.bf16.mxu0 0
      %1596 = vmatpush1.bf16.msra.mxu0 %v1555
      %1597 = vmatprep.subr.bf16.mxu0 0
      %1598 = vmatpush1.bf16.msra.mxu0 %v1556
      %1599 = vmatprep.subr.bf16.mxu0 0
      %1600 = vmatpush1.bf16.msra.mxu0 %v1557
      %1601 = vmatprep.subr.bf16.mxu0 0
      %1602 = vmatpush1.bf16.msra.mxu0 %v1558
      %1603 = vmatprep.subr.bf16.mxu0 0
      %1604 = vmatpush1.bf16.msra.mxu0 %v1559
      %1605 = vmatprep.subr.bf16.mxu0 0
      %1606 = vmatpush1.bf16.msra.mxu0 %v1560
      %1607 = vmatprep.subr.bf16.mxu0 0
      %1608 = vmatpush1.bf16.msra.mxu0 %v1561
      %1609 = vmatprep.subr.bf16.mxu0 0
      %1610 = vmatpush1.bf16.msra.mxu0 %v1562
      %1611 = vmatprep.mubr.bf16.mxu0 %v1475
      %1612 = vmatmul.mubr.bf16.gmra.mrb[0].mxu0 %v1474
      %v1613 = vpop.f32.mrb[0].mxu0
      %v1614 = vadd.f32 %v1481, %v1613
      %v1615 = vpop.f32.mrb[0].mxu0
      %v1616 = vpop.f32.mrb[0].mxu0
      %v1617 = vadd.f32 %v1481, %v1616
      %v1618 = vpop.f32.mrb[0].mxu0
      %1619 = vdwg.mxu0
      %v1620 = vadd.f32 %v1253, %v1614
      %v1621 = vadd.f32 %v1254, %v1617
      %1622 = vst.msk [vmem:[%s467] sm:$0xff] %vm473, %v1620
      %1623 = vst.msk [vmem:[%s467 + $0x8] sm:$0xff] %vm473, %v1621
      %p1624 = scmp.lt.s32.totalorder %s25, 1
      %s1625 = scalar_select %p1624, %s25, 1
      %s1626 = smul.addr %s1625, 2
      %s1627 = smul.addr %s1626, 8
      %s1628 = scalar_lea.vmem %s14, %s1627
      // Predicated region
      $region77: #{swin_transformer_forward.11} parent=75 // pred_check
        %p1629 = pneg %p342
      $region78: #{swin_transformer_forward.11} parent=75 // pred_check_branch
        %1631 = sbr.rel (%p1629) target = $region80
      $region79: #{swin_transformer_forward.11} parent=75 // pred_region
        _
      $region80: #{swin_transformer_forward.11} parent=75 // pred_fallthru
        _
    $region76: #{swin_transformer_forward.11} parent=5 // pred_fallthru
      _
    %p1632 = scmp.le.s32.totalorder 2, %s20
    // Predicated region
    $region81: #{swin_transformer_forward.11} parent=5 // pred_check
      %p1633 = pneg %p1632
    $region82: #{swin_transformer_forward.11} parent=5 // pred_check_branch
      %1635 = sbr.rel (%p1633) target = $region84
    $region83: #{swin_transformer_forward.11} parent=5 // pred_region
      %s1636 = ssub.s32 %s20, 2
      // Predicated region
      $region85: #{swin_transformer_forward.11} parent=83 // pred_check
        %p1637 = pneg %p348
      $region86: #{swin_transformer_forward.11} parent=83 // pred_check_branch
        %1639 = sbr.rel (%p1637) target = $region88
      $region87: #{swin_transformer_forward.11} parent=83 // pred_region
        %p1640 = scmp.lt.s32.totalorder %s26, 1
        %s1641 = scalar_select %p1640, %s26, 1
        %s1642 = smul.addr %s1641, 2
        %s1643 = smul.addr %s1642, 8
        %s1644 = scalar_lea.vmem %s14, %s1643
      $region88: #{swin_transformer_forward.11} parent=83 // pred_fallthru
        _
    $region84: #{swin_transformer_forward.11} parent=5 // pred_fallthru
      _
  $region6: #{swin_transformer_forward.11} parent=0 // loop_footer
    %s24 = sadd.s32 1, %s20
  $region7: #{swin_transformer_forward.11} parent=0 // loop_footer_branch
    %19 = sbr.rel target = $region3
  $region8: #{swin_transformer_forward.11} parent=0 // loop_exit
    _

</llo_original>
